<compile_context>
chip_gen: v6e
topology: v6e:2x2x1
jax: 0.10.0
libtpu: 0.0.40
codegen_flags: <defaults>
</compile_context>

<pallas_src>
import numpy as np
import jax
import jax.numpy as jnp
from jax.experimental import pallas as pl
from jax.experimental.pallas import tpu as pltpu

# Geometry fixed by the module (fc4 expects 4*4*32*3 inputs => D=3, H=W=28).
KH = KW = 5
C_IN, C1, C2 = 3, 10, 32
D_DEPTH, H_IN, W_IN = 3, 28, 28
HO1, WO1 = H_IN - KH + 1, W_IN - KW + 1          # 24, 24
HP1, WP1 = HO1 // 2, WO1 // 2                    # 12, 12
HO2, WO2 = HP1 - KH + 1, WP1 - KW + 1            # 8, 8
HP2, WP2 = HO2 // 2, WO2 // 2                    # 4, 4

HQ = H_IN // 4                                   # 7  (h//4 values per depth)
QROWS = D_DEPTH * HQ                             # 21 rows per parity slab
QPAD = QROWS + 1                                 # 22 rows per input quarter (+1 guard)
XROWS = 4 * QPAD                                 # 88 input rows per sample
XLANES = W_IN * C_IN                             # 84 input lanes
L1 = 2 * 128                                     # conv1 output lanes (w%2, w//2, c1) padded
K2 = 128                                         # conv2 contraction lanes (wp*10+c1, padded)
L2 = 2 * 128                                     # conv2 output lanes (w%2, wp2, c2)
P1G = 3                                          # pool1 scratch guard rows per parity


def _forward_kernel(x_ref, w1_ref, b1_ref, w2_ref, b2_ref, wpk_ref, sel_ref,
                    bf_ref, o_ref, p1_scr):
    B = x_ref.shape[0]
    A = bf_ref.shape[1]

    # Hoisted loop-invariant reads / broadcasts.
    b1 = jnp.broadcast_to(b1_ref[...], (QROWS, L1))
    b2 = jnp.broadcast_to(b2_ref[...], (QROWS, L2))
    wpk = wpk_ref[...]                            # (21, A*128)
    sel = sel_ref[...]                            # (A*128, A)
    bf = bf_ref[...]                              # (1, A)

    # Guard rows of the pool1 scratch (only ever read by discarded conv2 rows;
    # must be finite so 0-weighted taps stay 0).
    for jp in range(2):
        p1_scr[jp, QROWS:QROWS + P1G, :] = jnp.zeros((P1G, K2), jnp.float32)

    for b in range(B):
        # ---- conv1 (banded matmuls over w) + bias + ReLU + 2x2 max-pool #1 ----
        # Output rows of each quarter are (d, h//4); h = 4*(h//4) + 2*jp + jh.
        for jp in range(2):                       # parity of pooled row hp = h//2
            half = None
            for jh in range(2):                   # parity of conv1 row h
                acc = jnp.zeros((QROWS, L1), jnp.float32)
                for kh in range(KH):
                    t = 2 * jp + jh + kh          # input h offset
                    r0 = (t % 4) * QPAD + t // 4  # contiguous 21-row slice
                    acc = acc + jnp.dot(x_ref[b, r0:r0 + QROWS, :], w1_ref[kh],
                                        preferred_element_type=jnp.float32)
                y = jnp.maximum(acc + b1, 0.0)
                half = y if half is None else jnp.maximum(half, y)   # pool over h
            # pool over w: lanes are (w%2)*128 + (w//2)*10 + c1
            p1_scr[jp, 0:QROWS, :] = jnp.maximum(half[:, 0:128], half[:, 128:256])

        # ---- conv2 (banded matmuls) + bias + ReLU + 2x2 max-pool #2 ----
        pooled2 = None
        for jh2 in range(2):                      # parity of conv2 row ho2
            acc2 = jnp.zeros((QROWS, L2), jnp.float32)
            for kh2 in range(KH):
                t2 = jh2 + kh2
                q2 = t2 // 2
                acc2 = acc2 + jnp.dot(p1_scr[t2 % 2, q2:q2 + QROWS, :], w2_ref[kh2],
                                      preferred_element_type=jnp.float32)
            y2 = jnp.maximum(acc2 + b2, 0.0)
            pooled2 = y2 if pooled2 is None else jnp.maximum(pooled2, y2)  # pool h
        # pool over w: lanes are (wo2%2)*128 + wp2*32 + c2  ->  (21, 128)
        zp = jnp.maximum(pooled2[:, 0:128], pooled2[:, 128:256])

        # ---- fc: lane-replicate across actions, one multiply, row-sum, select ----
        zrep = jnp.concatenate([zp] * A, axis=1)              # (21, A*128)
        colsum = jnp.sum(zrep * wpk, axis=0, keepdims=True)   # (1, A*128)
        o_ref[b] = jnp.dot(colsum, sel,
                           preferred_element_type=jnp.float32) + bf


@jax.jit
def q_pixel_network_forward(kparams, img_stack):
    """img_stack: (N, 3, D, H, W) float32 (PyTorch NCDHW). Returns (N, A)."""
    N, C, D, H, W = img_stack.shape
    assert (C, D, H, W) == (C_IN, D_DEPTH, H_IN, W_IN)
    A = kparams["bf"].shape[1]

    # Light host prep: NCDHW -> rows (h%4, d, h//4) x lanes (w, c), + 1 zero
    # guard row per h%4 quarter.  ~30 KB / sample, no im2col expansion.
    x = jnp.transpose(img_stack.astype(jnp.float32), (0, 2, 3, 4, 1))   # (N,D,H,W,C)
    x = x.reshape(N, D, HQ, 4, XLANES)          # h = 4*h4 + t
    x = jnp.transpose(x, (0, 3, 1, 2, 4))       # (N, 4, D, 7, 84)
    x = x.reshape(N, 4, QROWS, XLANES)
    x = jnp.pad(x, ((0, 0), (0, 0), (0, 1), (0, 0)))
    x = x.reshape(N, XROWS, XLANES)             # (N, 88, 84)

    # Batch-block the grid: >=2 "parallel" steps when possible (v7x has 2 TCs).
    B = 1
    for cand in (8, 4, 2):
        if N % cand == 0 and N // cand >= 2:
            B = cand
            break

    out = pl.pallas_call(
        _forward_kernel,
        out_shape=jax.ShapeDtypeStruct((N, 1, A), jnp.float32),
        grid=(N // B,),
        in_specs=[
            pl.BlockSpec((B, XROWS, XLANES), lambda i: (i, 0, 0)),
            pl.BlockSpec((KH, XLANES, L1), lambda i: (0, 0, 0)),
            pl.BlockSpec((1, L1), lambda i: (0, 0)),
            pl.BlockSpec((KH, K2, L2), lambda i: (0, 0, 0)),
            pl.BlockSpec((1, L2), lambda i: (0, 0)),
            pl.BlockSpec((QROWS, A * 128), lambda i: (0, 0)),
            pl.BlockSpec((A * 128, A), lambda i: (0, 0)),
            pl.BlockSpec((1, A), lambda i: (0, 0)),
        ],
        out_specs=pl.BlockSpec((B, 1, A), lambda i: (i, 0, 0)),
        scratch_shapes=[pltpu.VMEM((2, QROWS + P1G, K2), jnp.float32)],
        compiler_params=pltpu.CompilerParams(
            dimension_semantics=("parallel",)),
    )(x, kparams["w1b"], kparams["b1row"], kparams["w2b"], kparams["b2row"],
      kparams["wpk"], kparams["sel"], kparams["bf"])
    return out.reshape(N, A)


def init_params(key, action_size=4):
    """Synthetic parameters in PyTorch layouts (Conv3d: (Cout,Cin,KD,KH,KW))."""
    ks = jax.random.split(key, 6)

    def u(k, shape, fan_in):
        b = 1.0 / jnp.sqrt(jnp.float32(fan_in))
        return jax.random.uniform(k, shape, jnp.float32, -b, b)

    fc_in = HP2 * WP2 * C2 * D_DEPTH
    return dict(
        c1_w=u(ks[0], (C1, C_IN, 1, KH, KW), C_IN * KH * KW),
        c1_b=u(ks[1], (C1,), C_IN * KH * KW),
        c2_w=u(ks[2], (C2, C1, 1, KH, KW), C1 * KH * KW),
        c2_b=u(ks[3], (C2,), C1 * KH * KW),
        fc_w=u(ks[4], (action_size, fc_in), fc_in),
        fc_b=u(ks[5], (action_size,), fc_in),
    )


def prepare_params(tp):
    """One-time host-side conversion: torch layouts -> banded/packed kernel layouts."""
    A = tp["fc_w"].shape[0]

    # conv1 banded weight: (kh, w_in*3+ci, (w%2)*128 + (w//2)*10 + co)
    w1hwio = np.transpose(np.asarray(tp["c1_w"])[:, :, 0], (2, 3, 1, 0))   # (5,5,3,10)
    w1b = np.zeros((KH, XLANES, L1), np.float32)
    for kh in range(KH):
        for kw in range(KW):
            for jw in range(2):
                for wp in range(WP1):
                    w_in = 2 * wp + jw + kw
                    col = jw * 128 + wp * C1
                    w1b[kh, w_in * C_IN:(w_in + 1) * C_IN, col:col + C1] = w1hwio[kh, kw]

    # conv2 banded weight: (kh, wp_in*10+ci, (wo2%2)*128 + wp2*32 + co)
    w2hwio = np.transpose(np.asarray(tp["c2_w"])[:, :, 0], (2, 3, 1, 0))   # (5,5,10,32)
    w2b = np.zeros((KH, K2, L2), np.float32)
    for kh in range(KH):
        for kw in range(KW):
            for jw in range(2):
                for wp2 in range(WP2):
                    wp_in = 2 * wp2 + jw + kw
                    col = jw * 128 + wp2 * C2
                    w2b[kh, wp_in * C1:(wp_in + 1) * C1, col:col + C2] = w2hwio[kh, kw]

    # Biases tiled to the conv output lane layouts.
    b1 = np.asarray(tp["c1_b"])
    b1row = np.zeros((1, L1), np.float32)
    for jw in range(2):
        for wp in range(WP1):
            b1row[0, jw * 128 + wp * C1: jw * 128 + wp * C1 + C1] = b1
    b2 = np.asarray(tp["c2_b"])
    b2row = np.zeros((1, L2), np.float32)
    for jw in range(2):
        for wp2 in range(WP2):
            b2row[0, jw * 128 + wp2 * C2: jw * 128 + wp2 * C2 + C2] = b2

    # fc weight packed as (rows = d*7 + hp2, lanes = a*128 + wp2*32 + c); rows
    # with hp2 >= 4 are discarded conv2/pool2 positions -> zero weight.
    fcw = np.asarray(tp["fc_w"]).reshape(A, C2, D_DEPTH, HP2, WP2)
    t = np.transpose(fcw, (2, 3, 0, 4, 1))                     # (d, hp2, a, wp2, c)
    t = np.pad(t, ((0, 0), (0, HQ - HP2), (0, 0), (0, 0), (0, 0)))
    wpk = np.ascontiguousarray(t.reshape(QROWS, A * 128)).astype(np.float32)

    # 0/1 segment-select matrix for the final per-action lane reduction.
    sel = np.zeros((A * 128, A), np.float32)
    for a in range(A):
        sel[a * 128:(a + 1) * 128, a] = 1.0

    return dict(
        w1b=jnp.asarray(w1b), b1row=jnp.asarray(b1row),
        w2b=jnp.asarray(w2b), b2row=jnp.asarray(b2row),
        wpk=jnp.asarray(wpk), sel=jnp.asarray(sel),
        bf=jnp.asarray(np.asarray(tp["fc_b"]).reshape(1, A).astype(np.float32)),
    )


def reference_forward(tp, img_stack):
    """Pure-JAX re-implementation of the PyTorch module (correctness check)."""
    N, C, D, H, W = img_stack.shape
    x = jnp.transpose(img_stack, (0, 2, 3, 4, 1)).reshape(N * D, H, W, C)

    def conv(v, w):
        return jax.lax.conv_general_dilated(
            v, w, (1, 1), "VALID",
            dimension_numbers=("NHWC", "HWIO", "NHWC"),
            precision=jax.lax.Precision.HIGHEST)

    def pool(v):
        B, Hh, Ww, Cc = v.shape
        return v.reshape(B, Hh // 2, 2, Ww // 2, 2, Cc).max(axis=(2, 4))

    w1 = jnp.transpose(tp["c1_w"][:, :, 0], (2, 3, 1, 0))
    w2 = jnp.transpose(tp["c2_w"][:, :, 0], (2, 3, 1, 0))
    y = pool(jnp.maximum(conv(x, w1) + tp["c1_b"], 0.0))
    y = pool(jnp.maximum(conv(y, w2) + tp["c2_b"], 0.0))
    y = y.reshape(N, D, HP2, WP2, C2)
    y = jnp.transpose(y, (0, 4, 1, 2, 3)).reshape(N, -1)   # torch flatten order
    return jnp.dot(y, tp["fc_w"].T,
                   precision=jax.lax.Precision.HIGHEST) + tp["fc_b"]


if __name__ == "__main__":
    key = jax.random.PRNGKey(0)
    pkey, xkey = jax.random.split(key)
    action_size = 4

    torch_params = init_params(pkey, action_size=action_size)
    kparams = prepare_params(torch_params)

    # Shapes implied by the module: 3 channels, depth 3, 28x28 spatial
    # (28 -conv5-> 24 -pool-> 12 -conv5-> 8 -pool-> 4; 4*4*32*3 = fc4 input).
    img_stack = jax.random.normal(
        xkey, (2, C_IN, D_DEPTH, H_IN, W_IN), dtype=jnp.float32)

    out = q_pixel_network_forward(kparams, img_stack)
    jax.block_until_ready(out)
    assert out.shape == (2, action_size), out.shape
    assert out.dtype == jnp.float32

    ref = reference_forward(torch_params, img_stack)
    err = float(jnp.max(jnp.abs(out - ref)))
    assert err < 5e-3, f"mismatch vs reference: max abs err = {err}"
    print("KERNEL_OK")
</pallas_src>

<mosaic_0001>
module attributes {stable_mosaic.version = 11 : i64} {
  func.func @_forward_kernel(%arg0: i32, %arg1: memref<1x88x84xf32, #tpu.memory_space<vmem>>, %arg2: memref<5x84x256xf32, #tpu.memory_space<vmem>>, %arg3: memref<1x256xf32, #tpu.memory_space<vmem>>, %arg4: memref<5x128x256xf32, #tpu.memory_space<vmem>>, %arg5: memref<1x256xf32, #tpu.memory_space<vmem>>, %arg6: memref<21x512xf32, #tpu.memory_space<vmem>>, %arg7: memref<512x4xf32, #tpu.memory_space<vmem>>, %arg8: memref<1x4xf32, #tpu.memory_space<vmem>>, %arg9: memref<1x1x4xf32, #tpu.memory_space<vmem>>, %arg10: memref<2x24x128xf32, #tpu.memory_space<vmem>>) attributes {dimension_semantics = [#tpu.dimension_semantics<parallel>], iteration_bounds = array<i64: 2>, scalar_prefetch = 0 : i64, scratch_operands = 1 : i64, tpu.core_type = #tpu.core_type<tc>, window_params = [{transform_indices = @transform_0, window_bounds = array<i64: 1, 88, 84>}, {pipeline_mode = #tpu.pipeline_mode<synchronous>, transform_indices = @transform_1, window_bounds = array<i64: 5, 84, 256>}, {pipeline_mode = #tpu.pipeline_mode<synchronous>, transform_indices = @transform_2, window_bounds = array<i64: 1, 256>}, {pipeline_mode = #tpu.pipeline_mode<synchronous>, transform_indices = @transform_3, window_bounds = array<i64: 5, 128, 256>}, {pipeline_mode = #tpu.pipeline_mode<synchronous>, transform_indices = @transform_4, window_bounds = array<i64: 1, 256>}, {pipeline_mode = #tpu.pipeline_mode<synchronous>, transform_indices = @transform_5, window_bounds = array<i64: 21, 512>}, {pipeline_mode = #tpu.pipeline_mode<synchronous>, transform_indices = @transform_6, window_bounds = array<i64: 512, 4>}, {pipeline_mode = #tpu.pipeline_mode<synchronous>, transform_indices = @transform_7, window_bounds = array<i64: 1, 4>}, {transform_indices = @transform_8, window_bounds = array<i64: 1, 1, 4>}]} {
    %c0 = arith.constant 0 : index
    %c0_0 = arith.constant 0 : index
    %0 = vector.load %arg3[%c0, %c0_0] : memref<1x256xf32, #tpu.memory_space<vmem>>, vector<1x256xf32>
    %1 = vector.shape_cast %0 : vector<1x256xf32> to vector<1x256xf32>
    %2 = vector.broadcast %1 : vector<1x256xf32> to vector<21x256xf32>
    %c0_1 = arith.constant 0 : index
    %c0_2 = arith.constant 0 : index
    %3 = vector.load %arg5[%c0_1, %c0_2] : memref<1x256xf32, #tpu.memory_space<vmem>>, vector<1x256xf32>
    %4 = vector.shape_cast %3 : vector<1x256xf32> to vector<1x256xf32>
    %5 = vector.broadcast %4 : vector<1x256xf32> to vector<21x256xf32>
    %c0_3 = arith.constant 0 : index
    %c0_4 = arith.constant 0 : index
    %6 = vector.load %arg6[%c0_3, %c0_4] : memref<21x512xf32, #tpu.memory_space<vmem>>, vector<21x512xf32>
    %c0_5 = arith.constant 0 : index
    %c0_6 = arith.constant 0 : index
    %7 = vector.load %arg7[%c0_5, %c0_6] : memref<512x4xf32, #tpu.memory_space<vmem>>, vector<512x4xf32>
    %c0_7 = arith.constant 0 : index
    %c0_8 = arith.constant 0 : index
    %8 = vector.load %arg8[%c0_7, %c0_8] : memref<1x4xf32, #tpu.memory_space<vmem>>, vector<1x4xf32>
    %cst = arith.constant 0.000000e+00 : f32
    %9 = vector.broadcast %cst : f32 to vector<3x128xf32>
    %c0_9 = arith.constant 0 : index
    %c21 = arith.constant 21 : index
    %c0_10 = arith.constant 0 : index
    %10 = vector.load %arg10[%c0_9, %c21, %c0_10] : memref<2x24x128xf32, #tpu.memory_space<vmem>>, vector<1x3x128xf32>
    %11 = vector.shape_cast %10 : vector<1x3x128xf32> to vector<3x128xf32>
    %12 = vector.shape_cast %9 : vector<3x128xf32> to vector<1x3x128xf32>
    tpu.vector_store %arg10[%c0_9, %c21, %c0_10], %12 {strides = array<i32>} : memref<2x24x128xf32, #tpu.memory_space<vmem>>, vector<1x3x128xf32>,
    %cst_11 = arith.constant 0.000000e+00 : f32
    %13 = vector.broadcast %cst_11 : f32 to vector<3x128xf32>
    %c1 = arith.constant 1 : index
    %c21_12 = arith.constant 21 : index
    %c0_13 = arith.constant 0 : index
    %14 = vector.load %arg10[%c1, %c21_12, %c0_13] : memref<2x24x128xf32, #tpu.memory_space<vmem>>, vector<1x3x128xf32>
    %15 = vector.shape_cast %14 : vector<1x3x128xf32> to vector<3x128xf32>
    %16 = vector.shape_cast %13 : vector<3x128xf32> to vector<1x3x128xf32>
    tpu.vector_store %arg10[%c1, %c21_12, %c0_13], %16 {strides = array<i32>} : memref<2x24x128xf32, #tpu.memory_space<vmem>>, vector<1x3x128xf32>,
    %cst_14 = arith.constant 0.000000e+00 : f32
    %17 = vector.broadcast %cst_14 : f32 to vector<21x256xf32>
    %c0_15 = arith.constant 0 : index
    %c0_16 = arith.constant 0 : index
    %c0_17 = arith.constant 0 : index
    %18 = vector.load %arg1[%c0_15, %c0_16, %c0_17] : memref<1x88x84xf32, #tpu.memory_space<vmem>>, vector<1x21x84xf32>
    %19 = vector.shape_cast %18 : vector<1x21x84xf32> to vector<21x84xf32>
    %c0_18 = arith.constant 0 : index
    %c0_19 = arith.constant 0 : index
    %c0_20 = arith.constant 0 : index
    %20 = vector.load %arg2[%c0_18, %c0_19, %c0_20] : memref<5x84x256xf32, #tpu.memory_space<vmem>>, vector<1x84x256xf32>
    %21 = vector.shape_cast %20 : vector<1x84x256xf32> to vector<84x256xf32>
    %cst_21 = arith.constant dense<0.000000e+00> : vector<21x256xf32>
    %22 = tpu.matmul %19, %21, %cst_21 {dimension_numbers = #tpu.dot_dimension_numbers<[1], [0], [0], [1], [0, 0, 1, 1], [], []>} : vector<21x84xf32>, vector<84x256xf32>, vector<21x256xf32> -> vector<21x256xf32>
    %23 = arith.addf %17, %22 : vector<21x256xf32>
    %c0_22 = arith.constant 0 : index
    %c22 = arith.constant 22 : index
    %c0_23 = arith.constant 0 : index
    %24 = vector.load %arg1[%c0_22, %c22, %c0_23] : memref<1x88x84xf32, #tpu.memory_space<vmem>>, vector<1x21x84xf32>
    %25 = vector.shape_cast %24 : vector<1x21x84xf32> to vector<21x84xf32>
    %c1_24 = arith.constant 1 : index
    %c0_25 = arith.constant 0 : index
    %c0_26 = arith.constant 0 : index
    %26 = vector.load %arg2[%c1_24, %c0_25, %c0_26] : memref<5x84x256xf32, #tpu.memory_space<vmem>>, vector<1x84x256xf32>
    %27 = vector.shape_cast %26 : vector<1x84x256xf32> to vector<84x256xf32>
    %cst_27 = arith.constant dense<0.000000e+00> : vector<21x256xf32>
    %28 = tpu.matmul %25, %27, %cst_27 {dimension_numbers = #tpu.dot_dimension_numbers<[1], [0], [0], [1], [0, 0, 1, 1], [], []>} : vector<21x84xf32>, vector<84x256xf32>, vector<21x256xf32> -> vector<21x256xf32>
    %29 = arith.addf %23, %28 : vector<21x256xf32>
    %c0_28 = arith.constant 0 : index
    %c44 = arith.constant 44 : index
    %c0_29 = arith.constant 0 : index
    %30 = vector.load %arg1[%c0_28, %c44, %c0_29] : memref<1x88x84xf32, #tpu.memory_space<vmem>>, vector<1x21x84xf32>
    %31 = vector.shape_cast %30 : vector<1x21x84xf32> to vector<21x84xf32>
    %c2 = arith.constant 2 : index
    %c0_30 = arith.constant 0 : index
    %c0_31 = arith.constant 0 : index
    %32 = vector.load %arg2[%c2, %c0_30, %c0_31] : memref<5x84x256xf32, #tpu.memory_space<vmem>>, vector<1x84x256xf32>
    %33 = vector.shape_cast %32 : vector<1x84x256xf32> to vector<84x256xf32>
    %cst_32 = arith.constant dense<0.000000e+00> : vector<21x256xf32>
    %34 = tpu.matmul %31, %33, %cst_32 {dimension_numbers = #tpu.dot_dimension_numbers<[1], [0], [0], [1], [0, 0, 1, 1], [], []>} : vector<21x84xf32>, vector<84x256xf32>, vector<21x256xf32> -> vector<21x256xf32>
    %35 = arith.addf %29, %34 : vector<21x256xf32>
    %c0_33 = arith.constant 0 : index
    %c66 = arith.constant 66 : index
    %c0_34 = arith.constant 0 : index
    %36 = vector.load %arg1[%c0_33, %c66, %c0_34] : memref<1x88x84xf32, #tpu.memory_space<vmem>>, vector<1x21x84xf32>
    %37 = vector.shape_cast %36 : vector<1x21x84xf32> to vector<21x84xf32>
    %c3 = arith.constant 3 : index
    %c0_35 = arith.constant 0 : index
    %c0_36 = arith.constant 0 : index
    %38 = vector.load %arg2[%c3, %c0_35, %c0_36] : memref<5x84x256xf32, #tpu.memory_space<vmem>>, vector<1x84x256xf32>
    %39 = vector.shape_cast %38 : vector<1x84x256xf32> to vector<84x256xf32>
    %cst_37 = arith.constant dense<0.000000e+00> : vector<21x256xf32>
    %40 = tpu.matmul %37, %39, %cst_37 {dimension_numbers = #tpu.dot_dimension_numbers<[1], [0], [0], [1], [0, 0, 1, 1], [], []>} : vector<21x84xf32>, vector<84x256xf32>, vector<21x256xf32> -> vector<21x256xf32>
    %41 = arith.addf %35, %40 : vector<21x256xf32>
    %c0_38 = arith.constant 0 : index
    %c1_39 = arith.constant 1 : index
    %c0_40 = arith.constant 0 : index
    %42 = vector.load %arg1[%c0_38, %c1_39, %c0_40] : memref<1x88x84xf32, #tpu.memory_space<vmem>>, vector<1x21x84xf32>
    %43 = vector.shape_cast %42 : vector<1x21x84xf32> to vector<21x84xf32>
    %c4 = arith.constant 4 : index
    %c0_41 = arith.constant 0 : index
    %c0_42 = arith.constant 0 : index
    %44 = vector.load %arg2[%c4, %c0_41, %c0_42] : memref<5x84x256xf32, #tpu.memory_space<vmem>>, vector<1x84x256xf32>
    %45 = vector.shape_cast %44 : vector<1x84x256xf32> to vector<84x256xf32>
    %cst_43 = arith.constant dense<0.000000e+00> : vector<21x256xf32>
    %46 = tpu.matmul %43, %45, %cst_43 {dimension_numbers = #tpu.dot_dimension_numbers<[1], [0], [0], [1], [0, 0, 1, 1], [], []>} : vector<21x84xf32>, vector<84x256xf32>, vector<21x256xf32> -> vector<21x256xf32>
    %47 = arith.addf %41, %46 : vector<21x256xf32>
    %48 = arith.addf %47, %2 : vector<21x256xf32>
    %cst_44 = arith.constant 0.000000e+00 : f32
    %49 = vector.broadcast %cst_44 : f32 to vector<21x256xf32>
    %50 = arith.maximumf %48, %49 : vector<21x256xf32>
    %cst_45 = arith.constant 0.000000e+00 : f32
    %51 = vector.broadcast %cst_45 : f32 to vector<21x256xf32>
    %c0_46 = arith.constant 0 : index
    %c22_47 = arith.constant 22 : index
    %c0_48 = arith.constant 0 : index
    %52 = vector.load %arg1[%c0_46, %c22_47, %c0_48] : memref<1x88x84xf32, #tpu.memory_space<vmem>>, vector<1x21x84xf32>
    %53 = vector.shape_cast %52 : vector<1x21x84xf32> to vector<21x84xf32>
    %c0_49 = arith.constant 0 : index
    %c0_50 = arith.constant 0 : index
    %c0_51 = arith.constant 0 : index
    %54 = vector.load %arg2[%c0_49, %c0_50, %c0_51] : memref<5x84x256xf32, #tpu.memory_space<vmem>>, vector<1x84x256xf32>
    %55 = vector.shape_cast %54 : vector<1x84x256xf32> to vector<84x256xf32>
    %cst_52 = arith.constant dense<0.000000e+00> : vector<21x256xf32>
    %56 = tpu.matmul %53, %55, %cst_52 {dimension_numbers = #tpu.dot_dimension_numbers<[1], [0], [0], [1], [0, 0, 1, 1], [], []>} : vector<21x84xf32>, vector<84x256xf32>, vector<21x256xf32> -> vector<21x256xf32>
    %57 = arith.addf %51, %56 : vector<21x256xf32>
    %c0_53 = arith.constant 0 : index
    %c44_54 = arith.constant 44 : index
    %c0_55 = arith.constant 0 : index
    %58 = vector.load %arg1[%c0_53, %c44_54, %c0_55] : memref<1x88x84xf32, #tpu.memory_space<vmem>>, vector<1x21x84xf32>
    %59 = vector.shape_cast %58 : vector<1x21x84xf32> to vector<21x84xf32>
    %c1_56 = arith.constant 1 : index
    %c0_57 = arith.constant 0 : index
    %c0_58 = arith.constant 0 : index
    %60 = vector.load %arg2[%c1_56, %c0_57, %c0_58] : memref<5x84x256xf32, #tpu.memory_space<vmem>>, vector<1x84x256xf32>
    %61 = vector.shape_cast %60 : vector<1x84x256xf32> to vector<84x256xf32>
    %cst_59 = arith.constant dense<0.000000e+00> : vector<21x256xf32>
    %62 = tpu.matmul %59, %61, %cst_59 {dimension_numbers = #tpu.dot_dimension_numbers<[1], [0], [0], [1], [0, 0, 1, 1], [], []>} : vector<21x84xf32>, vector<84x256xf32>, vector<21x256xf32> -> vector<21x256xf32>
    %63 = arith.addf %57, %62 : vector<21x256xf32>
    %c0_60 = arith.constant 0 : index
    %c66_61 = arith.constant 66 : index
    %c0_62 = arith.constant 0 : index
    %64 = vector.load %arg1[%c0_60, %c66_61, %c0_62] : memref<1x88x84xf32, #tpu.memory_space<vmem>>, vector<1x21x84xf32>
    %65 = vector.shape_cast %64 : vector<1x21x84xf32> to vector<21x84xf32>
    %c2_63 = arith.constant 2 : index
    %c0_64 = arith.constant 0 : index
    %c0_65 = arith.constant 0 : index
    %66 = vector.load %arg2[%c2_63, %c0_64, %c0_65] : memref<5x84x256xf32, #tpu.memory_space<vmem>>, vector<1x84x256xf32>
    %67 = vector.shape_cast %66 : vector<1x84x256xf32> to vector<84x256xf32>
    %cst_66 = arith.constant dense<0.000000e+00> : vector<21x256xf32>
    %68 = tpu.matmul %65, %67, %cst_66 {dimension_numbers = #tpu.dot_dimension_numbers<[1], [0], [0], [1], [0, 0, 1, 1], [], []>} : vector<21x84xf32>, vector<84x256xf32>, vector<21x256xf32> -> vector<21x256xf32>
    %69 = arith.addf %63, %68 : vector<21x256xf32>
    %c0_67 = arith.constant 0 : index
    %c1_68 = arith.constant 1 : index
    %c0_69 = arith.constant 0 : index
    %70 = vector.load %arg1[%c0_67, %c1_68, %c0_69] : memref<1x88x84xf32, #tpu.memory_space<vmem>>, vector<1x21x84xf32>
    %71 = vector.shape_cast %70 : vector<1x21x84xf32> to vector<21x84xf32>
    %c3_70 = arith.constant 3 : index
    %c0_71 = arith.constant 0 : index
    %c0_72 = arith.constant 0 : index
    %72 = vector.load %arg2[%c3_70, %c0_71, %c0_72] : memref<5x84x256xf32, #tpu.memory_space<vmem>>, vector<1x84x256xf32>
    %73 = vector.shape_cast %72 : vector<1x84x256xf32> to vector<84x256xf32>
    %cst_73 = arith.constant dense<0.000000e+00> : vector<21x256xf32>
    %74 = tpu.matmul %71, %73, %cst_73 {dimension_numbers = #tpu.dot_dimension_numbers<[1], [0], [0], [1], [0, 0, 1, 1], [], []>} : vector<21x84xf32>, vector<84x256xf32>, vector<21x256xf32> -> vector<21x256xf32>
    %75 = arith.addf %69, %74 : vector<21x256xf32>
    %c0_74 = arith.constant 0 : index
    %c23 = arith.constant 23 : index
    %c0_75 = arith.constant 0 : index
    %76 = vector.load %arg1[%c0_74, %c23, %c0_75] : memref<1x88x84xf32, #tpu.memory_space<vmem>>, vector<1x21x84xf32>
    %77 = vector.shape_cast %76 : vector<1x21x84xf32> to vector<21x84xf32>
    %c4_76 = arith.constant 4 : index
    %c0_77 = arith.constant 0 : index
    %c0_78 = arith.constant 0 : index
    %78 = vector.load %arg2[%c4_76, %c0_77, %c0_78] : memref<5x84x256xf32, #tpu.memory_space<vmem>>, vector<1x84x256xf32>
    %79 = vector.shape_cast %78 : vector<1x84x256xf32> to vector<84x256xf32>
    %cst_79 = arith.constant dense<0.000000e+00> : vector<21x256xf32>
    %80 = tpu.matmul %77, %79, %cst_79 {dimension_numbers = #tpu.dot_dimension_numbers<[1], [0], [0], [1], [0, 0, 1, 1], [], []>} : vector<21x84xf32>, vector<84x256xf32>, vector<21x256xf32> -> vector<21x256xf32>
    %81 = arith.addf %75, %80 : vector<21x256xf32>
    %82 = arith.addf %81, %2 : vector<21x256xf32>
    %cst_80 = arith.constant 0.000000e+00 : f32
    %83 = vector.broadcast %cst_80 : f32 to vector<21x256xf32>
    %84 = arith.maximumf %82, %83 : vector<21x256xf32>
    %85 = arith.maximumf %50, %84 : vector<21x256xf32>
    %86 = vector.extract_strided_slice %85 {offsets = [0, 0], sizes = [21, 128], strides = [1, 1]} : vector<21x256xf32> to vector<21x128xf32>
    %87 = vector.extract_strided_slice %85 {offsets = [0, 128], sizes = [21, 128], strides = [1, 1]} : vector<21x256xf32> to vector<21x128xf32>
    %88 = arith.maximumf %86, %87 : vector<21x128xf32>
    %c0_81 = arith.constant 0 : index
    %c0_82 = arith.constant 0 : index
    %c0_83 = arith.constant 0 : index
    %89 = vector.load %arg10[%c0_81, %c0_82, %c0_83] : memref<2x24x128xf32, #tpu.memory_space<vmem>>, vector<1x21x128xf32>
    %90 = vector.shape_cast %89 : vector<1x21x128xf32> to vector<21x128xf32>
    %91 = vector.shape_cast %88 : vector<21x128xf32> to vector<1x21x128xf32>
    tpu.vector_store %arg10[%c0_81, %c0_82, %c0_83], %91 {strides = array<i32>} : memref<2x24x128xf32, #tpu.memory_space<vmem>>, vector<1x21x128xf32>,
    %cst_84 = arith.constant 0.000000e+00 : f32
    %92 = vector.broadcast %cst_84 : f32 to vector<21x256xf32>
    %c0_85 = arith.constant 0 : index
    %c44_86 = arith.constant 44 : index
    %c0_87 = arith.constant 0 : index
    %93 = vector.load %arg1[%c0_85, %c44_86, %c0_87] : memref<1x88x84xf32, #tpu.memory_space<vmem>>, vector<1x21x84xf32>
    %94 = vector.shape_cast %93 : vector<1x21x84xf32> to vector<21x84xf32>
    %c0_88 = arith.constant 0 : index
    %c0_89 = arith.constant 0 : index
    %c0_90 = arith.constant 0 : index
    %95 = vector.load %arg2[%c0_88, %c0_89, %c0_90] : memref<5x84x256xf32, #tpu.memory_space<vmem>>, vector<1x84x256xf32>
    %96 = vector.shape_cast %95 : vector<1x84x256xf32> to vector<84x256xf32>
    %cst_91 = arith.constant dense<0.000000e+00> : vector<21x256xf32>
    %97 = tpu.matmul %94, %96, %cst_91 {dimension_numbers = #tpu.dot_dimension_numbers<[1], [0], [0], [1], [0, 0, 1, 1], [], []>} : vector<21x84xf32>, vector<84x256xf32>, vector<21x256xf32> -> vector<21x256xf32>
    %98 = arith.addf %92, %97 : vector<21x256xf32>
    %c0_92 = arith.constant 0 : index
    %c66_93 = arith.constant 66 : index
    %c0_94 = arith.constant 0 : index
    %99 = vector.load %arg1[%c0_92, %c66_93, %c0_94] : memref<1x88x84xf32, #tpu.memory_space<vmem>>, vector<1x21x84xf32>
    %100 = vector.shape_cast %99 : vector<1x21x84xf32> to vector<21x84xf32>
    %c1_95 = arith.constant 1 : index
    %c0_96 = arith.constant 0 : index
    %c0_97 = arith.constant 0 : index
    %101 = vector.load %arg2[%c1_95, %c0_96, %c0_97] : memref<5x84x256xf32, #tpu.memory_space<vmem>>, vector<1x84x256xf32>
    %102 = vector.shape_cast %101 : vector<1x84x256xf32> to vector<84x256xf32>
    %cst_98 = arith.constant dense<0.000000e+00> : vector<21x256xf32>
    %103 = tpu.matmul %100, %102, %cst_98 {dimension_numbers = #tpu.dot_dimension_numbers<[1], [0], [0], [1], [0, 0, 1, 1], [], []>} : vector<21x84xf32>, vector<84x256xf32>, vector<21x256xf32> -> vector<21x256xf32>
    %104 = arith.addf %98, %103 : vector<21x256xf32>
    %c0_99 = arith.constant 0 : index
    %c1_100 = arith.constant 1 : index
    %c0_101 = arith.constant 0 : index
    %105 = vector.load %arg1[%c0_99, %c1_100, %c0_101] : memref<1x88x84xf32, #tpu.memory_space<vmem>>, vector<1x21x84xf32>
    %106 = vector.shape_cast %105 : vector<1x21x84xf32> to vector<21x84xf32>
    %c2_102 = arith.constant 2 : index
    %c0_103 = arith.constant 0 : index
    %c0_104 = arith.constant 0 : index
    %107 = vector.load %arg2[%c2_102, %c0_103, %c0_104] : memref<5x84x256xf32, #tpu.memory_space<vmem>>, vector<1x84x256xf32>
    %108 = vector.shape_cast %107 : vector<1x84x256xf32> to vector<84x256xf32>
    %cst_105 = arith.constant dense<0.000000e+00> : vector<21x256xf32>
    %109 = tpu.matmul %106, %108, %cst_105 {dimension_numbers = #tpu.dot_dimension_numbers<[1], [0], [0], [1], [0, 0, 1, 1], [], []>} : vector<21x84xf32>, vector<84x256xf32>, vector<21x256xf32> -> vector<21x256xf32>
    %110 = arith.addf %104, %109 : vector<21x256xf32>
    %c0_106 = arith.constant 0 : index
    %c23_107 = arith.constant 23 : index
    %c0_108 = arith.constant 0 : index
    %111 = vector.load %arg1[%c0_106, %c23_107, %c0_108] : memref<1x88x84xf32, #tpu.memory_space<vmem>>, vector<1x21x84xf32>
    %112 = vector.shape_cast %111 : vector<1x21x84xf32> to vector<21x84xf32>
    %c3_109 = arith.constant 3 : index
    %c0_110 = arith.constant 0 : index
    %c0_111 = arith.constant 0 : index
    %113 = vector.load %arg2[%c3_109, %c0_110, %c0_111] : memref<5x84x256xf32, #tpu.memory_space<vmem>>, vector<1x84x256xf32>
    %114 = vector.shape_cast %113 : vector<1x84x256xf32> to vector<84x256xf32>
    %cst_112 = arith.constant dense<0.000000e+00> : vector<21x256xf32>
    %115 = tpu.matmul %112, %114, %cst_112 {dimension_numbers = #tpu.dot_dimension_numbers<[1], [0], [0], [1], [0, 0, 1, 1], [], []>} : vector<21x84xf32>, vector<84x256xf32>, vector<21x256xf32> -> vector<21x256xf32>
    %116 = arith.addf %110, %115 : vector<21x256xf32>
    %c0_113 = arith.constant 0 : index
    %c45 = arith.constant 45 : index
    %c0_114 = arith.constant 0 : index
    %117 = vector.load %arg1[%c0_113, %c45, %c0_114] : memref<1x88x84xf32, #tpu.memory_space<vmem>>, vector<1x21x84xf32>
    %118 = vector.shape_cast %117 : vector<1x21x84xf32> to vector<21x84xf32>
    %c4_115 = arith.constant 4 : index
    %c0_116 = arith.constant 0 : index
    %c0_117 = arith.constant 0 : index
    %119 = vector.load %arg2[%c4_115, %c0_116, %c0_117] : memref<5x84x256xf32, #tpu.memory_space<vmem>>, vector<1x84x256xf32>
    %120 = vector.shape_cast %119 : vector<1x84x256xf32> to vector<84x256xf32>
    %cst_118 = arith.constant dense<0.000000e+00> : vector<21x256xf32>
    %121 = tpu.matmul %118, %120, %cst_118 {dimension_numbers = #tpu.dot_dimension_numbers<[1], [0], [0], [1], [0, 0, 1, 1], [], []>} : vector<21x84xf32>, vector<84x256xf32>, vector<21x256xf32> -> vector<21x256xf32>
    %122 = arith.addf %116, %121 : vector<21x256xf32>
    %123 = arith.addf %122, %2 : vector<21x256xf32>
    %cst_119 = arith.constant 0.000000e+00 : f32
    %124 = vector.broadcast %cst_119 : f32 to vector<21x256xf32>
    %125 = arith.maximumf %123, %124 : vector<21x256xf32>
    %cst_120 = arith.constant 0.000000e+00 : f32
    %126 = vector.broadcast %cst_120 : f32 to vector<21x256xf32>
    %c0_121 = arith.constant 0 : index
    %c66_122 = arith.constant 66 : index
    %c0_123 = arith.constant 0 : index
    %127 = vector.load %arg1[%c0_121, %c66_122, %c0_123] : memref<1x88x84xf32, #tpu.memory_space<vmem>>, vector<1x21x84xf32>
    %128 = vector.shape_cast %127 : vector<1x21x84xf32> to vector<21x84xf32>
    %c0_124 = arith.constant 0 : index
    %c0_125 = arith.constant 0 : index
    %c0_126 = arith.constant 0 : index
    %129 = vector.load %arg2[%c0_124, %c0_125, %c0_126] : memref<5x84x256xf32, #tpu.memory_space<vmem>>, vector<1x84x256xf32>
    %130 = vector.shape_cast %129 : vector<1x84x256xf32> to vector<84x256xf32>
    %cst_127 = arith.constant dense<0.000000e+00> : vector<21x256xf32>
    %131 = tpu.matmul %128, %130, %cst_127 {dimension_numbers = #tpu.dot_dimension_numbers<[1], [0], [0], [1], [0, 0, 1, 1], [], []>} : vector<21x84xf32>, vector<84x256xf32>, vector<21x256xf32> -> vector<21x256xf32>
    %132 = arith.addf %126, %131 : vector<21x256xf32>
    %c0_128 = arith.constant 0 : index
    %c1_129 = arith.constant 1 : index
    %c0_130 = arith.constant 0 : index
    %133 = vector.load %arg1[%c0_128, %c1_129, %c0_130] : memref<1x88x84xf32, #tpu.memory_space<vmem>>, vector<1x21x84xf32>
    %134 = vector.shape_cast %133 : vector<1x21x84xf32> to vector<21x84xf32>
    %c1_131 = arith.constant 1 : index
    %c0_132 = arith.constant 0 : index
    %c0_133 = arith.constant 0 : index
    %135 = vector.load %arg2[%c1_131, %c0_132, %c0_133] : memref<5x84x256xf32, #tpu.memory_space<vmem>>, vector<1x84x256xf32>
    %136 = vector.shape_cast %135 : vector<1x84x256xf32> to vector<84x256xf32>
    %cst_134 = arith.constant dense<0.000000e+00> : vector<21x256xf32>
    %137 = tpu.matmul %134, %136, %cst_134 {dimension_numbers = #tpu.dot_dimension_numbers<[1], [0], [0], [1], [0, 0, 1, 1], [], []>} : vector<21x84xf32>, vector<84x256xf32>, vector<21x256xf32> -> vector<21x256xf32>
    %138 = arith.addf %132, %137 : vector<21x256xf32>
    %c0_135 = arith.constant 0 : index
    %c23_136 = arith.constant 23 : index
    %c0_137 = arith.constant 0 : index
    %139 = vector.load %arg1[%c0_135, %c23_136, %c0_137] : memref<1x88x84xf32, #tpu.memory_space<vmem>>, vector<1x21x84xf32>
    %140 = vector.shape_cast %139 : vector<1x21x84xf32> to vector<21x84xf32>
    %c2_138 = arith.constant 2 : index
    %c0_139 = arith.constant 0 : index
    %c0_140 = arith.constant 0 : index
    %141 = vector.load %arg2[%c2_138, %c0_139, %c0_140] : memref<5x84x256xf32, #tpu.memory_space<vmem>>, vector<1x84x256xf32>
    %142 = vector.shape_cast %141 : vector<1x84x256xf32> to vector<84x256xf32>
    %cst_141 = arith.constant dense<0.000000e+00> : vector<21x256xf32>
    %143 = tpu.matmul %140, %142, %cst_141 {dimension_numbers = #tpu.dot_dimension_numbers<[1], [0], [0], [1], [0, 0, 1, 1], [], []>} : vector<21x84xf32>, vector<84x256xf32>, vector<21x256xf32> -> vector<21x256xf32>
    %144 = arith.addf %138, %143 : vector<21x256xf32>
    %c0_142 = arith.constant 0 : index
    %c45_143 = arith.constant 45 : index
    %c0_144 = arith.constant 0 : index
    %145 = vector.load %arg1[%c0_142, %c45_143, %c0_144] : memref<1x88x84xf32, #tpu.memory_space<vmem>>, vector<1x21x84xf32>
    %146 = vector.shape_cast %145 : vector<1x21x84xf32> to vector<21x84xf32>
    %c3_145 = arith.constant 3 : index
    %c0_146 = arith.constant 0 : index
    %c0_147 = arith.constant 0 : index
    %147 = vector.load %arg2[%c3_145, %c0_146, %c0_147] : memref<5x84x256xf32, #tpu.memory_space<vmem>>, vector<1x84x256xf32>
    %148 = vector.shape_cast %147 : vector<1x84x256xf32> to vector<84x256xf32>
    %cst_148 = arith.constant dense<0.000000e+00> : vector<21x256xf32>
    %149 = tpu.matmul %146, %148, %cst_148 {dimension_numbers = #tpu.dot_dimension_numbers<[1], [0], [0], [1], [0, 0, 1, 1], [], []>} : vector<21x84xf32>, vector<84x256xf32>, vector<21x256xf32> -> vector<21x256xf32>
    %150 = arith.addf %144, %149 : vector<21x256xf32>
    %c0_149 = arith.constant 0 : index
    %c67 = arith.constant 67 : index
    %c0_150 = arith.constant 0 : index
    %151 = vector.load %arg1[%c0_149, %c67, %c0_150] : memref<1x88x84xf32, #tpu.memory_space<vmem>>, vector<1x21x84xf32>
    %152 = vector.shape_cast %151 : vector<1x21x84xf32> to vector<21x84xf32>
    %c4_151 = arith.constant 4 : index
    %c0_152 = arith.constant 0 : index
    %c0_153 = arith.constant 0 : index
    %153 = vector.load %arg2[%c4_151, %c0_152, %c0_153] : memref<5x84x256xf32, #tpu.memory_space<vmem>>, vector<1x84x256xf32>
    %154 = vector.shape_cast %153 : vector<1x84x256xf32> to vector<84x256xf32>
    %cst_154 = arith.constant dense<0.000000e+00> : vector<21x256xf32>
    %155 = tpu.matmul %152, %154, %cst_154 {dimension_numbers = #tpu.dot_dimension_numbers<[1], [0], [0], [1], [0, 0, 1, 1], [], []>} : vector<21x84xf32>, vector<84x256xf32>, vector<21x256xf32> -> vector<21x256xf32>
    %156 = arith.addf %150, %155 : vector<21x256xf32>
    %157 = arith.addf %156, %2 : vector<21x256xf32>
    %cst_155 = arith.constant 0.000000e+00 : f32
    %158 = vector.broadcast %cst_155 : f32 to vector<21x256xf32>
    %159 = arith.maximumf %157, %158 : vector<21x256xf32>
    %160 = arith.maximumf %125, %159 : vector<21x256xf32>
    %161 = vector.extract_strided_slice %160 {offsets = [0, 0], sizes = [21, 128], strides = [1, 1]} : vector<21x256xf32> to vector<21x128xf32>
    %162 = vector.extract_strided_slice %160 {offsets = [0, 128], sizes = [21, 128], strides = [1, 1]} : vector<21x256xf32> to vector<21x128xf32>
    %163 = arith.maximumf %161, %162 : vector<21x128xf32>
    %c1_156 = arith.constant 1 : index
    %c0_157 = arith.constant 0 : index
    %c0_158 = arith.constant 0 : index
    %164 = vector.load %arg10[%c1_156, %c0_157, %c0_158] : memref<2x24x128xf32, #tpu.memory_space<vmem>>, vector<1x21x128xf32>
    %165 = vector.shape_cast %164 : vector<1x21x128xf32> to vector<21x128xf32>
    %166 = vector.shape_cast %163 : vector<21x128xf32> to vector<1x21x128xf32>
    tpu.vector_store %arg10[%c1_156, %c0_157, %c0_158], %166 {strides = array<i32>} : memref<2x24x128xf32, #tpu.memory_space<vmem>>, vector<1x21x128xf32>,
    %cst_159 = arith.constant 0.000000e+00 : f32
    %167 = vector.broadcast %cst_159 : f32 to vector<21x256xf32>
    %c0_160 = arith.constant 0 : index
    %c0_161 = arith.constant 0 : index
    %c0_162 = arith.constant 0 : index
    %168 = vector.load %arg10[%c0_160, %c0_161, %c0_162] : memref<2x24x128xf32, #tpu.memory_space<vmem>>, vector<1x21x128xf32>
    %169 = vector.shape_cast %168 : vector<1x21x128xf32> to vector<21x128xf32>
    %c0_163 = arith.constant 0 : index
    %c0_164 = arith.constant 0 : index
    %c0_165 = arith.constant 0 : index
    %170 = vector.load %arg4[%c0_163, %c0_164, %c0_165] : memref<5x128x256xf32, #tpu.memory_space<vmem>>, vector<1x128x256xf32>
    %171 = vector.shape_cast %170 : vector<1x128x256xf32> to vector<128x256xf32>
    %cst_166 = arith.constant dense<0.000000e+00> : vector<21x256xf32>
    %172 = tpu.matmul %169, %171, %cst_166 {dimension_numbers = #tpu.dot_dimension_numbers<[1], [0], [0], [1], [0, 0, 1, 1], [], []>} : vector<21x128xf32>, vector<128x256xf32>, vector<21x256xf32> -> vector<21x256xf32>
    %173 = arith.addf %167, %172 : vector<21x256xf32>
    %c1_167 = arith.constant 1 : index
    %c0_168 = arith.constant 0 : index
    %c0_169 = arith.constant 0 : index
    %174 = vector.load %arg10[%c1_167, %c0_168, %c0_169] : memref<2x24x128xf32, #tpu.memory_space<vmem>>, vector<1x21x128xf32>
    %175 = vector.shape_cast %174 : vector<1x21x128xf32> to vector<21x128xf32>
    %c1_170 = arith.constant 1 : index
    %c0_171 = arith.constant 0 : index
    %c0_172 = arith.constant 0 : index
    %176 = vector.load %arg4[%c1_170, %c0_171, %c0_172] : memref<5x128x256xf32, #tpu.memory_space<vmem>>, vector<1x128x256xf32>
    %177 = vector.shape_cast %176 : vector<1x128x256xf32> to vector<128x256xf32>
    %cst_173 = arith.constant dense<0.000000e+00> : vector<21x256xf32>
    %178 = tpu.matmul %175, %177, %cst_173 {dimension_numbers = #tpu.dot_dimension_numbers<[1], [0], [0], [1], [0, 0, 1, 1], [], []>} : vector<21x128xf32>, vector<128x256xf32>, vector<21x256xf32> -> vector<21x256xf32>
    %179 = arith.addf %173, %178 : vector<21x256xf32>
    %c0_174 = arith.constant 0 : index
    %c1_175 = arith.constant 1 : index
    %c0_176 = arith.constant 0 : index
    %180 = vector.load %arg10[%c0_174, %c1_175, %c0_176] : memref<2x24x128xf32, #tpu.memory_space<vmem>>, vector<1x21x128xf32>
    %181 = vector.shape_cast %180 : vector<1x21x128xf32> to vector<21x128xf32>
    %c2_177 = arith.constant 2 : index
    %c0_178 = arith.constant 0 : index
    %c0_179 = arith.constant 0 : index
    %182 = vector.load %arg4[%c2_177, %c0_178, %c0_179] : memref<5x128x256xf32, #tpu.memory_space<vmem>>, vector<1x128x256xf32>
    %183 = vector.shape_cast %182 : vector<1x128x256xf32> to vector<128x256xf32>
    %cst_180 = arith.constant dense<0.000000e+00> : vector<21x256xf32>
    %184 = tpu.matmul %181, %183, %cst_180 {dimension_numbers = #tpu.dot_dimension_numbers<[1], [0], [0], [1], [0, 0, 1, 1], [], []>} : vector<21x128xf32>, vector<128x256xf32>, vector<21x256xf32> -> vector<21x256xf32>
    %185 = arith.addf %179, %184 : vector<21x256xf32>
    %c1_181 = arith.constant 1 : index
    %c1_182 = arith.constant 1 : index
    %c0_183 = arith.constant 0 : index
    %186 = vector.load %arg10[%c1_181, %c1_182, %c0_183] : memref<2x24x128xf32, #tpu.memory_space<vmem>>, vector<1x21x128xf32>
    %187 = vector.shape_cast %186 : vector<1x21x128xf32> to vector<21x128xf32>
    %c3_184 = arith.constant 3 : index
    %c0_185 = arith.constant 0 : index
    %c0_186 = arith.constant 0 : index
    %188 = vector.load %arg4[%c3_184, %c0_185, %c0_186] : memref<5x128x256xf32, #tpu.memory_space<vmem>>, vector<1x128x256xf32>
    %189 = vector.shape_cast %188 : vector<1x128x256xf32> to vector<128x256xf32>
    %cst_187 = arith.constant dense<0.000000e+00> : vector<21x256xf32>
    %190 = tpu.matmul %187, %189, %cst_187 {dimension_numbers = #tpu.dot_dimension_numbers<[1], [0], [0], [1], [0, 0, 1, 1], [], []>} : vector<21x128xf32>, vector<128x256xf32>, vector<21x256xf32> -> vector<21x256xf32>
    %191 = arith.addf %185, %190 : vector<21x256xf32>
    %c0_188 = arith.constant 0 : index
    %c2_189 = arith.constant 2 : index
    %c0_190 = arith.constant 0 : index
    %192 = vector.load %arg10[%c0_188, %c2_189, %c0_190] : memref<2x24x128xf32, #tpu.memory_space<vmem>>, vector<1x21x128xf32>
    %193 = vector.shape_cast %192 : vector<1x21x128xf32> to vector<21x128xf32>
    %c4_191 = arith.constant 4 : index
    %c0_192 = arith.constant 0 : index
    %c0_193 = arith.constant 0 : index
    %194 = vector.load %arg4[%c4_191, %c0_192, %c0_193] : memref<5x128x256xf32, #tpu.memory_space<vmem>>, vector<1x128x256xf32>
    %195 = vector.shape_cast %194 : vector<1x128x256xf32> to vector<128x256xf32>
    %cst_194 = arith.constant dense<0.000000e+00> : vector<21x256xf32>
    %196 = tpu.matmul %193, %195, %cst_194 {dimension_numbers = #tpu.dot_dimension_numbers<[1], [0], [0], [1], [0, 0, 1, 1], [], []>} : vector<21x128xf32>, vector<128x256xf32>, vector<21x256xf32> -> vector<21x256xf32>
    %197 = arith.addf %191, %196 : vector<21x256xf32>
    %198 = arith.addf %197, %5 : vector<21x256xf32>
    %cst_195 = arith.constant 0.000000e+00 : f32
    %199 = vector.broadcast %cst_195 : f32 to vector<21x256xf32>
    %200 = arith.maximumf %198, %199 : vector<21x256xf32>
    %cst_196 = arith.constant 0.000000e+00 : f32
    %201 = vector.broadcast %cst_196 : f32 to vector<21x256xf32>
    %c1_197 = arith.constant 1 : index
    %c0_198 = arith.constant 0 : index
    %c0_199 = arith.constant 0 : index
    %202 = vector.load %arg10[%c1_197, %c0_198, %c0_199] : memref<2x24x128xf32, #tpu.memory_space<vmem>>, vector<1x21x128xf32>
    %203 = vector.shape_cast %202 : vector<1x21x128xf32> to vector<21x128xf32>
    %c0_200 = arith.constant 0 : index
    %c0_201 = arith.constant 0 : index
    %c0_202 = arith.constant 0 : index
    %204 = vector.load %arg4[%c0_200, %c0_201, %c0_202] : memref<5x128x256xf32, #tpu.memory_space<vmem>>, vector<1x128x256xf32>
    %205 = vector.shape_cast %204 : vector<1x128x256xf32> to vector<128x256xf32>
    %cst_203 = arith.constant dense<0.000000e+00> : vector<21x256xf32>
    %206 = tpu.matmul %203, %205, %cst_203 {dimension_numbers = #tpu.dot_dimension_numbers<[1], [0], [0], [1], [0, 0, 1, 1], [], []>} : vector<21x128xf32>, vector<128x256xf32>, vector<21x256xf32> -> vector<21x256xf32>
    %207 = arith.addf %201, %206 : vector<21x256xf32>
    %c0_204 = arith.constant 0 : index
    %c1_205 = arith.constant 1 : index
    %c0_206 = arith.constant 0 : index
    %208 = vector.load %arg10[%c0_204, %c1_205, %c0_206] : memref<2x24x128xf32, #tpu.memory_space<vmem>>, vector<1x21x128xf32>
    %209 = vector.shape_cast %208 : vector<1x21x128xf32> to vector<21x128xf32>
    %c1_207 = arith.constant 1 : index
    %c0_208 = arith.constant 0 : index
    %c0_209 = arith.constant 0 : index
    %210 = vector.load %arg4[%c1_207, %c0_208, %c0_209] : memref<5x128x256xf32, #tpu.memory_space<vmem>>, vector<1x128x256xf32>
    %211 = vector.shape_cast %210 : vector<1x128x256xf32> to vector<128x256xf32>
    %cst_210 = arith.constant dense<0.000000e+00> : vector<21x256xf32>
    %212 = tpu.matmul %209, %211, %cst_210 {dimension_numbers = #tpu.dot_dimension_numbers<[1], [0], [0], [1], [0, 0, 1, 1], [], []>} : vector<21x128xf32>, vector<128x256xf32>, vector<21x256xf32> -> vector<21x256xf32>
    %213 = arith.addf %207, %212 : vector<21x256xf32>
    %c1_211 = arith.constant 1 : index
    %c1_212 = arith.constant 1 : index
    %c0_213 = arith.constant 0 : index
    %214 = vector.load %arg10[%c1_211, %c1_212, %c0_213] : memref<2x24x128xf32, #tpu.memory_space<vmem>>, vector<1x21x128xf32>
    %215 = vector.shape_cast %214 : vector<1x21x128xf32> to vector<21x128xf32>
    %c2_214 = arith.constant 2 : index
    %c0_215 = arith.constant 0 : index
    %c0_216 = arith.constant 0 : index
    %216 = vector.load %arg4[%c2_214, %c0_215, %c0_216] : memref<5x128x256xf32, #tpu.memory_space<vmem>>, vector<1x128x256xf32>
    %217 = vector.shape_cast %216 : vector<1x128x256xf32> to vector<128x256xf32>
    %cst_217 = arith.constant dense<0.000000e+00> : vector<21x256xf32>
    %218 = tpu.matmul %215, %217, %cst_217 {dimension_numbers = #tpu.dot_dimension_numbers<[1], [0], [0], [1], [0, 0, 1, 1], [], []>} : vector<21x128xf32>, vector<128x256xf32>, vector<21x256xf32> -> vector<21x256xf32>
    %219 = arith.addf %213, %218 : vector<21x256xf32>
    %c0_218 = arith.constant 0 : index
    %c2_219 = arith.constant 2 : index
    %c0_220 = arith.constant 0 : index
    %220 = vector.load %arg10[%c0_218, %c2_219, %c0_220] : memref<2x24x128xf32, #tpu.memory_space<vmem>>, vector<1x21x128xf32>
    %221 = vector.shape_cast %220 : vector<1x21x128xf32> to vector<21x128xf32>
    %c3_221 = arith.constant 3 : index
    %c0_222 = arith.constant 0 : index
    %c0_223 = arith.constant 0 : index
    %222 = vector.load %arg4[%c3_221, %c0_222, %c0_223] : memref<5x128x256xf32, #tpu.memory_space<vmem>>, vector<1x128x256xf32>
    %223 = vector.shape_cast %222 : vector<1x128x256xf32> to vector<128x256xf32>
    %cst_224 = arith.constant dense<0.000000e+00> : vector<21x256xf32>
    %224 = tpu.matmul %221, %223, %cst_224 {dimension_numbers = #tpu.dot_dimension_numbers<[1], [0], [0], [1], [0, 0, 1, 1], [], []>} : vector<21x128xf32>, vector<128x256xf32>, vector<21x256xf32> -> vector<21x256xf32>
    %225 = arith.addf %219, %224 : vector<21x256xf32>
    %c1_225 = arith.constant 1 : index
    %c2_226 = arith.constant 2 : index
    %c0_227 = arith.constant 0 : index
    %226 = vector.load %arg10[%c1_225, %c2_226, %c0_227] : memref<2x24x128xf32, #tpu.memory_space<vmem>>, vector<1x21x128xf32>
    %227 = vector.shape_cast %226 : vector<1x21x128xf32> to vector<21x128xf32>
    %c4_228 = arith.constant 4 : index
    %c0_229 = arith.constant 0 : index
    %c0_230 = arith.constant 0 : index
    %228 = vector.load %arg4[%c4_228, %c0_229, %c0_230] : memref<5x128x256xf32, #tpu.memory_space<vmem>>, vector<1x128x256xf32>
    %229 = vector.shape_cast %228 : vector<1x128x256xf32> to vector<128x256xf32>
    %cst_231 = arith.constant dense<0.000000e+00> : vector<21x256xf32>
    %230 = tpu.matmul %227, %229, %cst_231 {dimension_numbers = #tpu.dot_dimension_numbers<[1], [0], [0], [1], [0, 0, 1, 1], [], []>} : vector<21x128xf32>, vector<128x256xf32>, vector<21x256xf32> -> vector<21x256xf32>
    %231 = arith.addf %225, %230 : vector<21x256xf32>
    %232 = arith.addf %231, %5 : vector<21x256xf32>
    %cst_232 = arith.constant 0.000000e+00 : f32
    %233 = vector.broadcast %cst_232 : f32 to vector<21x256xf32>
    %234 = arith.maximumf %232, %233 : vector<21x256xf32>
    %235 = arith.maximumf %200, %234 : vector<21x256xf32>
    %236 = vector.extract_strided_slice %235 {offsets = [0, 0], sizes = [21, 128], strides = [1, 1]} : vector<21x256xf32> to vector<21x128xf32>
    %237 = vector.extract_strided_slice %235 {offsets = [0, 128], sizes = [21, 128], strides = [1, 1]} : vector<21x256xf32> to vector<21x128xf32>
    %238 = arith.maximumf %236, %237 : vector<21x128xf32>
    %239 = tpu.concatenate %238, %238, %238, %238 in 1 : vector<21x128xf32>, vector<21x128xf32>, vector<21x128xf32>, vector<21x128xf32> -> vector<21x512xf32>
    %240 = arith.mulf %239, %6 : vector<21x512xf32>
    %cst_233 = arith.constant dense<0.000000e+00> : vector<512xf32>
    %241 = vector.multi_reduction <add>, %240, %cst_233 [0] : vector<21x512xf32> to vector<512xf32>
    %242 = vector.shape_cast %241 : vector<512xf32> to vector<1x512xf32>
    %cst_234 = arith.constant dense<0.000000e+00> : vector<1x4xf32>
    %243 = tpu.matmul %242, %7, %cst_234 {dimension_numbers = #tpu.dot_dimension_numbers<[1], [0], [0], [1], [0, 0, 1, 1], [], []>} : vector<1x512xf32>, vector<512x4xf32>, vector<1x4xf32> -> vector<1x4xf32>
    %244 = arith.addf %243, %8 : vector<1x4xf32>
    %c0_235 = arith.constant 0 : index
    %c0_236 = arith.constant 0 : index
    %c0_237 = arith.constant 0 : index
    %245 = vector.load %arg9[%c0_235, %c0_236, %c0_237] : memref<1x1x4xf32, #tpu.memory_space<vmem>>, vector<1x1x4xf32>
    %246 = vector.shape_cast %245 : vector<1x1x4xf32> to vector<1x4xf32>
    %247 = vector.shape_cast %244 : vector<1x4xf32> to vector<1x1x4xf32>
    tpu.vector_store %arg9[%c0_235, %c0_236, %c0_237], %247 {strides = array<i32>} : memref<1x1x4xf32, #tpu.memory_space<vmem>>, vector<1x1x4xf32>,
    return
  }
  func.func @transform_0(%arg0: i32) -> (i32, i32, i32) {
    %c0_i32 = arith.constant 0 : i32
    %c0_i32_0 = arith.constant 0 : i32
    %c0_i32_1 = arith.constant 0 : i32
    return %arg0, %c0_i32, %c0_i32_0 : i32, i32, i32
  }
  func.func @transform_1(%arg0: i32) -> (i32, i32, i32) {
    %c0_i32 = arith.constant 0 : i32
    %c0_i32_0 = arith.constant 0 : i32
    %c0_i32_1 = arith.constant 0 : i32
    %c0_i32_2 = arith.constant 0 : i32
    return %c0_i32, %c0_i32_0, %c0_i32_1 : i32, i32, i32
  }
  func.func @transform_2(%arg0: i32) -> (i32, i32) {
    %c0_i32 = arith.constant 0 : i32
    %c0_i32_0 = arith.constant 0 : i32
    %c0_i32_1 = arith.constant 0 : i32
    return %c0_i32, %c0_i32_0 : i32, i32
  }
  func.func @transform_3(%arg0: i32) -> (i32, i32, i32) {
    %c0_i32 = arith.constant 0 : i32
    %c0_i32_0 = arith.constant 0 : i32
    %c0_i32_1 = arith.constant 0 : i32
    %c0_i32_2 = arith.constant 0 : i32
    return %c0_i32, %c0_i32_0, %c0_i32_1 : i32, i32, i32
  }
  func.func @transform_4(%arg0: i32) -> (i32, i32) {
    %c0_i32 = arith.constant 0 : i32
    %c0_i32_0 = arith.constant 0 : i32
    %c0_i32_1 = arith.constant 0 : i32
    return %c0_i32, %c0_i32_0 : i32, i32
  }
  func.func @transform_5(%arg0: i32) -> (i32, i32) {
    %c0_i32 = arith.constant 0 : i32
    %c0_i32_0 = arith.constant 0 : i32
    %c0_i32_1 = arith.constant 0 : i32
    return %c0_i32, %c0_i32_0 : i32, i32
  }
  func.func @transform_6(%arg0: i32) -> (i32, i32) {
    %c0_i32 = arith.constant 0 : i32
    %c0_i32_0 = arith.constant 0 : i32
    %c0_i32_1 = arith.constant 0 : i32
    return %c0_i32, %c0_i32_0 : i32, i32
  }
  func.func @transform_7(%arg0: i32) -> (i32, i32) {
    %c0_i32 = arith.constant 0 : i32
    %c0_i32_0 = arith.constant 0 : i32
    %c0_i32_1 = arith.constant 0 : i32
    return %c0_i32, %c0_i32_0 : i32, i32
  }
  func.func @transform_8(%arg0: i32) -> (i32, i32, i32) {
    %c0_i32 = arith.constant 0 : i32
    %c0_i32_0 = arith.constant 0 : i32
    %c0_i32_1 = arith.constant 0 : i32
    return %arg0, %c0_i32, %c0_i32_0 : i32, i32, i32
  }
}

</mosaic_0001>

<llo_original>
// kernel: q_pixel_network_forward.1
$region0: #{q_pixel_network_forward.1}
  #allocation0 [shape = 'u32[]', space=smem, size = 0x4, offset = 0x4, fixed_abs, tag = 'smem constant byte address 0x4 - core index']
  #allocation1 [shape = 'u32[144,128]{1,0:T(1,128)}', space=vmem, size = 0x12000, scoped, tag = 'internal scratch']
  #allocation2 [shape = 'f32[2,24,128]{2,1,0:T(8,128)}', space=vmem, size = 0x6000, scoped, tag = 'scratch operand']
  %s0 = inlined_call_operand.vmem [shape: f32[2,88,84], index: 0, kind: input, shape index: {}]
  %s1 = inlined_call_operand.vmem [shape: f32[5,84,256], index: 1, kind: input, shape index: {}]
  %s2 = inlined_call_operand.vmem [shape: f32[1,256], index: 2, kind: input, shape index: {}]
  %s3 = inlined_call_operand.vmem [shape: f32[5,128,256], index: 3, kind: input, shape index: {}]
  %s4 = inlined_call_operand.vmem [shape: f32[1,256], index: 4, kind: input, shape index: {}]
  %s5 = inlined_call_operand.vmem [shape: f32[21,512], index: 5, kind: input, shape index: {}]
  %s6 = inlined_call_operand.vmem [shape: f32[512,4], index: 6, kind: input, shape index: {}]
  %s7 = inlined_call_operand.vmem [shape: f32[1,4], index: 7, kind: input, shape index: {}]
  %s8 = inlined_call_operand.hbm [shape: f32[2,1,4], index: 8, kind: output, shape index: {}]
  %s9 = sld [smem:[#allocation0]]
  $region65: #{q_pixel_network_forward.1} parent=0
    _
  %s11 = ssub.s32 1, %s9
  %s12 = scalar_select 0, %s11, %s9
  $region1: #{q_pixel_network_forward.1} parent=0
    #allocation3 [shape = 'u8[1024]{0}', space=vmem, size = 0x400, scoped, tag = 'output window, operand 0']
    #allocation4 [shape = 's32[2]{0}', space=sflag, size = 0x8, scoped, tag = 'scoped memory for q_pixel_network_forward.1']
    %13 = vsyncpa [#allocation4], 0
    %s14 = scalar_lea.sflag [#allocation4], 1
    %15 = vsyncpa %s14, 0
    loop: start=0, step=1, limit=4
    $region2: #{q_pixel_network_forward.1} parent=1 // loop_pre_header
      _
    $region3: #{q_pixel_network_forward.1} parent=1 // loop_header
      %s17 = sphi 0, %s21
      %p18 = scmp.ge.s32.totalorder %s17, 4
      %s27 = sphi 0, %s29
      %s30 = sphi 0, %s27
      %s31 = sphi 0, %s30
      %s47 = sphi 0, %s31
      %s51 = sphi 0, %s51
      %s53 = sphi 0, %s51
      %s54 = sphi 0, %s53
      %s68 = sphi 0, %s54
      %s72 = sphi 0, %s72
      %s74 = sphi 0, %s72
      %s75 = sphi 0, %s74
      %s89 = sphi 0, %s75
      %s93 = sphi 0, %s93
      %s95 = sphi 0, %s93
      %s96 = sphi 0, %s95
      %s110 = sphi 0, %s96
      %s114 = sphi 0, %s114
      %s116 = sphi 0, %s114
      %s117 = sphi 0, %s116
      %s131 = sphi 0, %s117
      %s135 = sphi 0, %s135
      %s137 = sphi 0, %s135
      %s138 = sphi 0, %s137
      %s152 = sphi 0, %s138
      %s156 = sphi 0, %s156
      %s158 = sphi 0, %s156
      %s159 = sphi 0, %s158
      %s173 = sphi 0, %s159
      %s177 = sphi 0, %s177
      %s179 = sphi 0, %s177
      %s180 = sphi 0, %s179
      %s194 = sphi 0, %s180
      %s200 = sphi 0, %s202
      %s203 = sphi 0, %s200
      %s204 = sphi 0, %s203
      %s220 = sphi 0, %s204
    $region4: #{q_pixel_network_forward.1} parent=1 // loop_header_branch
      %20 = sbr.rel (%p18) target = $region8
    $region5: #{q_pixel_network_forward.1} parent=1 // loop_body
      %s22 = ssub.s32 %s17, 1
      %s23 = ssub.s32 %s17, 2
      %s24 = sadd.s32 %s17, 1
      %s25 = ssub.s32 %s17, %s24
      %p26 = scmp.eq.s32.totalorder %s25, 0
      %s28 = sadd.s32 %s27, 1
      %s29 = scalar_select %p26, %s27, %s28
      %p32 = pneg %p26
      %p33 = scmp.eq.s32.totalorder %s17, 1
      %p34 = por %p32, %p33
      %p35 = scmp.ne.s32.totalorder %s27, %s30
      %p36 = scmp.eq.s32.totalorder %s17, 0
      %p37 = por %p35, %p36
      %p38 = scmp.ne.s32.totalorder %s27, %s30
      %p39 = scmp.eq.s32.totalorder %s22, 1
      %p40 = por %p38, %p39
      %p41 = scmp.ne.s32.totalorder %s30, %s31
      %p42 = scmp.eq.s32.totalorder %s22, 0
      %p43 = por %p41, %p42
      %p44 = scmp.ne.s32.totalorder %s30, %s31
      %p45 = scmp.eq.s32.totalorder %s23, 1
      %p46 = por %p44, %p45
      %p48 = scmp.ne.s32.totalorder %s31, %s47
      %p49 = scmp.eq.s32.totalorder %s23, 0
      %p50 = por %p48, %p49
      %s52 = sadd.s32 %s51, 1
      %p55 = scmp.eq.s32.totalorder %s17, 1
      %p56 = scmp.ne.s32.totalorder %s51, %s53
      %p57 = scmp.eq.s32.totalorder %s17, 0
      %p58 = por %p56, %p57
      %p59 = scmp.ne.s32.totalorder %s51, %s53
      %p60 = scmp.eq.s32.totalorder %s22, 1
      %p61 = por %p59, %p60
      %p62 = scmp.ne.s32.totalorder %s53, %s54
      %p63 = scmp.eq.s32.totalorder %s22, 0
      %p64 = por %p62, %p63
      %p65 = scmp.ne.s32.totalorder %s53, %s54
      %p66 = scmp.eq.s32.totalorder %s23, 1
      %p67 = por %p65, %p66
      %p69 = scmp.ne.s32.totalorder %s54, %s68
      %p70 = scmp.eq.s32.totalorder %s23, 0
      %p71 = por %p69, %p70
      %s73 = sadd.s32 %s72, 1
      %p76 = scmp.eq.s32.totalorder %s17, 1
      %p77 = scmp.ne.s32.totalorder %s72, %s74
      %p78 = scmp.eq.s32.totalorder %s17, 0
      %p79 = por %p77, %p78
      %p80 = scmp.ne.s32.totalorder %s72, %s74
      %p81 = scmp.eq.s32.totalorder %s22, 1
      %p82 = por %p80, %p81
      %p83 = scmp.ne.s32.totalorder %s74, %s75
      %p84 = scmp.eq.s32.totalorder %s22, 0
      %p85 = por %p83, %p84
      %p86 = scmp.ne.s32.totalorder %s74, %s75
      %p87 = scmp.eq.s32.totalorder %s23, 1
      %p88 = por %p86, %p87
      %p90 = scmp.ne.s32.totalorder %s75, %s89
      %p91 = scmp.eq.s32.totalorder %s23, 0
      %p92 = por %p90, %p91
      %s94 = sadd.s32 %s93, 1
      %p97 = scmp.eq.s32.totalorder %s17, 1
      %p98 = scmp.ne.s32.totalorder %s93, %s95
      %p99 = scmp.eq.s32.totalorder %s17, 0
      %p100 = por %p98, %p99
      %p101 = scmp.ne.s32.totalorder %s93, %s95
      %p102 = scmp.eq.s32.totalorder %s22, 1
      %p103 = por %p101, %p102
      %p104 = scmp.ne.s32.totalorder %s95, %s96
      %p105 = scmp.eq.s32.totalorder %s22, 0
      %p106 = por %p104, %p105
      %p107 = scmp.ne.s32.totalorder %s95, %s96
      %p108 = scmp.eq.s32.totalorder %s23, 1
      %p109 = por %p107, %p108
      %p111 = scmp.ne.s32.totalorder %s96, %s110
      %p112 = scmp.eq.s32.totalorder %s23, 0
      %p113 = por %p111, %p112
      %s115 = sadd.s32 %s114, 1
      %p118 = scmp.eq.s32.totalorder %s17, 1
      %p119 = scmp.ne.s32.totalorder %s114, %s116
      %p120 = scmp.eq.s32.totalorder %s17, 0
      %p121 = por %p119, %p120
      %p122 = scmp.ne.s32.totalorder %s114, %s116
      %p123 = scmp.eq.s32.totalorder %s22, 1
      %p124 = por %p122, %p123
      %p125 = scmp.ne.s32.totalorder %s116, %s117
      %p126 = scmp.eq.s32.totalorder %s22, 0
      %p127 = por %p125, %p126
      %p128 = scmp.ne.s32.totalorder %s116, %s117
      %p129 = scmp.eq.s32.totalorder %s23, 1
      %p130 = por %p128, %p129
      %p132 = scmp.ne.s32.totalorder %s117, %s131
      %p133 = scmp.eq.s32.totalorder %s23, 0
      %p134 = por %p132, %p133
      %s136 = sadd.s32 %s135, 1
      %p139 = scmp.eq.s32.totalorder %s17, 1
      %p140 = scmp.ne.s32.totalorder %s135, %s137
      %p141 = scmp.eq.s32.totalorder %s17, 0
      %p142 = por %p140, %p141
      %p143 = scmp.ne.s32.totalorder %s135, %s137
      %p144 = scmp.eq.s32.totalorder %s22, 1
      %p145 = por %p143, %p144
      %p146 = scmp.ne.s32.totalorder %s137, %s138
      %p147 = scmp.eq.s32.totalorder %s22, 0
      %p148 = por %p146, %p147
      %p149 = scmp.ne.s32.totalorder %s137, %s138
      %p150 = scmp.eq.s32.totalorder %s23, 1
      %p151 = por %p149, %p150
      %p153 = scmp.ne.s32.totalorder %s138, %s152
      %p154 = scmp.eq.s32.totalorder %s23, 0
      %p155 = por %p153, %p154
      %s157 = sadd.s32 %s156, 1
      %p160 = scmp.eq.s32.totalorder %s17, 1
      %p161 = scmp.ne.s32.totalorder %s156, %s158
      %p162 = scmp.eq.s32.totalorder %s17, 0
      %p163 = por %p161, %p162
      %p164 = scmp.ne.s32.totalorder %s156, %s158
      %p165 = scmp.eq.s32.totalorder %s22, 1
      %p166 = por %p164, %p165
      %p167 = scmp.ne.s32.totalorder %s158, %s159
      %p168 = scmp.eq.s32.totalorder %s22, 0
      %p169 = por %p167, %p168
      %p170 = scmp.ne.s32.totalorder %s158, %s159
      %p171 = scmp.eq.s32.totalorder %s23, 1
      %p172 = por %p170, %p171
      %p174 = scmp.ne.s32.totalorder %s159, %s173
      %p175 = scmp.eq.s32.totalorder %s23, 0
      %p176 = por %p174, %p175
      %s178 = sadd.s32 %s177, 1
      %p181 = scmp.eq.s32.totalorder %s17, 1
      %p182 = scmp.ne.s32.totalorder %s177, %s179
      %p183 = scmp.eq.s32.totalorder %s17, 0
      %p184 = por %p182, %p183
      %p185 = scmp.ne.s32.totalorder %s177, %s179
      %p186 = scmp.eq.s32.totalorder %s22, 1
      %p187 = por %p185, %p186
      %p188 = scmp.ne.s32.totalorder %s179, %s180
      %p189 = scmp.eq.s32.totalorder %s22, 0
      %p190 = por %p188, %p189
      %p191 = scmp.ne.s32.totalorder %s179, %s180
      %p192 = scmp.eq.s32.totalorder %s23, 1
      %p193 = por %p191, %p192
      %p195 = scmp.ne.s32.totalorder %s180, %s194
      %p196 = scmp.eq.s32.totalorder %s23, 0
      %p197 = por %p195, %p196
      %s198 = ssub.s32 %s17, %s24
      %p199 = scmp.eq.s32.totalorder %s198, 0
      %s201 = sadd.s32 %s200, 1
      %s202 = scalar_select %p199, %s200, %s201
      %p205 = pneg %p199
      %p206 = scmp.eq.s32.totalorder %s17, 1
      %p207 = por %p205, %p206
      %p208 = scmp.ne.s32.totalorder %s200, %s203
      %p209 = scmp.eq.s32.totalorder %s17, 0
      %p210 = por %p208, %p209
      %p211 = scmp.ne.s32.totalorder %s200, %s203
      %p212 = scmp.eq.s32.totalorder %s22, 1
      %p213 = por %p211, %p212
      %p214 = scmp.ne.s32.totalorder %s203, %s204
      %p215 = scmp.eq.s32.totalorder %s22, 0
      %p216 = por %p214, %p215
      %p217 = scmp.ne.s32.totalorder %s203, %s204
      %p218 = scmp.eq.s32.totalorder %s23, 1
      %p219 = por %p217, %p218
      %p221 = scmp.ne.s32.totalorder %s204, %s220
      %p222 = scmp.eq.s32.totalorder %s23, 0
      %p223 = por %p221, %p222
      %p224 = scmp.le.s32.totalorder 1, %s17
      %p225 = scmp.lt.s32.totalorder %s17, 3
      %p226 = pnand %p224, %p225
      %p227 = pneg %p226
      // Predicated region
      $region9: #{q_pixel_network_forward.1} parent=5 // pred_check
        _
      $region10: #{q_pixel_network_forward.1} parent=5 // pred_check_branch
        %229 = sbr.rel (%p226) target = $region12
      $region11: #{q_pixel_network_forward.1} parent=5 // pred_region
        %s230 = ssub.s32 %s17, 1
        // Predicated region
        $region13: #{q_pixel_network_forward.1} parent=11 // pred_check
          %p231 = pneg %p64
        $region14: #{q_pixel_network_forward.1} parent=11 // pred_check_branch
          %233 = sbr.rel (%p231) target = $region16
        $region15: #{q_pixel_network_forward.1} parent=11 // pred_region
          _
        $region16: #{q_pixel_network_forward.1} parent=11 // pred_fallthru
          _
        // Predicated region
        $region17: #{q_pixel_network_forward.1} parent=11 // pred_check
          %p234 = pneg %p85
        $region18: #{q_pixel_network_forward.1} parent=11 // pred_check_branch
          %236 = sbr.rel (%p234) target = $region20
        $region19: #{q_pixel_network_forward.1} parent=11 // pred_region
          _
        $region20: #{q_pixel_network_forward.1} parent=11 // pred_fallthru
          _
        // Predicated region
        $region21: #{q_pixel_network_forward.1} parent=11 // pred_check
          %p237 = pneg %p106
        $region22: #{q_pixel_network_forward.1} parent=11 // pred_check_branch
          %239 = sbr.rel (%p237) target = $region24
        $region23: #{q_pixel_network_forward.1} parent=11 // pred_region
          _
        $region24: #{q_pixel_network_forward.1} parent=11 // pred_fallthru
          _
        // Predicated region
        $region25: #{q_pixel_network_forward.1} parent=11 // pred_check
          %p240 = pneg %p127
        $region26: #{q_pixel_network_forward.1} parent=11 // pred_check_branch
          %242 = sbr.rel (%p240) target = $region28
        $region27: #{q_pixel_network_forward.1} parent=11 // pred_region
          _
        $region28: #{q_pixel_network_forward.1} parent=11 // pred_fallthru
          _
        // Predicated region
        $region29: #{q_pixel_network_forward.1} parent=11 // pred_check
          %p243 = pneg %p148
        $region30: #{q_pixel_network_forward.1} parent=11 // pred_check_branch
          %245 = sbr.rel (%p243) target = $region32
        $region31: #{q_pixel_network_forward.1} parent=11 // pred_region
          _
        $region32: #{q_pixel_network_forward.1} parent=11 // pred_fallthru
          _
        // Predicated region
        $region33: #{q_pixel_network_forward.1} parent=11 // pred_check
          %p246 = pneg %p169
        $region34: #{q_pixel_network_forward.1} parent=11 // pred_check_branch
          %248 = sbr.rel (%p246) target = $region36
        $region35: #{q_pixel_network_forward.1} parent=11 // pred_region
          _
        $region36: #{q_pixel_network_forward.1} parent=11 // pred_fallthru
          _
        // Predicated region
        $region37: #{q_pixel_network_forward.1} parent=11 // pred_check
          %p249 = pneg %p190
        $region38: #{q_pixel_network_forward.1} parent=11 // pred_check_branch
          %251 = sbr.rel (%p249) target = $region40
        $region39: #{q_pixel_network_forward.1} parent=11 // pred_region
          _
        $region40: #{q_pixel_network_forward.1} parent=11 // pred_fallthru
          _
      $region12: #{q_pixel_network_forward.1} parent=5 // pred_fallthru
        _
      %p252 = scmp.lt.s32.totalorder %s17, 2
      // Predicated region
      $region41: #{q_pixel_network_forward.1} parent=5 // pred_check
        %p253 = pneg %p252
      $region42: #{q_pixel_network_forward.1} parent=5 // pred_check_branch
        %255 = sbr.rel (%p253) target = $region44
      $region43: #{q_pixel_network_forward.1} parent=5 // pred_region
        // Predicated region
        $region45: #{q_pixel_network_forward.1} parent=43 // pred_check
          %p256 = pneg %p37
        $region46: #{q_pixel_network_forward.1} parent=43 // pred_check_branch
          %258 = sbr.rel (%p256) target = $region48
        $region47: #{q_pixel_network_forward.1} parent=43 // pred_region
          %p259 = scmp.lt.s32.totalorder %s17, 1
          %s260 = scalar_select %p259, %s17, 1
          %s261 = smul.addr %s260, 11
          %s262 = smul.addr %s261, 8
          %s263 = scalar_lea.vmem %s0, %s262
        $region48: #{q_pixel_network_forward.1} parent=43 // pred_fallthru
          _
      $region44: #{q_pixel_network_forward.1} parent=5 // pred_fallthru
        _
      %p264 = scmp.le.s32.totalorder 1, %s17
      %p265 = scmp.lt.s32.totalorder %s17, 3
      %p266 = pnand %p264, %p265
      %p267 = pneg %p266
      // Predicated region
      $region49: #{q_pixel_network_forward.1} parent=5 // pred_check
        _
      $region50: #{q_pixel_network_forward.1} parent=5 // pred_check_branch
        %269 = sbr.rel (%p266) target = $region52
      $region51: #{q_pixel_network_forward.1} parent=5 // pred_region
        %s270 = ssub.s32 %s17, 1
        %p271 = scmp.lt.s32.totalorder %s22, 1
        %s272 = scalar_select %p271, %s22, 1
        %s273 = smul.addr %s272, 11
        %s274 = smul.addr %s273, 8
        %s275 = scalar_lea.vmem %s0, %s274
        %p276 = pneg %p43
        %p277 = pneg %p40
        %p278 = pneg %p64
        %p279 = pneg %p61
        %p280 = pneg %p85
        %p281 = pneg %p82
        %p282 = pneg %p106
        %p283 = pneg %p103
        %p284 = pneg %p127
        %p285 = pneg %p124
        %p286 = pneg %p148
        %p287 = pneg %p145
        %p288 = pneg %p169
        %p289 = pneg %p166
        %p290 = pneg %p190
        %p291 = pneg %p187
        %p292 = pneg %p216
        %p293 = pneg %p213
        %s294 = sand.u32 %s203, 1
        %s295 = scalar_lea.sflag [#allocation4], %s294
        %s296 = sand.u32 %s203, 1
        %s297 = scalar_lea.vmem [#allocation3], %s296
        %p298 = scmp.lt.s32.totalorder %s22, 1
        %s299 = scalar_select %p298, %s22, 1
        %s300 = smul.addr %s299, 11
        %s301 = smul.addr %s300, 8
        %s302 = scalar_lea.vmem %s0, %s301
        %v303 = vld [vmem:[%s2] sm:$0x3]
        %v305 = vlaneseq
        %v306 = vshrl.u32 %v305, 7
        %v307 = vsub.s32 0, %v306
        %v308 = vrot.slane %v303, %v307
        %v309 = vlaneseq
        %v310 = vshrl.u32 %v309, 7
        %v311 = vsub.s32 1, %v310
        %v312 = vrot.slane %v303, %v311
        %v315 = vld [vmem:[%s4] sm:$0x3]
        %v317 = vlaneseq
        %v318 = vshrl.u32 %v317, 7
        %v319 = vsub.s32 0, %v318
        %v320 = vrot.slane %v315, %v319
        %v321 = vlaneseq
        %v322 = vshrl.u32 %v321, 7
        %v323 = vsub.s32 1, %v322
        %v324 = vrot.slane %v315, %v323
        %v327 = vld [vmem:[%s5] sm:$0xff]
        %v328 = vld [vmem:[%s5 + $0x8] sm:$0xff]
        %v329 = vld [vmem:[%s5 + $0x10] sm:$0xff]
        %v330 = vld [vmem:[%s5 + $0x18] sm:$0xff]
        %v331 = vld [vmem:[%s5 + $0x20] sm:$0xff]
        %v332 = vld [vmem:[%s5 + $0x28] sm:$0xff]
        %v333 = vld [vmem:[%s5 + $0x30] sm:$0xff]
        %v334 = vld [vmem:[%s5 + $0x38] sm:$0xff]
        %v335 = vld [vmem:[%s5 + $0x40] sm:$0x1f]
        %v336 = vld [vmem:[%s5 + $0x48] sm:$0x1f]
        %v337 = vld [vmem:[%s5 + $0x50] sm:$0x1f]
        %v338 = vld [vmem:[%s5 + $0x58] sm:$0x1f]
        %v339 = vld [vmem:[%s6] sm:$0xff]
        %v340 = vld [vmem:[%s6 + $0x8] sm:$0xff]
        %v341 = vld [vmem:[%s6 + $0x10] sm:$0xff]
        %v342 = vld [vmem:[%s6 + $0x18] sm:$0xff]
        %v343 = vld [vmem:[%s6 + $0x20] sm:$0xff]
        %v344 = vld [vmem:[%s6 + $0x28] sm:$0xff]
        %v345 = vld [vmem:[%s6 + $0x30] sm:$0xff]
        %v346 = vld [vmem:[%s6 + $0x38] sm:$0xff]
        %v347 = vld [vmem:[%s6 + $0x40] sm:$0xff]
        %v348 = vld [vmem:[%s6 + $0x48] sm:$0xff]
        %v349 = vld [vmem:[%s6 + $0x50] sm:$0xff]
        %v350 = vld [vmem:[%s6 + $0x58] sm:$0xff]
        %v351 = vld [vmem:[%s6 + $0x60] sm:$0xff]
        %v352 = vld [vmem:[%s6 + $0x68] sm:$0xff]
        %v353 = vld [vmem:[%s6 + $0x70] sm:$0xff]
        %v354 = vld [vmem:[%s6 + $0x78] sm:$0xff]
        %v355 = vld [vmem:[%s6 + $0x80] sm:$0xff]
        %v356 = vld [vmem:[%s6 + $0x88] sm:$0xff]
        %v357 = vld [vmem:[%s6 + $0x90] sm:$0xff]
        %v358 = vld [vmem:[%s6 + $0x98] sm:$0xff]
        %v359 = vld [vmem:[%s6 + $0xa0] sm:$0xff]
        %v360 = vld [vmem:[%s6 + $0xa8] sm:$0xff]
        %v361 = vld [vmem:[%s6 + $0xb0] sm:$0xff]
        %v362 = vld [vmem:[%s6 + $0xb8] sm:$0xff]
        %v363 = vld [vmem:[%s6 + $0xc0] sm:$0xff]
        %v364 = vld [vmem:[%s6 + $0xc8] sm:$0xff]
        %v365 = vld [vmem:[%s6 + $0xd0] sm:$0xff]
        %v366 = vld [vmem:[%s6 + $0xd8] sm:$0xff]
        %v367 = vld [vmem:[%s6 + $0xe0] sm:$0xff]
        %v368 = vld [vmem:[%s6 + $0xe8] sm:$0xff]
        %v369 = vld [vmem:[%s6 + $0xf0] sm:$0xff]
        %v370 = vld [vmem:[%s6 + $0xf8] sm:$0xff]
        %v371 = vld [vmem:[%s6 + $0x100] sm:$0xff]
        %v372 = vld [vmem:[%s6 + $0x108] sm:$0xff]
        %v373 = vld [vmem:[%s6 + $0x110] sm:$0xff]
        %v374 = vld [vmem:[%s6 + $0x118] sm:$0xff]
        %v375 = vld [vmem:[%s6 + $0x120] sm:$0xff]
        %v376 = vld [vmem:[%s6 + $0x128] sm:$0xff]
        %v377 = vld [vmem:[%s6 + $0x130] sm:$0xff]
        %v378 = vld [vmem:[%s6 + $0x138] sm:$0xff]
        %v379 = vld [vmem:[%s6 + $0x140] sm:$0xff]
        %v380 = vld [vmem:[%s6 + $0x148] sm:$0xff]
        %v381 = vld [vmem:[%s6 + $0x150] sm:$0xff]
        %v382 = vld [vmem:[%s6 + $0x158] sm:$0xff]
        %v383 = vld [vmem:[%s6 + $0x160] sm:$0xff]
        %v384 = vld [vmem:[%s6 + $0x168] sm:$0xff]
        %v385 = vld [vmem:[%s6 + $0x170] sm:$0xff]
        %v386 = vld [vmem:[%s6 + $0x178] sm:$0xff]
        %v387 = vld [vmem:[%s6 + $0x180] sm:$0xff]
        %v388 = vld [vmem:[%s6 + $0x188] sm:$0xff]
        %v389 = vld [vmem:[%s6 + $0x190] sm:$0xff]
        %v390 = vld [vmem:[%s6 + $0x198] sm:$0xff]
        %v391 = vld [vmem:[%s6 + $0x1a0] sm:$0xff]
        %v392 = vld [vmem:[%s6 + $0x1a8] sm:$0xff]
        %v393 = vld [vmem:[%s6 + $0x1b0] sm:$0xff]
        %v394 = vld [vmem:[%s6 + $0x1b8] sm:$0xff]
        %v395 = vld [vmem:[%s6 + $0x1c0] sm:$0xff]
        %v396 = vld [vmem:[%s6 + $0x1c8] sm:$0xff]
        %v397 = vld [vmem:[%s6 + $0x1d0] sm:$0xff]
        %v398 = vld [vmem:[%s6 + $0x1d8] sm:$0xff]
        %v399 = vld [vmem:[%s6 + $0x1e0] sm:$0xff]
        %v400 = vld [vmem:[%s6 + $0x1e8] sm:$0xff]
        %v401 = vld [vmem:[%s6 + $0x1f0] sm:$0xff]
        %v402 = vld [vmem:[%s6 + $0x1f8] sm:$0xff]
        %v403 = vld [vmem:[%s7] sm:$0x1]
        %404 = vst [vmem:[#allocation2 + $0x15] sm:$0x7] 0.0
        %s405 = scalar_lea.vmem [#allocation2], 24
        %406 = vst [vmem:[%s405 + $0x15] sm:$0x7] 0.0
        %v407 = vld [vmem:[%s302] sm:$0xff]
        %v408 = vld [vmem:[%s302 + $0x8] sm:$0xff]
        %v409 = vld [vmem:[%s302 + $0x10] sm:$0x1f]
        %v410 = vld [vmem:[%s1] sm:$0xff]
        %v411 = vld [vmem:[%s1 + $0x8] sm:$0xff]
        %v412 = vld [vmem:[%s1 + $0x10] sm:$0xff]
        %v413 = vld [vmem:[%s1 + $0x18] sm:$0xff]
        %v414 = vld [vmem:[%s1 + $0x20] sm:$0xff]
        %v415 = vld [vmem:[%s1 + $0x28] sm:$0xff]
        %v416 = vld [vmem:[%s1 + $0x30] sm:$0xff]
        %v417 = vld [vmem:[%s1 + $0x38] sm:$0xff]
        %v418 = vld [vmem:[%s1 + $0x40] sm:$0xff]
        %v419 = vld [vmem:[%s1 + $0x48] sm:$0xff]
        %v420 = vld [vmem:[%s1 + $0x50] sm:$0xff]
        %v421 = vld [vmem:[%s1 + $0x58] sm:$0xff]
        %v422 = vld [vmem:[%s1 + $0x60] sm:$0xff]
        %v423 = vld [vmem:[%s1 + $0x68] sm:$0xff]
        %v424 = vld [vmem:[%s1 + $0x70] sm:$0xff]
        %v425 = vld [vmem:[%s1 + $0x78] sm:$0xff]
        %v426 = vld [vmem:[%s1 + $0x80] sm:$0xff]
        %v427 = vld [vmem:[%s1 + $0x88] sm:$0xff]
        %v428 = vld [vmem:[%s1 + $0x90] sm:$0xff]
        %v429 = vld [vmem:[%s1 + $0x98] sm:$0xff]
        %v430 = vld [vmem:[%s1 + $0xa0] sm:$0xf]
        %v431 = vld [vmem:[%s1 + $0xa8] sm:$0xf]
        %v432 = vld [vmem:[%s302 + $0x16] sm:$0xff]
        %v433 = vld [vmem:[%s302 + $0x1e] sm:$0xff]
        %v434 = vld [vmem:[%s302 + $0x26] sm:$0x1f]
        %s435 = scalar_lea.vmem %s1, 176
        %v436 = vld [vmem:[%s435] sm:$0xff]
        %v437 = vld [vmem:[%s435 + $0x8] sm:$0xff]
        %v438 = vld [vmem:[%s435 + $0x10] sm:$0xff]
        %v439 = vld [vmem:[%s435 + $0x18] sm:$0xff]
        %v440 = vld [vmem:[%s435 + $0x20] sm:$0xff]
        %v441 = vld [vmem:[%s435 + $0x28] sm:$0xff]
        %v442 = vld [vmem:[%s435 + $0x30] sm:$0xff]
        %v443 = vld [vmem:[%s435 + $0x38] sm:$0xff]
        %v444 = vld [vmem:[%s435 + $0x40] sm:$0xff]
        %v445 = vld [vmem:[%s435 + $0x48] sm:$0xff]
        %v446 = vld [vmem:[%s435 + $0x50] sm:$0xff]
        %v447 = vld [vmem:[%s435 + $0x58] sm:$0xff]
        %v448 = vld [vmem:[%s435 + $0x60] sm:$0xff]
        %v449 = vld [vmem:[%s435 + $0x68] sm:$0xff]
        %v450 = vld [vmem:[%s435 + $0x70] sm:$0xff]
        %v451 = vld [vmem:[%s435 + $0x78] sm:$0xff]
        %v452 = vld [vmem:[%s435 + $0x80] sm:$0xff]
        %v453 = vld [vmem:[%s435 + $0x88] sm:$0xff]
        %v454 = vld [vmem:[%s435 + $0x90] sm:$0xff]
        %v455 = vld [vmem:[%s435 + $0x98] sm:$0xff]
        %v456 = vld [vmem:[%s435 + $0xa0] sm:$0xf]
        %v457 = vld [vmem:[%s435 + $0xa8] sm:$0xf]
        %vm458 = vcmask 687104
        %v460 = vsel %vm458, %v432, 0
        %v463 = vsel %vm458, %v433, 0
        %v466 = vsel %vm458, %v434, 0
        %vm468 = vcmask 1043456
        %v470 = vsel %vm468, %v456, 0
        %v473 = vsel %vm468, %v457, 0
        %475 = vmatprep.subr.mxu0 0.0
        %476 = vmatpush1.msra.mxu0 0.0
        %477 = vmatprep.subr.mxu0 0.0
        %478 = vmatpush1.msra.mxu0 0.0
        %479 = vmatprep.subr.mxu0 0.0
        %480 = vmatpush1.msra.mxu0 0.0
        %481 = vmatprep.subr.mxu0 0.0
        %482 = vmatpush1.msra.mxu0 0.0
        %483 = vmatprep.subr.mxu0 0.0
        %484 = vmatpush1.msra.mxu0 0.0
        %485 = vmatprep.subr.mxu0 %v473
        %486 = vmatpush1.msra.mxu0 %v470
        %487 = vmatprep.subr.mxu0 %v455
        %488 = vmatpush1.msra.mxu0 %v454
        %489 = vmatprep.subr.mxu0 %v453
        %490 = vmatpush1.msra.mxu0 %v452
        %491 = vmatprep.subr.mxu0 %v451
        %492 = vmatpush1.msra.mxu0 %v450
        %493 = vmatprep.subr.mxu0 %v449
        %494 = vmatpush1.msra.mxu0 %v448
        %495 = vmatprep.subr.mxu0 %v447
        %496 = vmatpush1.msra.mxu0 %v446
        %497 = vmatprep.subr.mxu0 %v445
        %498 = vmatpush1.msra.mxu0 %v444
        %499 = vmatprep.subr.mxu0 %v443
        %500 = vmatpush1.msra.mxu0 %v442
        %501 = vmatprep.subr.mxu0 %v441
        %502 = vmatpush1.msra.mxu0 %v440
        %503 = vmatprep.subr.mxu0 %v439
        %504 = vmatpush1.msra.mxu0 %v438
        %505 = vmatprep.subr.mxu0 %v437
        %506 = vmatpush1.msra.mxu0 %v436
        %507 = vmatprep.subr.mxu0 0.0
        %508 = vmatpush2.msra.mxu0 0.0
        %509 = vmatprep.subr.mxu0 0.0
        %510 = vmatpush2.msra.mxu0 0.0
        %511 = vmatprep.subr.mxu0 0.0
        %512 = vmatpush2.msra.mxu0 0.0
        %513 = vmatprep.subr.mxu0 0.0
        %514 = vmatpush2.msra.mxu0 0.0
        %515 = vmatprep.subr.mxu0 0.0
        %516 = vmatpush2.msra.mxu0 0.0
        %517 = vmatprep.subr.mxu0 0.0
        %518 = vmatpush2.msra.mxu0 0.0
        %519 = vmatprep.subr.mxu0 0.0
        %520 = vmatpush2.msra.mxu0 0.0
        %521 = vmatprep.subr.mxu0 0.0
        %522 = vmatpush2.msra.mxu0 0.0
        %523 = vmatprep.subr.mxu0 0.0
        %524 = vmatpush2.msra.mxu0 0.0
        %525 = vmatprep.subr.mxu0 0.0
        %526 = vmatpush2.msra.mxu0 0.0
        %527 = vmatprep.subr.mxu0 0.0
        %528 = vmatpush2.msra.mxu0 0.0
        %529 = vmatprep.subr.mxu0 0.0
        %530 = vmatpush2.msra.mxu0 0.0
        %531 = vmatprep.subr.mxu0 0.0
        %532 = vmatpush2.msra.mxu0 0.0
        %533 = vmatprep.subr.mxu0 0.0
        %534 = vmatpush2.msra.mxu0 0.0
        %535 = vmatprep.subr.mxu0 0.0
        %536 = vmatpush2.msra.mxu0 0.0
        %537 = vmatprep.subr.mxu0 0.0
        %538 = vmatpush2.msra.mxu0 0.0
        %539 = vmatprep.mubr.f32.mxu0 0.0
        %540 = vmatmul.mubr.f32.gmra.mxu0 %v460
        %v541 = vpop.f32.mrf.mxu0
        %v542 = vadd.f32 0.0, %v541
        %v543 = vpop.f32.mrf.mxu0
        %v544 = vadd.f32 0.0, %v543
        %545 = vmatprep.mubr.f32.mxu0 0.0
        %546 = vmatmul.mubr.f32.gmra.mxu0 %v463
        %v547 = vpop.f32.mrf.mxu0
        %v548 = vadd.f32 0.0, %v547
        %v549 = vpop.f32.mrf.mxu0
        %v550 = vadd.f32 0.0, %v549
        %551 = vmatprep.mubr.f32.mxu0 0.0
        %552 = vmatmul.mubr.f32.gmra.mxu0 %v466
        %v553 = vpop.f32.mrf.mxu0
        %v554 = vadd.f32 0.0, %v553
        %v555 = vpop.f32.mrf.mxu0
        %v556 = vadd.f32 0.0, %v555
        %557 = vdwg.mxu0
        %v559 = vsel %vm458, %v407, 0
        %v562 = vsel %vm458, %v408, 0
        %v565 = vsel %vm458, %v409, 0
        %v568 = vsel %vm468, %v430, 0
        %v571 = vsel %vm468, %v431, 0
        %573 = vmatprep.subr.mxu0 0.0
        %574 = vmatpush1.msra.mxu0 0.0
        %575 = vmatprep.subr.mxu0 0.0
        %576 = vmatpush1.msra.mxu0 0.0
        %577 = vmatprep.subr.mxu0 0.0
        %578 = vmatpush1.msra.mxu0 0.0
        %579 = vmatprep.subr.mxu0 0.0
        %580 = vmatpush1.msra.mxu0 0.0
        %581 = vmatprep.subr.mxu0 0.0
        %582 = vmatpush1.msra.mxu0 0.0
        %583 = vmatprep.subr.mxu0 %v571
        %584 = vmatpush1.msra.mxu0 %v568
        %585 = vmatprep.subr.mxu0 %v429
        %586 = vmatpush1.msra.mxu0 %v428
        %587 = vmatprep.subr.mxu0 %v427
        %588 = vmatpush1.msra.mxu0 %v426
        %589 = vmatprep.subr.mxu0 %v425
        %590 = vmatpush1.msra.mxu0 %v424
        %591 = vmatprep.subr.mxu0 %v423
        %592 = vmatpush1.msra.mxu0 %v422
        %593 = vmatprep.subr.mxu0 %v421
        %594 = vmatpush1.msra.mxu0 %v420
        %595 = vmatprep.subr.mxu0 %v419
        %596 = vmatpush1.msra.mxu0 %v418
        %597 = vmatprep.subr.mxu0 %v417
        %598 = vmatpush1.msra.mxu0 %v416
        %599 = vmatprep.subr.mxu0 %v415
        %600 = vmatpush1.msra.mxu0 %v414
        %601 = vmatprep.subr.mxu0 %v413
        %602 = vmatpush1.msra.mxu0 %v412
        %603 = vmatprep.subr.mxu0 %v411
        %604 = vmatpush1.msra.mxu0 %v410
        %605 = vmatprep.subr.mxu0 0.0
        %606 = vmatpush2.msra.mxu0 0.0
        %607 = vmatprep.subr.mxu0 0.0
        %608 = vmatpush2.msra.mxu0 0.0
        %609 = vmatprep.subr.mxu0 0.0
        %610 = vmatpush2.msra.mxu0 0.0
        %611 = vmatprep.subr.mxu0 0.0
        %612 = vmatpush2.msra.mxu0 0.0
        %613 = vmatprep.subr.mxu0 0.0
        %614 = vmatpush2.msra.mxu0 0.0
        %615 = vmatprep.subr.mxu0 0.0
        %616 = vmatpush2.msra.mxu0 0.0
        %617 = vmatprep.subr.mxu0 0.0
        %618 = vmatpush2.msra.mxu0 0.0
        %619 = vmatprep.subr.mxu0 0.0
        %620 = vmatpush2.msra.mxu0 0.0
        %621 = vmatprep.subr.mxu0 0.0
        %622 = vmatpush2.msra.mxu0 0.0
        %623 = vmatprep.subr.mxu0 0.0
        %624 = vmatpush2.msra.mxu0 0.0
        %625 = vmatprep.subr.mxu0 0.0
        %626 = vmatpush2.msra.mxu0 0.0
        %627 = vmatprep.subr.mxu0 0.0
        %628 = vmatpush2.msra.mxu0 0.0
        %629 = vmatprep.subr.mxu0 0.0
        %630 = vmatpush2.msra.mxu0 0.0
        %631 = vmatprep.subr.mxu0 0.0
        %632 = vmatpush2.msra.mxu0 0.0
        %633 = vmatprep.subr.mxu0 0.0
        %634 = vmatpush2.msra.mxu0 0.0
        %635 = vmatprep.subr.mxu0 0.0
        %636 = vmatpush2.msra.mxu0 0.0
        %637 = vmatprep.mubr.f32.mxu0 0.0
        %638 = vmatmul.mubr.f32.gmra.mxu0 %v559
        %v639 = vpop.f32.mrf.mxu0
        %v640 = vadd.f32 %v542, %v639
        %v641 = vpop.f32.mrf.mxu0
        %v642 = vadd.f32 %v544, %v641
        %643 = vmatprep.mubr.f32.mxu0 0.0
        %644 = vmatmul.mubr.f32.gmra.mxu0 %v562
        %v645 = vpop.f32.mrf.mxu0
        %v646 = vadd.f32 %v548, %v645
        %v647 = vpop.f32.mrf.mxu0
        %v648 = vadd.f32 %v550, %v647
        %649 = vmatprep.mubr.f32.mxu0 0.0
        %650 = vmatmul.mubr.f32.gmra.mxu0 %v565
        %v651 = vpop.f32.mrf.mxu0
        %v652 = vadd.f32 %v554, %v651
        %v653 = vpop.f32.mrf.mxu0
        %v654 = vadd.f32 %v556, %v653
        %655 = vdwg.mxu0
        %v656 = vld [vmem:[%s302 + $0x2c] sm:$0xff]
        %v657 = vld [vmem:[%s302 + $0x34] sm:$0xff]
        %v658 = vld [vmem:[%s302 + $0x3c] sm:$0x1f]
        %s659 = scalar_lea.vmem %s1, 352
        %v660 = vld [vmem:[%s659] sm:$0xff]
        %v661 = vld [vmem:[%s659 + $0x8] sm:$0xff]
        %v662 = vld [vmem:[%s659 + $0x10] sm:$0xff]
        %v663 = vld [vmem:[%s659 + $0x18] sm:$0xff]
        %v664 = vld [vmem:[%s659 + $0x20] sm:$0xff]
        %v665 = vld [vmem:[%s659 + $0x28] sm:$0xff]
        %v666 = vld [vmem:[%s659 + $0x30] sm:$0xff]
        %v667 = vld [vmem:[%s659 + $0x38] sm:$0xff]
        %v668 = vld [vmem:[%s659 + $0x40] sm:$0xff]
        %v669 = vld [vmem:[%s659 + $0x48] sm:$0xff]
        %v670 = vld [vmem:[%s659 + $0x50] sm:$0xff]
        %v671 = vld [vmem:[%s659 + $0x58] sm:$0xff]
        %v672 = vld [vmem:[%s659 + $0x60] sm:$0xff]
        %v673 = vld [vmem:[%s659 + $0x68] sm:$0xff]
        %v674 = vld [vmem:[%s659 + $0x70] sm:$0xff]
        %v675 = vld [vmem:[%s659 + $0x78] sm:$0xff]
        %v676 = vld [vmem:[%s659 + $0x80] sm:$0xff]
        %v677 = vld [vmem:[%s659 + $0x88] sm:$0xff]
        %v678 = vld [vmem:[%s659 + $0x90] sm:$0xff]
        %v679 = vld [vmem:[%s659 + $0x98] sm:$0xff]
        %v680 = vld [vmem:[%s659 + $0xa0] sm:$0xf]
        %v681 = vld [vmem:[%s659 + $0xa8] sm:$0xf]
        %v683 = vsel %vm458, %v656, 0
        %v686 = vsel %vm458, %v657, 0
        %v689 = vsel %vm458, %v658, 0
        %v692 = vsel %vm468, %v680, 0
        %v695 = vsel %vm468, %v681, 0
        %697 = vmatprep.subr.mxu0 0.0
        %698 = vmatpush1.msra.mxu0 0.0
        %699 = vmatprep.subr.mxu0 0.0
        %700 = vmatpush1.msra.mxu0 0.0
        %701 = vmatprep.subr.mxu0 0.0
        %702 = vmatpush1.msra.mxu0 0.0
        %703 = vmatprep.subr.mxu0 0.0
        %704 = vmatpush1.msra.mxu0 0.0
        %705 = vmatprep.subr.mxu0 0.0
        %706 = vmatpush1.msra.mxu0 0.0
        %707 = vmatprep.subr.mxu0 %v695
        %708 = vmatpush1.msra.mxu0 %v692
        %709 = vmatprep.subr.mxu0 %v679
        %710 = vmatpush1.msra.mxu0 %v678
        %711 = vmatprep.subr.mxu0 %v677
        %712 = vmatpush1.msra.mxu0 %v676
        %713 = vmatprep.subr.mxu0 %v675
        %714 = vmatpush1.msra.mxu0 %v674
        %715 = vmatprep.subr.mxu0 %v673
        %716 = vmatpush1.msra.mxu0 %v672
        %717 = vmatprep.subr.mxu0 %v671
        %718 = vmatpush1.msra.mxu0 %v670
        %719 = vmatprep.subr.mxu0 %v669
        %720 = vmatpush1.msra.mxu0 %v668
        %721 = vmatprep.subr.mxu0 %v667
        %722 = vmatpush1.msra.mxu0 %v666
        %723 = vmatprep.subr.mxu0 %v665
        %724 = vmatpush1.msra.mxu0 %v664
        %725 = vmatprep.subr.mxu0 %v663
        %726 = vmatpush1.msra.mxu0 %v662
        %727 = vmatprep.subr.mxu0 %v661
        %728 = vmatpush1.msra.mxu0 %v660
        %729 = vmatprep.subr.mxu0 0.0
        %730 = vmatpush2.msra.mxu0 0.0
        %731 = vmatprep.subr.mxu0 0.0
        %732 = vmatpush2.msra.mxu0 0.0
        %733 = vmatprep.subr.mxu0 0.0
        %734 = vmatpush2.msra.mxu0 0.0
        %735 = vmatprep.subr.mxu0 0.0
        %736 = vmatpush2.msra.mxu0 0.0
        %737 = vmatprep.subr.mxu0 0.0
        %738 = vmatpush2.msra.mxu0 0.0
        %739 = vmatprep.subr.mxu0 0.0
        %740 = vmatpush2.msra.mxu0 0.0
        %741 = vmatprep.subr.mxu0 0.0
        %742 = vmatpush2.msra.mxu0 0.0
        %743 = vmatprep.subr.mxu0 0.0
        %744 = vmatpush2.msra.mxu0 0.0
        %745 = vmatprep.subr.mxu0 0.0
        %746 = vmatpush2.msra.mxu0 0.0
        %747 = vmatprep.subr.mxu0 0.0
        %748 = vmatpush2.msra.mxu0 0.0
        %749 = vmatprep.subr.mxu0 0.0
        %750 = vmatpush2.msra.mxu0 0.0
        %751 = vmatprep.subr.mxu0 0.0
        %752 = vmatpush2.msra.mxu0 0.0
        %753 = vmatprep.subr.mxu0 0.0
        %754 = vmatpush2.msra.mxu0 0.0
        %755 = vmatprep.subr.mxu0 0.0
        %756 = vmatpush2.msra.mxu0 0.0
        %757 = vmatprep.subr.mxu0 0.0
        %758 = vmatpush2.msra.mxu0 0.0
        %759 = vmatprep.subr.mxu0 0.0
        %760 = vmatpush2.msra.mxu0 0.0
        %761 = vmatprep.mubr.f32.mxu0 0.0
        %762 = vmatmul.mubr.f32.gmra.mxu0 %v683
        %v763 = vpop.f32.mrf.mxu0
        %v764 = vadd.f32 0.0, %v763
        %v765 = vpop.f32.mrf.mxu0
        %v766 = vadd.f32 0.0, %v765
        %767 = vmatprep.mubr.f32.mxu0 0.0
        %768 = vmatmul.mubr.f32.gmra.mxu0 %v686
        %v769 = vpop.f32.mrf.mxu0
        %v770 = vadd.f32 0.0, %v769
        %v771 = vpop.f32.mrf.mxu0
        %v772 = vadd.f32 0.0, %v771
        %773 = vmatprep.mubr.f32.mxu0 0.0
        %774 = vmatmul.mubr.f32.gmra.mxu0 %v689
        %v775 = vpop.f32.mrf.mxu0
        %v776 = vadd.f32 0.0, %v775
        %v777 = vpop.f32.mrf.mxu0
        %v778 = vadd.f32 0.0, %v777
        %779 = vdwg.mxu0
        %v780 = vadd.f32 %v640, %v764
        %v781 = vadd.f32 %v642, %v766
        %v782 = vadd.f32 %v646, %v770
        %v783 = vadd.f32 %v648, %v772
        %v784 = vadd.f32 %v652, %v776
        %v785 = vadd.f32 %v654, %v778
        %v786 = vld [vmem:[%s302 + $0x42] sm:$0xff]
        %v787 = vld [vmem:[%s302 + $0x4a] sm:$0xff]
        %v788 = vld [vmem:[%s302 + $0x52] sm:$0x1f]
        %s789 = scalar_lea.vmem %s1, 528
        %v790 = vld [vmem:[%s789] sm:$0xff]
        %v791 = vld [vmem:[%s789 + $0x8] sm:$0xff]
        %v792 = vld [vmem:[%s789 + $0x10] sm:$0xff]
        %v793 = vld [vmem:[%s789 + $0x18] sm:$0xff]
        %v794 = vld [vmem:[%s789 + $0x20] sm:$0xff]
        %v795 = vld [vmem:[%s789 + $0x28] sm:$0xff]
        %v796 = vld [vmem:[%s789 + $0x30] sm:$0xff]
        %v797 = vld [vmem:[%s789 + $0x38] sm:$0xff]
        %v798 = vld [vmem:[%s789 + $0x40] sm:$0xff]
        %v799 = vld [vmem:[%s789 + $0x48] sm:$0xff]
        %v800 = vld [vmem:[%s789 + $0x50] sm:$0xff]
        %v801 = vld [vmem:[%s789 + $0x58] sm:$0xff]
        %v802 = vld [vmem:[%s789 + $0x60] sm:$0xff]
        %v803 = vld [vmem:[%s789 + $0x68] sm:$0xff]
        %v804 = vld [vmem:[%s789 + $0x70] sm:$0xff]
        %v805 = vld [vmem:[%s789 + $0x78] sm:$0xff]
        %v806 = vld [vmem:[%s789 + $0x80] sm:$0xff]
        %v807 = vld [vmem:[%s789 + $0x88] sm:$0xff]
        %v808 = vld [vmem:[%s789 + $0x90] sm:$0xff]
        %v809 = vld [vmem:[%s789 + $0x98] sm:$0xff]
        %v810 = vld [vmem:[%s789 + $0xa0] sm:$0xf]
        %v811 = vld [vmem:[%s789 + $0xa8] sm:$0xf]
        %v813 = vsel %vm458, %v786, 0
        %v816 = vsel %vm458, %v787, 0
        %v819 = vsel %vm458, %v788, 0
        %v822 = vsel %vm468, %v810, 0
        %v825 = vsel %vm468, %v811, 0
        %827 = vmatprep.subr.mxu0 0.0
        %828 = vmatpush1.msra.mxu0 0.0
        %829 = vmatprep.subr.mxu0 0.0
        %830 = vmatpush1.msra.mxu0 0.0
        %831 = vmatprep.subr.mxu0 0.0
        %832 = vmatpush1.msra.mxu0 0.0
        %833 = vmatprep.subr.mxu0 0.0
        %834 = vmatpush1.msra.mxu0 0.0
        %835 = vmatprep.subr.mxu0 0.0
        %836 = vmatpush1.msra.mxu0 0.0
        %837 = vmatprep.subr.mxu0 %v825
        %838 = vmatpush1.msra.mxu0 %v822
        %839 = vmatprep.subr.mxu0 %v809
        %840 = vmatpush1.msra.mxu0 %v808
        %841 = vmatprep.subr.mxu0 %v807
        %842 = vmatpush1.msra.mxu0 %v806
        %843 = vmatprep.subr.mxu0 %v805
        %844 = vmatpush1.msra.mxu0 %v804
        %845 = vmatprep.subr.mxu0 %v803
        %846 = vmatpush1.msra.mxu0 %v802
        %847 = vmatprep.subr.mxu0 %v801
        %848 = vmatpush1.msra.mxu0 %v800
        %849 = vmatprep.subr.mxu0 %v799
        %850 = vmatpush1.msra.mxu0 %v798
        %851 = vmatprep.subr.mxu0 %v797
        %852 = vmatpush1.msra.mxu0 %v796
        %853 = vmatprep.subr.mxu0 %v795
        %854 = vmatpush1.msra.mxu0 %v794
        %855 = vmatprep.subr.mxu0 %v793
        %856 = vmatpush1.msra.mxu0 %v792
        %857 = vmatprep.subr.mxu0 %v791
        %858 = vmatpush1.msra.mxu0 %v790
        %859 = vmatprep.subr.mxu0 0.0
        %860 = vmatpush2.msra.mxu0 0.0
        %861 = vmatprep.subr.mxu0 0.0
        %862 = vmatpush2.msra.mxu0 0.0
        %863 = vmatprep.subr.mxu0 0.0
        %864 = vmatpush2.msra.mxu0 0.0
        %865 = vmatprep.subr.mxu0 0.0
        %866 = vmatpush2.msra.mxu0 0.0
        %867 = vmatprep.subr.mxu0 0.0
        %868 = vmatpush2.msra.mxu0 0.0
        %869 = vmatprep.subr.mxu0 0.0
        %870 = vmatpush2.msra.mxu0 0.0
        %871 = vmatprep.subr.mxu0 0.0
        %872 = vmatpush2.msra.mxu0 0.0
        %873 = vmatprep.subr.mxu0 0.0
        %874 = vmatpush2.msra.mxu0 0.0
        %875 = vmatprep.subr.mxu0 0.0
        %876 = vmatpush2.msra.mxu0 0.0
        %877 = vmatprep.subr.mxu0 0.0
        %878 = vmatpush2.msra.mxu0 0.0
        %879 = vmatprep.subr.mxu0 0.0
        %880 = vmatpush2.msra.mxu0 0.0
        %881 = vmatprep.subr.mxu0 0.0
        %882 = vmatpush2.msra.mxu0 0.0
        %883 = vmatprep.subr.mxu0 0.0
        %884 = vmatpush2.msra.mxu0 0.0
        %885 = vmatprep.subr.mxu0 0.0
        %886 = vmatpush2.msra.mxu0 0.0
        %887 = vmatprep.subr.mxu0 0.0
        %888 = vmatpush2.msra.mxu0 0.0
        %889 = vmatprep.subr.mxu0 0.0
        %890 = vmatpush2.msra.mxu0 0.0
        %891 = vmatprep.mubr.f32.mxu0 0.0
        %892 = vmatmul.mubr.f32.gmra.mxu0 %v813
        %v893 = vpop.f32.mrf.mxu0
        %v894 = vadd.f32 0.0, %v893
        %v895 = vpop.f32.mrf.mxu0
        %v896 = vadd.f32 0.0, %v895
        %897 = vmatprep.mubr.f32.mxu0 0.0
        %898 = vmatmul.mubr.f32.gmra.mxu0 %v816
        %v899 = vpop.f32.mrf.mxu0
        %v900 = vadd.f32 0.0, %v899
        %v901 = vpop.f32.mrf.mxu0
        %v902 = vadd.f32 0.0, %v901
        %903 = vmatprep.mubr.f32.mxu0 0.0
        %904 = vmatmul.mubr.f32.gmra.mxu0 %v819
        %v905 = vpop.f32.mrf.mxu0
        %v906 = vadd.f32 0.0, %v905
        %v907 = vpop.f32.mrf.mxu0
        %v908 = vadd.f32 0.0, %v907
        %909 = vdwg.mxu0
        %v910 = vadd.f32 %v780, %v894
        %v911 = vadd.f32 %v781, %v896
        %v912 = vadd.f32 %v782, %v900
        %v913 = vadd.f32 %v783, %v902
        %v914 = vadd.f32 %v784, %v906
        %v915 = vadd.f32 %v785, %v908
        %v916 = vld [vmem:[%s302 + $0x1] sm:$0xff]
        %v917 = vld [vmem:[%s302 + $0x9] sm:$0xff]
        %v918 = vld [vmem:[%s302 + $0x11] sm:$0x1f]
        %s919 = scalar_lea.vmem %s1, 704
        %v920 = vld [vmem:[%s919] sm:$0xff]
        %v921 = vld [vmem:[%s919 + $0x8] sm:$0xff]
        %v922 = vld [vmem:[%s919 + $0x10] sm:$0xff]
        %v923 = vld [vmem:[%s919 + $0x18] sm:$0xff]
        %v924 = vld [vmem:[%s919 + $0x20] sm:$0xff]
        %v925 = vld [vmem:[%s919 + $0x28] sm:$0xff]
        %v926 = vld [vmem:[%s919 + $0x30] sm:$0xff]
        %v927 = vld [vmem:[%s919 + $0x38] sm:$0xff]
        %v928 = vld [vmem:[%s919 + $0x40] sm:$0xff]
        %v929 = vld [vmem:[%s919 + $0x48] sm:$0xff]
        %v930 = vld [vmem:[%s919 + $0x50] sm:$0xff]
        %v931 = vld [vmem:[%s919 + $0x58] sm:$0xff]
        %v932 = vld [vmem:[%s919 + $0x60] sm:$0xff]
        %v933 = vld [vmem:[%s919 + $0x68] sm:$0xff]
        %v934 = vld [vmem:[%s919 + $0x70] sm:$0xff]
        %v935 = vld [vmem:[%s919 + $0x78] sm:$0xff]
        %v936 = vld [vmem:[%s919 + $0x80] sm:$0xff]
        %v937 = vld [vmem:[%s919 + $0x88] sm:$0xff]
        %v938 = vld [vmem:[%s919 + $0x90] sm:$0xff]
        %v939 = vld [vmem:[%s919 + $0x98] sm:$0xff]
        %v940 = vld [vmem:[%s919 + $0xa0] sm:$0xf]
        %v941 = vld [vmem:[%s919 + $0xa8] sm:$0xf]
        %v943 = vsel %vm458, %v916, 0
        %v946 = vsel %vm458, %v917, 0
        %v949 = vsel %vm458, %v918, 0
        %v952 = vsel %vm468, %v940, 0
        %v955 = vsel %vm468, %v941, 0
        %957 = vmatprep.subr.mxu0 0.0
        %958 = vmatpush1.msra.mxu0 0.0
        %959 = vmatprep.subr.mxu0 0.0
        %960 = vmatpush1.msra.mxu0 0.0
        %961 = vmatprep.subr.mxu0 0.0
        %962 = vmatpush1.msra.mxu0 0.0
        %963 = vmatprep.subr.mxu0 0.0
        %964 = vmatpush1.msra.mxu0 0.0
        %965 = vmatprep.subr.mxu0 0.0
        %966 = vmatpush1.msra.mxu0 0.0
        %967 = vmatprep.subr.mxu0 %v955
        %968 = vmatpush1.msra.mxu0 %v952
        %969 = vmatprep.subr.mxu0 %v939
        %970 = vmatpush1.msra.mxu0 %v938
        %971 = vmatprep.subr.mxu0 %v937
        %972 = vmatpush1.msra.mxu0 %v936
        %973 = vmatprep.subr.mxu0 %v935
        %974 = vmatpush1.msra.mxu0 %v934
        %975 = vmatprep.subr.mxu0 %v933
        %976 = vmatpush1.msra.mxu0 %v932
        %977 = vmatprep.subr.mxu0 %v931
        %978 = vmatpush1.msra.mxu0 %v930
        %979 = vmatprep.subr.mxu0 %v929
        %980 = vmatpush1.msra.mxu0 %v928
        %981 = vmatprep.subr.mxu0 %v927
        %982 = vmatpush1.msra.mxu0 %v926
        %983 = vmatprep.subr.mxu0 %v925
        %984 = vmatpush1.msra.mxu0 %v924
        %985 = vmatprep.subr.mxu0 %v923
        %986 = vmatpush1.msra.mxu0 %v922
        %987 = vmatprep.subr.mxu0 %v921
        %988 = vmatpush1.msra.mxu0 %v920
        %989 = vmatprep.subr.mxu0 0.0
        %990 = vmatpush2.msra.mxu0 0.0
        %991 = vmatprep.subr.mxu0 0.0
        %992 = vmatpush2.msra.mxu0 0.0
        %993 = vmatprep.subr.mxu0 0.0
        %994 = vmatpush2.msra.mxu0 0.0
        %995 = vmatprep.subr.mxu0 0.0
        %996 = vmatpush2.msra.mxu0 0.0
        %997 = vmatprep.subr.mxu0 0.0
        %998 = vmatpush2.msra.mxu0 0.0
        %999 = vmatprep.subr.mxu0 0.0
        %1000 = vmatpush2.msra.mxu0 0.0
        %1001 = vmatprep.subr.mxu0 0.0
        %1002 = vmatpush2.msra.mxu0 0.0
        %1003 = vmatprep.subr.mxu0 0.0
        %1004 = vmatpush2.msra.mxu0 0.0
        %1005 = vmatprep.subr.mxu0 0.0
        %1006 = vmatpush2.msra.mxu0 0.0
        %1007 = vmatprep.subr.mxu0 0.0
        %1008 = vmatpush2.msra.mxu0 0.0
        %1009 = vmatprep.subr.mxu0 0.0
        %1010 = vmatpush2.msra.mxu0 0.0
        %1011 = vmatprep.subr.mxu0 0.0
        %1012 = vmatpush2.msra.mxu0 0.0
        %1013 = vmatprep.subr.mxu0 0.0
        %1014 = vmatpush2.msra.mxu0 0.0
        %1015 = vmatprep.subr.mxu0 0.0
        %1016 = vmatpush2.msra.mxu0 0.0
        %1017 = vmatprep.subr.mxu0 0.0
        %1018 = vmatpush2.msra.mxu0 0.0
        %1019 = vmatprep.subr.mxu0 0.0
        %1020 = vmatpush2.msra.mxu0 0.0
        %1021 = vmatprep.mubr.f32.mxu0 0.0
        %1022 = vmatmul.mubr.f32.gmra.mxu0 %v943
        %v1023 = vpop.f32.mrf.mxu0
        %v1024 = vadd.f32 0.0, %v1023
        %v1025 = vpop.f32.mrf.mxu0
        %v1026 = vadd.f32 0.0, %v1025
        %1027 = vmatprep.mubr.f32.mxu0 0.0
        %1028 = vmatmul.mubr.f32.gmra.mxu0 %v946
        %v1029 = vpop.f32.mrf.mxu0
        %v1030 = vadd.f32 0.0, %v1029
        %v1031 = vpop.f32.mrf.mxu0
        %v1032 = vadd.f32 0.0, %v1031
        %1033 = vmatprep.mubr.f32.mxu0 0.0
        %1034 = vmatmul.mubr.f32.gmra.mxu0 %v949
        %v1035 = vpop.f32.mrf.mxu0
        %v1036 = vadd.f32 0.0, %v1035
        %v1037 = vpop.f32.mrf.mxu0
        %v1038 = vadd.f32 0.0, %v1037
        %1039 = vdwg.mxu0
        %v1040 = vadd.f32 %v910, %v1024
        %v1041 = vadd.f32 %v911, %v1026
        %v1042 = vadd.f32 %v912, %v1030
        %v1043 = vadd.f32 %v913, %v1032
        %v1044 = vadd.f32 %v914, %v1036
        %v1045 = vadd.f32 %v915, %v1038
        %v1046 = vadd.f32 %v1040, %v308
        %v1047 = vadd.f32 %v1041, %v312
        %v1048 = vadd.f32 %v1042, %v308
        %v1049 = vadd.f32 %v1043, %v312
        %v1050 = vadd.f32 %v1044, %v308
        %v1051 = vadd.f32 %v1045, %v312
        %v1052 = vmax.f32 %v1046, 0.0
        %v1053 = vmax.f32 %v1047, 0.0
        %v1054 = vmax.f32 %v1048, 0.0
        %v1055 = vmax.f32 %v1049, 0.0
        %v1056 = vmax.f32 %v1050, 0.0
        %v1057 = vmax.f32 %v1051, 0.0
        %1058 = vmatprep.subr.mxu0 0.0
        %1059 = vmatpush1.msra.mxu0 0.0
        %1060 = vmatprep.subr.mxu0 0.0
        %1061 = vmatpush1.msra.mxu0 0.0
        %1062 = vmatprep.subr.mxu0 0.0
        %1063 = vmatpush1.msra.mxu0 0.0
        %1064 = vmatprep.subr.mxu0 0.0
        %1065 = vmatpush1.msra.mxu0 0.0
        %1066 = vmatprep.subr.mxu0 0.0
        %1067 = vmatpush1.msra.mxu0 0.0
        %1068 = vmatprep.subr.mxu0 %v473
        %1069 = vmatpush1.msra.mxu0 %v470
        %1070 = vmatprep.subr.mxu0 %v455
        %1071 = vmatpush1.msra.mxu0 %v454
        %1072 = vmatprep.subr.mxu0 %v453
        %1073 = vmatpush1.msra.mxu0 %v452
        %1074 = vmatprep.subr.mxu0 %v451
        %1075 = vmatpush1.msra.mxu0 %v450
        %1076 = vmatprep.subr.mxu0 %v449
        %1077 = vmatpush1.msra.mxu0 %v448
        %1078 = vmatprep.subr.mxu0 %v447
        %1079 = vmatpush1.msra.mxu0 %v446
        %1080 = vmatprep.subr.mxu0 %v445
        %1081 = vmatpush1.msra.mxu0 %v444
        %1082 = vmatprep.subr.mxu0 %v443
        %1083 = vmatpush1.msra.mxu0 %v442
        %1084 = vmatprep.subr.mxu0 %v441
        %1085 = vmatpush1.msra.mxu0 %v440
        %1086 = vmatprep.subr.mxu0 %v439
        %1087 = vmatpush1.msra.mxu0 %v438
        %1088 = vmatprep.subr.mxu0 %v437
        %1089 = vmatpush1.msra.mxu0 %v436
        %1090 = vmatprep.subr.mxu0 0.0
        %1091 = vmatpush2.msra.mxu0 0.0
        %1092 = vmatprep.subr.mxu0 0.0
        %1093 = vmatpush2.msra.mxu0 0.0
        %1094 = vmatprep.subr.mxu0 0.0
        %1095 = vmatpush2.msra.mxu0 0.0
        %1096 = vmatprep.subr.mxu0 0.0
        %1097 = vmatpush2.msra.mxu0 0.0
        %1098 = vmatprep.subr.mxu0 0.0
        %1099 = vmatpush2.msra.mxu0 0.0
        %1100 = vmatprep.subr.mxu0 0.0
        %1101 = vmatpush2.msra.mxu0 0.0
        %1102 = vmatprep.subr.mxu0 0.0
        %1103 = vmatpush2.msra.mxu0 0.0
        %1104 = vmatprep.subr.mxu0 0.0
        %1105 = vmatpush2.msra.mxu0 0.0
        %1106 = vmatprep.subr.mxu0 0.0
        %1107 = vmatpush2.msra.mxu0 0.0
        %1108 = vmatprep.subr.mxu0 0.0
        %1109 = vmatpush2.msra.mxu0 0.0
        %1110 = vmatprep.subr.mxu0 0.0
        %1111 = vmatpush2.msra.mxu0 0.0
        %1112 = vmatprep.subr.mxu0 0.0
        %1113 = vmatpush2.msra.mxu0 0.0
        %1114 = vmatprep.subr.mxu0 0.0
        %1115 = vmatpush2.msra.mxu0 0.0
        %1116 = vmatprep.subr.mxu0 0.0
        %1117 = vmatpush2.msra.mxu0 0.0
        %1118 = vmatprep.subr.mxu0 0.0
        %1119 = vmatpush2.msra.mxu0 0.0
        %1120 = vmatprep.subr.mxu0 0.0
        %1121 = vmatpush2.msra.mxu0 0.0
        %1122 = vmatprep.mubr.f32.mxu0 0.0
        %1123 = vmatmul.mubr.f32.gmra.mxu0 %v683
        %v1124 = vpop.f32.mrf.mxu0
        %v1125 = vadd.f32 0.0, %v1124
        %v1126 = vpop.f32.mrf.mxu0
        %v1127 = vadd.f32 0.0, %v1126
        %1128 = vmatprep.mubr.f32.mxu0 0.0
        %1129 = vmatmul.mubr.f32.gmra.mxu0 %v686
        %v1130 = vpop.f32.mrf.mxu0
        %v1131 = vadd.f32 0.0, %v1130
        %v1132 = vpop.f32.mrf.mxu0
        %v1133 = vadd.f32 0.0, %v1132
        %1134 = vmatprep.mubr.f32.mxu0 0.0
        %1135 = vmatmul.mubr.f32.gmra.mxu0 %v689
        %v1136 = vpop.f32.mrf.mxu0
        %v1137 = vadd.f32 0.0, %v1136
        %v1138 = vpop.f32.mrf.mxu0
        %v1139 = vadd.f32 0.0, %v1138
        %1140 = vdwg.mxu0
        %1141 = vmatprep.subr.mxu0 0.0
        %1142 = vmatpush1.msra.mxu0 0.0
        %1143 = vmatprep.subr.mxu0 0.0
        %1144 = vmatpush1.msra.mxu0 0.0
        %1145 = vmatprep.subr.mxu0 0.0
        %1146 = vmatpush1.msra.mxu0 0.0
        %1147 = vmatprep.subr.mxu0 0.0
        %1148 = vmatpush1.msra.mxu0 0.0
        %1149 = vmatprep.subr.mxu0 0.0
        %1150 = vmatpush1.msra.mxu0 0.0
        %1151 = vmatprep.subr.mxu0 %v571
        %1152 = vmatpush1.msra.mxu0 %v568
        %1153 = vmatprep.subr.mxu0 %v429
        %1154 = vmatpush1.msra.mxu0 %v428
        %1155 = vmatprep.subr.mxu0 %v427
        %1156 = vmatpush1.msra.mxu0 %v426
        %1157 = vmatprep.subr.mxu0 %v425
        %1158 = vmatpush1.msra.mxu0 %v424
        %1159 = vmatprep.subr.mxu0 %v423
        %1160 = vmatpush1.msra.mxu0 %v422
        %1161 = vmatprep.subr.mxu0 %v421
        %1162 = vmatpush1.msra.mxu0 %v420
        %1163 = vmatprep.subr.mxu0 %v419
        %1164 = vmatpush1.msra.mxu0 %v418
        %1165 = vmatprep.subr.mxu0 %v417
        %1166 = vmatpush1.msra.mxu0 %v416
        %1167 = vmatprep.subr.mxu0 %v415
        %1168 = vmatpush1.msra.mxu0 %v414
        %1169 = vmatprep.subr.mxu0 %v413
        %1170 = vmatpush1.msra.mxu0 %v412
        %1171 = vmatprep.subr.mxu0 %v411
        %1172 = vmatpush1.msra.mxu0 %v410
        %1173 = vmatprep.subr.mxu0 0.0
        %1174 = vmatpush2.msra.mxu0 0.0
        %1175 = vmatprep.subr.mxu0 0.0
        %1176 = vmatpush2.msra.mxu0 0.0
        %1177 = vmatprep.subr.mxu0 0.0
        %1178 = vmatpush2.msra.mxu0 0.0
        %1179 = vmatprep.subr.mxu0 0.0
        %1180 = vmatpush2.msra.mxu0 0.0
        %1181 = vmatprep.subr.mxu0 0.0
        %1182 = vmatpush2.msra.mxu0 0.0
        %1183 = vmatprep.subr.mxu0 0.0
        %1184 = vmatpush2.msra.mxu0 0.0
        %1185 = vmatprep.subr.mxu0 0.0
        %1186 = vmatpush2.msra.mxu0 0.0
        %1187 = vmatprep.subr.mxu0 0.0
        %1188 = vmatpush2.msra.mxu0 0.0
        %1189 = vmatprep.subr.mxu0 0.0
        %1190 = vmatpush2.msra.mxu0 0.0
        %1191 = vmatprep.subr.mxu0 0.0
        %1192 = vmatpush2.msra.mxu0 0.0
        %1193 = vmatprep.subr.mxu0 0.0
        %1194 = vmatpush2.msra.mxu0 0.0
        %1195 = vmatprep.subr.mxu0 0.0
        %1196 = vmatpush2.msra.mxu0 0.0
        %1197 = vmatprep.subr.mxu0 0.0
        %1198 = vmatpush2.msra.mxu0 0.0
        %1199 = vmatprep.subr.mxu0 0.0
        %1200 = vmatpush2.msra.mxu0 0.0
        %1201 = vmatprep.subr.mxu0 0.0
        %1202 = vmatpush2.msra.mxu0 0.0
        %1203 = vmatprep.subr.mxu0 0.0
        %1204 = vmatpush2.msra.mxu0 0.0
        %1205 = vmatprep.mubr.f32.mxu0 0.0
        %1206 = vmatmul.mubr.f32.gmra.mxu0 %v460
        %v1207 = vpop.f32.mrf.mxu0
        %v1208 = vadd.f32 %v1125, %v1207
        %v1209 = vpop.f32.mrf.mxu0
        %v1210 = vadd.f32 %v1127, %v1209
        %1211 = vmatprep.mubr.f32.mxu0 0.0
        %1212 = vmatmul.mubr.f32.gmra.mxu0 %v463
        %v1213 = vpop.f32.mrf.mxu0
        %v1214 = vadd.f32 %v1131, %v1213
        %v1215 = vpop.f32.mrf.mxu0
        %v1216 = vadd.f32 %v1133, %v1215
        %1217 = vmatprep.mubr.f32.mxu0 0.0
        %1218 = vmatmul.mubr.f32.gmra.mxu0 %v466
        %v1219 = vpop.f32.mrf.mxu0
        %v1220 = vadd.f32 %v1137, %v1219
        %v1221 = vpop.f32.mrf.mxu0
        %v1222 = vadd.f32 %v1139, %v1221
        %1223 = vdwg.mxu0
        %1224 = vmatprep.subr.mxu0 0.0
        %1225 = vmatpush1.msra.mxu0 0.0
        %1226 = vmatprep.subr.mxu0 0.0
        %1227 = vmatpush1.msra.mxu0 0.0
        %1228 = vmatprep.subr.mxu0 0.0
        %1229 = vmatpush1.msra.mxu0 0.0
        %1230 = vmatprep.subr.mxu0 0.0
        %1231 = vmatpush1.msra.mxu0 0.0
        %1232 = vmatprep.subr.mxu0 0.0
        %1233 = vmatpush1.msra.mxu0 0.0
        %1234 = vmatprep.subr.mxu0 %v695
        %1235 = vmatpush1.msra.mxu0 %v692
        %1236 = vmatprep.subr.mxu0 %v679
        %1237 = vmatpush1.msra.mxu0 %v678
        %1238 = vmatprep.subr.mxu0 %v677
        %1239 = vmatpush1.msra.mxu0 %v676
        %1240 = vmatprep.subr.mxu0 %v675
        %1241 = vmatpush1.msra.mxu0 %v674
        %1242 = vmatprep.subr.mxu0 %v673
        %1243 = vmatpush1.msra.mxu0 %v672
        %1244 = vmatprep.subr.mxu0 %v671
        %1245 = vmatpush1.msra.mxu0 %v670
        %1246 = vmatprep.subr.mxu0 %v669
        %1247 = vmatpush1.msra.mxu0 %v668
        %1248 = vmatprep.subr.mxu0 %v667
        %1249 = vmatpush1.msra.mxu0 %v666
        %1250 = vmatprep.subr.mxu0 %v665
        %1251 = vmatpush1.msra.mxu0 %v664
        %1252 = vmatprep.subr.mxu0 %v663
        %1253 = vmatpush1.msra.mxu0 %v662
        %1254 = vmatprep.subr.mxu0 %v661
        %1255 = vmatpush1.msra.mxu0 %v660
        %1256 = vmatprep.subr.mxu0 0.0
        %1257 = vmatpush2.msra.mxu0 0.0
        %1258 = vmatprep.subr.mxu0 0.0
        %1259 = vmatpush2.msra.mxu0 0.0
        %1260 = vmatprep.subr.mxu0 0.0
        %1261 = vmatpush2.msra.mxu0 0.0
        %1262 = vmatprep.subr.mxu0 0.0
        %1263 = vmatpush2.msra.mxu0 0.0
        %1264 = vmatprep.subr.mxu0 0.0
        %1265 = vmatpush2.msra.mxu0 0.0
        %1266 = vmatprep.subr.mxu0 0.0
        %1267 = vmatpush2.msra.mxu0 0.0
        %1268 = vmatprep.subr.mxu0 0.0
        %1269 = vmatpush2.msra.mxu0 0.0
        %1270 = vmatprep.subr.mxu0 0.0
        %1271 = vmatpush2.msra.mxu0 0.0
        %1272 = vmatprep.subr.mxu0 0.0
        %1273 = vmatpush2.msra.mxu0 0.0
        %1274 = vmatprep.subr.mxu0 0.0
        %1275 = vmatpush2.msra.mxu0 0.0
        %1276 = vmatprep.subr.mxu0 0.0
        %1277 = vmatpush2.msra.mxu0 0.0
        %1278 = vmatprep.subr.mxu0 0.0
        %1279 = vmatpush2.msra.mxu0 0.0
        %1280 = vmatprep.subr.mxu0 0.0
        %1281 = vmatpush2.msra.mxu0 0.0
        %1282 = vmatprep.subr.mxu0 0.0
        %1283 = vmatpush2.msra.mxu0 0.0
        %1284 = vmatprep.subr.mxu0 0.0
        %1285 = vmatpush2.msra.mxu0 0.0
        %1286 = vmatprep.subr.mxu0 0.0
        %1287 = vmatpush2.msra.mxu0 0.0
        %1288 = vmatprep.mubr.f32.mxu0 0.0
        %1289 = vmatmul.mubr.f32.gmra.mxu0 %v813
        %v1290 = vpop.f32.mrf.mxu0
        %v1291 = vadd.f32 0.0, %v1290
        %v1292 = vpop.f32.mrf.mxu0
        %v1293 = vadd.f32 0.0, %v1292
        %1294 = vmatprep.mubr.f32.mxu0 0.0
        %1295 = vmatmul.mubr.f32.gmra.mxu0 %v816
        %v1296 = vpop.f32.mrf.mxu0
        %v1297 = vadd.f32 0.0, %v1296
        %v1298 = vpop.f32.mrf.mxu0
        %v1299 = vadd.f32 0.0, %v1298
        %1300 = vmatprep.mubr.f32.mxu0 0.0
        %1301 = vmatmul.mubr.f32.gmra.mxu0 %v819
        %v1302 = vpop.f32.mrf.mxu0
        %v1303 = vadd.f32 0.0, %v1302
        %v1304 = vpop.f32.mrf.mxu0
        %v1305 = vadd.f32 0.0, %v1304
        %1306 = vdwg.mxu0
        %v1307 = vadd.f32 %v1208, %v1291
        %v1308 = vadd.f32 %v1210, %v1293
        %v1309 = vadd.f32 %v1214, %v1297
        %v1310 = vadd.f32 %v1216, %v1299
        %v1311 = vadd.f32 %v1220, %v1303
        %v1312 = vadd.f32 %v1222, %v1305
        %1313 = vmatprep.subr.mxu0 0.0
        %1314 = vmatpush1.msra.mxu0 0.0
        %1315 = vmatprep.subr.mxu0 0.0
        %1316 = vmatpush1.msra.mxu0 0.0
        %1317 = vmatprep.subr.mxu0 0.0
        %1318 = vmatpush1.msra.mxu0 0.0
        %1319 = vmatprep.subr.mxu0 0.0
        %1320 = vmatpush1.msra.mxu0 0.0
        %1321 = vmatprep.subr.mxu0 0.0
        %1322 = vmatpush1.msra.mxu0 0.0
        %1323 = vmatprep.subr.mxu0 %v825
        %1324 = vmatpush1.msra.mxu0 %v822
        %1325 = vmatprep.subr.mxu0 %v809
        %1326 = vmatpush1.msra.mxu0 %v808
        %1327 = vmatprep.subr.mxu0 %v807
        %1328 = vmatpush1.msra.mxu0 %v806
        %1329 = vmatprep.subr.mxu0 %v805
        %1330 = vmatpush1.msra.mxu0 %v804
        %1331 = vmatprep.subr.mxu0 %v803
        %1332 = vmatpush1.msra.mxu0 %v802
        %1333 = vmatprep.subr.mxu0 %v801
        %1334 = vmatpush1.msra.mxu0 %v800
        %1335 = vmatprep.subr.mxu0 %v799
        %1336 = vmatpush1.msra.mxu0 %v798
        %1337 = vmatprep.subr.mxu0 %v797
        %1338 = vmatpush1.msra.mxu0 %v796
        %1339 = vmatprep.subr.mxu0 %v795
        %1340 = vmatpush1.msra.mxu0 %v794
        %1341 = vmatprep.subr.mxu0 %v793
        %1342 = vmatpush1.msra.mxu0 %v792
        %1343 = vmatprep.subr.mxu0 %v791
        %1344 = vmatpush1.msra.mxu0 %v790
        %1345 = vmatprep.subr.mxu0 0.0
        %1346 = vmatpush2.msra.mxu0 0.0
        %1347 = vmatprep.subr.mxu0 0.0
        %1348 = vmatpush2.msra.mxu0 0.0
        %1349 = vmatprep.subr.mxu0 0.0
        %1350 = vmatpush2.msra.mxu0 0.0
        %1351 = vmatprep.subr.mxu0 0.0
        %1352 = vmatpush2.msra.mxu0 0.0
        %1353 = vmatprep.subr.mxu0 0.0
        %1354 = vmatpush2.msra.mxu0 0.0
        %1355 = vmatprep.subr.mxu0 0.0
        %1356 = vmatpush2.msra.mxu0 0.0
        %1357 = vmatprep.subr.mxu0 0.0
        %1358 = vmatpush2.msra.mxu0 0.0
        %1359 = vmatprep.subr.mxu0 0.0
        %1360 = vmatpush2.msra.mxu0 0.0
        %1361 = vmatprep.subr.mxu0 0.0
        %1362 = vmatpush2.msra.mxu0 0.0
        %1363 = vmatprep.subr.mxu0 0.0
        %1364 = vmatpush2.msra.mxu0 0.0
        %1365 = vmatprep.subr.mxu0 0.0
        %1366 = vmatpush2.msra.mxu0 0.0
        %1367 = vmatprep.subr.mxu0 0.0
        %1368 = vmatpush2.msra.mxu0 0.0
        %1369 = vmatprep.subr.mxu0 0.0
        %1370 = vmatpush2.msra.mxu0 0.0
        %1371 = vmatprep.subr.mxu0 0.0
        %1372 = vmatpush2.msra.mxu0 0.0
        %1373 = vmatprep.subr.mxu0 0.0
        %1374 = vmatpush2.msra.mxu0 0.0
        %1375 = vmatprep.subr.mxu0 0.0
        %1376 = vmatpush2.msra.mxu0 0.0
        %1377 = vmatprep.mubr.f32.mxu0 0.0
        %1378 = vmatmul.mubr.f32.gmra.mxu0 %v943
        %v1379 = vpop.f32.mrf.mxu0
        %v1380 = vadd.f32 0.0, %v1379
        %v1381 = vpop.f32.mrf.mxu0
        %v1382 = vadd.f32 0.0, %v1381
        %1383 = vmatprep.mubr.f32.mxu0 0.0
        %1384 = vmatmul.mubr.f32.gmra.mxu0 %v946
        %v1385 = vpop.f32.mrf.mxu0
        %v1386 = vadd.f32 0.0, %v1385
        %v1387 = vpop.f32.mrf.mxu0
        %v1388 = vadd.f32 0.0, %v1387
        %1389 = vmatprep.mubr.f32.mxu0 0.0
        %1390 = vmatmul.mubr.f32.gmra.mxu0 %v949
        %v1391 = vpop.f32.mrf.mxu0
        %v1392 = vadd.f32 0.0, %v1391
        %v1393 = vpop.f32.mrf.mxu0
        %v1394 = vadd.f32 0.0, %v1393
        %1395 = vdwg.mxu0
        %v1396 = vadd.f32 %v1307, %v1380
        %v1397 = vadd.f32 %v1308, %v1382
        %v1398 = vadd.f32 %v1309, %v1386
        %v1399 = vadd.f32 %v1310, %v1388
        %v1400 = vadd.f32 %v1311, %v1392
        %v1401 = vadd.f32 %v1312, %v1394
        %v1402 = vld [vmem:[%s302 + $0x17] sm:$0xff]
        %v1403 = vld [vmem:[%s302 + $0x1f] sm:$0xff]
        %v1404 = vld [vmem:[%s302 + $0x27] sm:$0x1f]
        %v1406 = vsel %vm458, %v1402, 0
        %v1409 = vsel %vm458, %v1403, 0
        %v1412 = vsel %vm458, %v1404, 0
        %1414 = vmatprep.subr.mxu0 0.0
        %1415 = vmatpush1.msra.mxu0 0.0
        %1416 = vmatprep.subr.mxu0 0.0
        %1417 = vmatpush1.msra.mxu0 0.0
        %1418 = vmatprep.subr.mxu0 0.0
        %1419 = vmatpush1.msra.mxu0 0.0
        %1420 = vmatprep.subr.mxu0 0.0
        %1421 = vmatpush1.msra.mxu0 0.0
        %1422 = vmatprep.subr.mxu0 0.0
        %1423 = vmatpush1.msra.mxu0 0.0
        %1424 = vmatprep.subr.mxu0 %v955
        %1425 = vmatpush1.msra.mxu0 %v952
        %1426 = vmatprep.subr.mxu0 %v939
        %1427 = vmatpush1.msra.mxu0 %v938
        %1428 = vmatprep.subr.mxu0 %v937
        %1429 = vmatpush1.msra.mxu0 %v936
        %1430 = vmatprep.subr.mxu0 %v935
        %1431 = vmatpush1.msra.mxu0 %v934
        %1432 = vmatprep.subr.mxu0 %v933
        %1433 = vmatpush1.msra.mxu0 %v932
        %1434 = vmatprep.subr.mxu0 %v931
        %1435 = vmatpush1.msra.mxu0 %v930
        %1436 = vmatprep.subr.mxu0 %v929
        %1437 = vmatpush1.msra.mxu0 %v928
        %1438 = vmatprep.subr.mxu0 %v927
        %1439 = vmatpush1.msra.mxu0 %v926
        %1440 = vmatprep.subr.mxu0 %v925
        %1441 = vmatpush1.msra.mxu0 %v924
        %1442 = vmatprep.subr.mxu0 %v923
        %1443 = vmatpush1.msra.mxu0 %v922
        %1444 = vmatprep.subr.mxu0 %v921
        %1445 = vmatpush1.msra.mxu0 %v920
        %1446 = vmatprep.subr.mxu0 0.0
        %1447 = vmatpush2.msra.mxu0 0.0
        %1448 = vmatprep.subr.mxu0 0.0
        %1449 = vmatpush2.msra.mxu0 0.0
        %1450 = vmatprep.subr.mxu0 0.0
        %1451 = vmatpush2.msra.mxu0 0.0
        %1452 = vmatprep.subr.mxu0 0.0
        %1453 = vmatpush2.msra.mxu0 0.0
        %1454 = vmatprep.subr.mxu0 0.0
        %1455 = vmatpush2.msra.mxu0 0.0
        %1456 = vmatprep.subr.mxu0 0.0
        %1457 = vmatpush2.msra.mxu0 0.0
        %1458 = vmatprep.subr.mxu0 0.0
        %1459 = vmatpush2.msra.mxu0 0.0
        %1460 = vmatprep.subr.mxu0 0.0
        %1461 = vmatpush2.msra.mxu0 0.0
        %1462 = vmatprep.subr.mxu0 0.0
        %1463 = vmatpush2.msra.mxu0 0.0
        %1464 = vmatprep.subr.mxu0 0.0
        %1465 = vmatpush2.msra.mxu0 0.0
        %1466 = vmatprep.subr.mxu0 0.0
        %1467 = vmatpush2.msra.mxu0 0.0
        %1468 = vmatprep.subr.mxu0 0.0
        %1469 = vmatpush2.msra.mxu0 0.0
        %1470 = vmatprep.subr.mxu0 0.0
        %1471 = vmatpush2.msra.mxu0 0.0
        %1472 = vmatprep.subr.mxu0 0.0
        %1473 = vmatpush2.msra.mxu0 0.0
        %1474 = vmatprep.subr.mxu0 0.0
        %1475 = vmatpush2.msra.mxu0 0.0
        %1476 = vmatprep.subr.mxu0 0.0
        %1477 = vmatpush2.msra.mxu0 0.0
        %1478 = vmatprep.mubr.f32.mxu0 0.0
        %1479 = vmatmul.mubr.f32.gmra.mxu0 %v1406
        %v1480 = vpop.f32.mrf.mxu0
        %v1481 = vadd.f32 0.0, %v1480
        %v1482 = vpop.f32.mrf.mxu0
        %v1483 = vadd.f32 0.0, %v1482
        %1484 = vmatprep.mubr.f32.mxu0 0.0
        %1485 = vmatmul.mubr.f32.gmra.mxu0 %v1409
        %v1486 = vpop.f32.mrf.mxu0
        %v1487 = vadd.f32 0.0, %v1486
        %v1488 = vpop.f32.mrf.mxu0
        %v1489 = vadd.f32 0.0, %v1488
        %1490 = vmatprep.mubr.f32.mxu0 0.0
        %1491 = vmatmul.mubr.f32.gmra.mxu0 %v1412
        %v1492 = vpop.f32.mrf.mxu0
        %v1493 = vadd.f32 0.0, %v1492
        %v1494 = vpop.f32.mrf.mxu0
        %v1495 = vadd.f32 0.0, %v1494
        %1496 = vdwg.mxu0
        %v1497 = vadd.f32 %v1396, %v1481
        %v1498 = vadd.f32 %v1397, %v1483
        %v1499 = vadd.f32 %v1398, %v1487
        %v1500 = vadd.f32 %v1399, %v1489
        %v1501 = vadd.f32 %v1400, %v1493
        %v1502 = vadd.f32 %v1401, %v1495
        %v1503 = vadd.f32 %v1497, %v308
        %v1504 = vadd.f32 %v1498, %v312
        %v1505 = vadd.f32 %v1499, %v308
        %v1506 = vadd.f32 %v1500, %v312
        %v1507 = vadd.f32 %v1501, %v308
        %v1508 = vadd.f32 %v1502, %v312
        %v1509 = vmax.f32 %v1503, 0.0
        %v1510 = vmax.f32 %v1504, 0.0
        %v1511 = vmax.f32 %v1505, 0.0
        %v1512 = vmax.f32 %v1506, 0.0
        %v1513 = vmax.f32 %v1507, 0.0
        %v1514 = vmax.f32 %v1508, 0.0
        %v1515 = vmax.f32 %v1052, %v1509
        %v1516 = vmax.f32 %v1053, %v1510
        %v1517 = vmax.f32 %v1054, %v1511
        %v1518 = vmax.f32 %v1055, %v1512
        %v1519 = vmax.f32 %v1056, %v1513
        %v1520 = vmax.f32 %v1057, %v1514
        %v1521 = vmax.f32 %v1515, %v1516
        %v1522 = vmax.f32 %v1517, %v1518
        %v1523 = vmax.f32 %v1519, %v1520
        %1524 = vst [vmem:[#allocation2] sm:$0xff] %v1521
        %1525 = vst [vmem:[#allocation2 + $0x8] sm:$0xff] %v1522
        %1526 = vst [vmem:[#allocation2 + $0x10] sm:$0x1f] %v1523
        %v1527 = vld [vmem:[%s302 + $0x2c] sm:$0xff]
        %v1528 = vld [vmem:[%s302 + $0x34] sm:$0xff]
        %v1529 = vld [vmem:[%s302 + $0x3c] sm:$0x1f]
        %v1530 = vld [vmem:[%s1] sm:$0xff]
        %v1531 = vld [vmem:[%s1 + $0x8] sm:$0xff]
        %v1532 = vld [vmem:[%s1 + $0x10] sm:$0xff]
        %v1533 = vld [vmem:[%s1 + $0x18] sm:$0xff]
        %v1534 = vld [vmem:[%s1 + $0x20] sm:$0xff]
        %v1535 = vld [vmem:[%s1 + $0x28] sm:$0xff]
        %v1536 = vld [vmem:[%s1 + $0x30] sm:$0xff]
        %v1537 = vld [vmem:[%s1 + $0x38] sm:$0xff]
        %v1538 = vld [vmem:[%s1 + $0x40] sm:$0xff]
        %v1539 = vld [vmem:[%s1 + $0x48] sm:$0xff]
        %v1540 = vld [vmem:[%s1 + $0x50] sm:$0xff]
        %v1541 = vld [vmem:[%s1 + $0x58] sm:$0xff]
        %v1542 = vld [vmem:[%s1 + $0x60] sm:$0xff]
        %v1543 = vld [vmem:[%s1 + $0x68] sm:$0xff]
        %v1544 = vld [vmem:[%s1 + $0x70] sm:$0xff]
        %v1545 = vld [vmem:[%s1 + $0x78] sm:$0xff]
        %v1546 = vld [vmem:[%s1 + $0x80] sm:$0xff]
        %v1547 = vld [vmem:[%s1 + $0x88] sm:$0xff]
        %v1548 = vld [vmem:[%s1 + $0x90] sm:$0xff]
        %v1549 = vld [vmem:[%s1 + $0x98] sm:$0xff]
        %v1550 = vld [vmem:[%s1 + $0xa0] sm:$0xf]
        %v1551 = vld [vmem:[%s1 + $0xa8] sm:$0xf]
        %v1552 = vld [vmem:[%s302 + $0x42] sm:$0xff]
        %v1553 = vld [vmem:[%s302 + $0x4a] sm:$0xff]
        %v1554 = vld [vmem:[%s302 + $0x52] sm:$0x1f]
        %v1555 = vld [vmem:[%s435] sm:$0xff]
        %v1556 = vld [vmem:[%s435 + $0x8] sm:$0xff]
        %v1557 = vld [vmem:[%s435 + $0x10] sm:$0xff]
        %v1558 = vld [vmem:[%s435 + $0x18] sm:$0xff]
        %v1559 = vld [vmem:[%s435 + $0x20] sm:$0xff]
        %v1560 = vld [vmem:[%s435 + $0x28] sm:$0xff]
        %v1561 = vld [vmem:[%s435 + $0x30] sm:$0xff]
        %v1562 = vld [vmem:[%s435 + $0x38] sm:$0xff]
        %v1563 = vld [vmem:[%s435 + $0x40] sm:$0xff]
        %v1564 = vld [vmem:[%s435 + $0x48] sm:$0xff]
        %v1565 = vld [vmem:[%s435 + $0x50] sm:$0xff]
        %v1566 = vld [vmem:[%s435 + $0x58] sm:$0xff]
        %v1567 = vld [vmem:[%s435 + $0x60] sm:$0xff]
        %v1568 = vld [vmem:[%s435 + $0x68] sm:$0xff]
        %v1569 = vld [vmem:[%s435 + $0x70] sm:$0xff]
        %v1570 = vld [vmem:[%s435 + $0x78] sm:$0xff]
        %v1571 = vld [vmem:[%s435 + $0x80] sm:$0xff]
        %v1572 = vld [vmem:[%s435 + $0x88] sm:$0xff]
        %v1573 = vld [vmem:[%s435 + $0x90] sm:$0xff]
        %v1574 = vld [vmem:[%s435 + $0x98] sm:$0xff]
        %v1575 = vld [vmem:[%s435 + $0xa0] sm:$0xf]
        %v1576 = vld [vmem:[%s435 + $0xa8] sm:$0xf]
        %v1578 = vsel %vm458, %v1552, 0
        %v1581 = vsel %vm458, %v1553, 0
        %v1584 = vsel %vm458, %v1554, 0
        %v1587 = vsel %vm468, %v1575, 0
        %v1590 = vsel %vm468, %v1576, 0
        %1592 = vmatprep.subr.mxu0 0.0
        %1593 = vmatpush1.msra.mxu0 0.0
        %1594 = vmatprep.subr.mxu0 0.0
        %1595 = vmatpush1.msra.mxu0 0.0
        %1596 = vmatprep.subr.mxu0 0.0
        %1597 = vmatpush1.msra.mxu0 0.0
        %1598 = vmatprep.subr.mxu0 0.0
        %1599 = vmatpush1.msra.mxu0 0.0
        %1600 = vmatprep.subr.mxu0 0.0
        %1601 = vmatpush1.msra.mxu0 0.0
        %1602 = vmatprep.subr.mxu0 %v1590
        %1603 = vmatpush1.msra.mxu0 %v1587
        %1604 = vmatprep.subr.mxu0 %v1574
        %1605 = vmatpush1.msra.mxu0 %v1573
        %1606 = vmatprep.subr.mxu0 %v1572
        %1607 = vmatpush1.msra.mxu0 %v1571
        %1608 = vmatprep.subr.mxu0 %v1570
        %1609 = vmatpush1.msra.mxu0 %v1569
        %1610 = vmatprep.subr.mxu0 %v1568
        %1611 = vmatpush1.msra.mxu0 %v1567
        %1612 = vmatprep.subr.mxu0 %v1566
        %1613 = vmatpush1.msra.mxu0 %v1565
        %1614 = vmatprep.subr.mxu0 %v1564
        %1615 = vmatpush1.msra.mxu0 %v1563
        %1616 = vmatprep.subr.mxu0 %v1562
        %1617 = vmatpush1.msra.mxu0 %v1561
        %1618 = vmatprep.subr.mxu0 %v1560
        %1619 = vmatpush1.msra.mxu0 %v1559
        %1620 = vmatprep.subr.mxu0 %v1558
        %1621 = vmatpush1.msra.mxu0 %v1557
        %1622 = vmatprep.subr.mxu0 %v1556
        %1623 = vmatpush1.msra.mxu0 %v1555
        %1624 = vmatprep.subr.mxu0 0.0
        %1625 = vmatpush2.msra.mxu0 0.0
        %1626 = vmatprep.subr.mxu0 0.0
        %1627 = vmatpush2.msra.mxu0 0.0
        %1628 = vmatprep.subr.mxu0 0.0
        %1629 = vmatpush2.msra.mxu0 0.0
        %1630 = vmatprep.subr.mxu0 0.0
        %1631 = vmatpush2.msra.mxu0 0.0
        %1632 = vmatprep.subr.mxu0 0.0
        %1633 = vmatpush2.msra.mxu0 0.0
        %1634 = vmatprep.subr.mxu0 0.0
        %1635 = vmatpush2.msra.mxu0 0.0
        %1636 = vmatprep.subr.mxu0 0.0
        %1637 = vmatpush2.msra.mxu0 0.0
        %1638 = vmatprep.subr.mxu0 0.0
        %1639 = vmatpush2.msra.mxu0 0.0
        %1640 = vmatprep.subr.mxu0 0.0
        %1641 = vmatpush2.msra.mxu0 0.0
        %1642 = vmatprep.subr.mxu0 0.0
        %1643 = vmatpush2.msra.mxu0 0.0
        %1644 = vmatprep.subr.mxu0 0.0
        %1645 = vmatpush2.msra.mxu0 0.0
        %1646 = vmatprep.subr.mxu0 0.0
        %1647 = vmatpush2.msra.mxu0 0.0
        %1648 = vmatprep.subr.mxu0 0.0
        %1649 = vmatpush2.msra.mxu0 0.0
        %1650 = vmatprep.subr.mxu0 0.0
        %1651 = vmatpush2.msra.mxu0 0.0
        %1652 = vmatprep.subr.mxu0 0.0
        %1653 = vmatpush2.msra.mxu0 0.0
        %1654 = vmatprep.subr.mxu0 0.0
        %1655 = vmatpush2.msra.mxu0 0.0
        %1656 = vmatprep.mubr.f32.mxu0 0.0
        %1657 = vmatmul.mubr.f32.gmra.mxu0 %v1578
        %v1658 = vpop.f32.mrf.mxu0
        %v1659 = vadd.f32 0.0, %v1658
        %v1660 = vpop.f32.mrf.mxu0
        %v1661 = vadd.f32 0.0, %v1660
        %1662 = vmatprep.mubr.f32.mxu0 0.0
        %1663 = vmatmul.mubr.f32.gmra.mxu0 %v1581
        %v1664 = vpop.f32.mrf.mxu0
        %v1665 = vadd.f32 0.0, %v1664
        %v1666 = vpop.f32.mrf.mxu0
        %v1667 = vadd.f32 0.0, %v1666
        %1668 = vmatprep.mubr.f32.mxu0 0.0
        %1669 = vmatmul.mubr.f32.gmra.mxu0 %v1584
        %v1670 = vpop.f32.mrf.mxu0
        %v1671 = vadd.f32 0.0, %v1670
        %v1672 = vpop.f32.mrf.mxu0
        %v1673 = vadd.f32 0.0, %v1672
        %1674 = vdwg.mxu0
        %v1676 = vsel %vm458, %v1527, 0
        %v1679 = vsel %vm458, %v1528, 0
        %v1682 = vsel %vm458, %v1529, 0
        %v1685 = vsel %vm468, %v1550, 0
        %v1688 = vsel %vm468, %v1551, 0
        %1690 = vmatprep.subr.mxu0 0.0
        %1691 = vmatpush1.msra.mxu0 0.0
        %1692 = vmatprep.subr.mxu0 0.0
        %1693 = vmatpush1.msra.mxu0 0.0
        %1694 = vmatprep.subr.mxu0 0.0
        %1695 = vmatpush1.msra.mxu0 0.0
        %1696 = vmatprep.subr.mxu0 0.0
        %1697 = vmatpush1.msra.mxu0 0.0
        %1698 = vmatprep.subr.mxu0 0.0
        %1699 = vmatpush1.msra.mxu0 0.0
        %1700 = vmatprep.subr.mxu0 %v1688
        %1701 = vmatpush1.msra.mxu0 %v1685
        %1702 = vmatprep.subr.mxu0 %v1549
        %1703 = vmatpush1.msra.mxu0 %v1548
        %1704 = vmatprep.subr.mxu0 %v1547
        %1705 = vmatpush1.msra.mxu0 %v1546
        %1706 = vmatprep.subr.mxu0 %v1545
        %1707 = vmatpush1.msra.mxu0 %v1544
        %1708 = vmatprep.subr.mxu0 %v1543
        %1709 = vmatpush1.msra.mxu0 %v1542
        %1710 = vmatprep.subr.mxu0 %v1541
        %1711 = vmatpush1.msra.mxu0 %v1540
        %1712 = vmatprep.subr.mxu0 %v1539
        %1713 = vmatpush1.msra.mxu0 %v1538
        %1714 = vmatprep.subr.mxu0 %v1537
        %1715 = vmatpush1.msra.mxu0 %v1536
        %1716 = vmatprep.subr.mxu0 %v1535
        %1717 = vmatpush1.msra.mxu0 %v1534
        %1718 = vmatprep.subr.mxu0 %v1533
        %1719 = vmatpush1.msra.mxu0 %v1532
        %1720 = vmatprep.subr.mxu0 %v1531
        %1721 = vmatpush1.msra.mxu0 %v1530
        %1722 = vmatprep.subr.mxu0 0.0
        %1723 = vmatpush2.msra.mxu0 0.0
        %1724 = vmatprep.subr.mxu0 0.0
        %1725 = vmatpush2.msra.mxu0 0.0
        %1726 = vmatprep.subr.mxu0 0.0
        %1727 = vmatpush2.msra.mxu0 0.0
        %1728 = vmatprep.subr.mxu0 0.0
        %1729 = vmatpush2.msra.mxu0 0.0
        %1730 = vmatprep.subr.mxu0 0.0
        %1731 = vmatpush2.msra.mxu0 0.0
        %1732 = vmatprep.subr.mxu0 0.0
        %1733 = vmatpush2.msra.mxu0 0.0
        %1734 = vmatprep.subr.mxu0 0.0
        %1735 = vmatpush2.msra.mxu0 0.0
        %1736 = vmatprep.subr.mxu0 0.0
        %1737 = vmatpush2.msra.mxu0 0.0
        %1738 = vmatprep.subr.mxu0 0.0
        %1739 = vmatpush2.msra.mxu0 0.0
        %1740 = vmatprep.subr.mxu0 0.0
        %1741 = vmatpush2.msra.mxu0 0.0
        %1742 = vmatprep.subr.mxu0 0.0
        %1743 = vmatpush2.msra.mxu0 0.0
        %1744 = vmatprep.subr.mxu0 0.0
        %1745 = vmatpush2.msra.mxu0 0.0
        %1746 = vmatprep.subr.mxu0 0.0
        %1747 = vmatpush2.msra.mxu0 0.0
        %1748 = vmatprep.subr.mxu0 0.0
        %1749 = vmatpush2.msra.mxu0 0.0
        %1750 = vmatprep.subr.mxu0 0.0
        %1751 = vmatpush2.msra.mxu0 0.0
        %1752 = vmatprep.subr.mxu0 0.0
        %1753 = vmatpush2.msra.mxu0 0.0
        %1754 = vmatprep.mubr.f32.mxu0 0.0
        %1755 = vmatmul.mubr.f32.gmra.mxu0 %v1676
        %v1756 = vpop.f32.mrf.mxu0
        %v1757 = vadd.f32 %v1659, %v1756
        %v1758 = vpop.f32.mrf.mxu0
        %v1759 = vadd.f32 %v1661, %v1758
        %1760 = vmatprep.mubr.f32.mxu0 0.0
        %1761 = vmatmul.mubr.f32.gmra.mxu0 %v1679
        %v1762 = vpop.f32.mrf.mxu0
        %v1763 = vadd.f32 %v1665, %v1762
        %v1764 = vpop.f32.mrf.mxu0
        %v1765 = vadd.f32 %v1667, %v1764
        %1766 = vmatprep.mubr.f32.mxu0 0.0
        %1767 = vmatmul.mubr.f32.gmra.mxu0 %v1682
        %v1768 = vpop.f32.mrf.mxu0
        %v1769 = vadd.f32 %v1671, %v1768
        %v1770 = vpop.f32.mrf.mxu0
        %v1771 = vadd.f32 %v1673, %v1770
        %1772 = vdwg.mxu0
        %v1773 = vld [vmem:[%s302 + $0x1] sm:$0xff]
        %v1774 = vld [vmem:[%s302 + $0x9] sm:$0xff]
        %v1775 = vld [vmem:[%s302 + $0x11] sm:$0x1f]
        %v1776 = vld [vmem:[%s659] sm:$0xff]
        %v1777 = vld [vmem:[%s659 + $0x8] sm:$0xff]
        %v1778 = vld [vmem:[%s659 + $0x10] sm:$0xff]
        %v1779 = vld [vmem:[%s659 + $0x18] sm:$0xff]
        %v1780 = vld [vmem:[%s659 + $0x20] sm:$0xff]
        %v1781 = vld [vmem:[%s659 + $0x28] sm:$0xff]
        %v1782 = vld [vmem:[%s659 + $0x30] sm:$0xff]
        %v1783 = vld [vmem:[%s659 + $0x38] sm:$0xff]
        %v1784 = vld [vmem:[%s659 + $0x40] sm:$0xff]
        %v1785 = vld [vmem:[%s659 + $0x48] sm:$0xff]
        %v1786 = vld [vmem:[%s659 + $0x50] sm:$0xff]
        %v1787 = vld [vmem:[%s659 + $0x58] sm:$0xff]
        %v1788 = vld [vmem:[%s659 + $0x60] sm:$0xff]
        %v1789 = vld [vmem:[%s659 + $0x68] sm:$0xff]
        %v1790 = vld [vmem:[%s659 + $0x70] sm:$0xff]
        %v1791 = vld [vmem:[%s659 + $0x78] sm:$0xff]
        %v1792 = vld [vmem:[%s659 + $0x80] sm:$0xff]
        %v1793 = vld [vmem:[%s659 + $0x88] sm:$0xff]
        %v1794 = vld [vmem:[%s659 + $0x90] sm:$0xff]
        %v1795 = vld [vmem:[%s659 + $0x98] sm:$0xff]
        %v1796 = vld [vmem:[%s659 + $0xa0] sm:$0xf]
        %v1797 = vld [vmem:[%s659 + $0xa8] sm:$0xf]
        %v1799 = vsel %vm458, %v1773, 0
        %v1802 = vsel %vm458, %v1774, 0
        %v1805 = vsel %vm458, %v1775, 0
        %v1808 = vsel %vm468, %v1796, 0
        %v1811 = vsel %vm468, %v1797, 0
        %1813 = vmatprep.subr.mxu0 0.0
        %1814 = vmatpush1.msra.mxu0 0.0
        %1815 = vmatprep.subr.mxu0 0.0
        %1816 = vmatpush1.msra.mxu0 0.0
        %1817 = vmatprep.subr.mxu0 0.0
        %1818 = vmatpush1.msra.mxu0 0.0
        %1819 = vmatprep.subr.mxu0 0.0
        %1820 = vmatpush1.msra.mxu0 0.0
        %1821 = vmatprep.subr.mxu0 0.0
        %1822 = vmatpush1.msra.mxu0 0.0
        %1823 = vmatprep.subr.mxu0 %v1811
        %1824 = vmatpush1.msra.mxu0 %v1808
        %1825 = vmatprep.subr.mxu0 %v1795
        %1826 = vmatpush1.msra.mxu0 %v1794
        %1827 = vmatprep.subr.mxu0 %v1793
        %1828 = vmatpush1.msra.mxu0 %v1792
        %1829 = vmatprep.subr.mxu0 %v1791
        %1830 = vmatpush1.msra.mxu0 %v1790
        %1831 = vmatprep.subr.mxu0 %v1789
        %1832 = vmatpush1.msra.mxu0 %v1788
        %1833 = vmatprep.subr.mxu0 %v1787
        %1834 = vmatpush1.msra.mxu0 %v1786
        %1835 = vmatprep.subr.mxu0 %v1785
        %1836 = vmatpush1.msra.mxu0 %v1784
        %1837 = vmatprep.subr.mxu0 %v1783
        %1838 = vmatpush1.msra.mxu0 %v1782
        %1839 = vmatprep.subr.mxu0 %v1781
        %1840 = vmatpush1.msra.mxu0 %v1780
        %1841 = vmatprep.subr.mxu0 %v1779
        %1842 = vmatpush1.msra.mxu0 %v1778
        %1843 = vmatprep.subr.mxu0 %v1777
        %1844 = vmatpush1.msra.mxu0 %v1776
        %1845 = vmatprep.subr.mxu0 0.0
        %1846 = vmatpush2.msra.mxu0 0.0
        %1847 = vmatprep.subr.mxu0 0.0
        %1848 = vmatpush2.msra.mxu0 0.0
        %1849 = vmatprep.subr.mxu0 0.0
        %1850 = vmatpush2.msra.mxu0 0.0
        %1851 = vmatprep.subr.mxu0 0.0
        %1852 = vmatpush2.msra.mxu0 0.0
        %1853 = vmatprep.subr.mxu0 0.0
        %1854 = vmatpush2.msra.mxu0 0.0
        %1855 = vmatprep.subr.mxu0 0.0
        %1856 = vmatpush2.msra.mxu0 0.0
        %1857 = vmatprep.subr.mxu0 0.0
        %1858 = vmatpush2.msra.mxu0 0.0
        %1859 = vmatprep.subr.mxu0 0.0
        %1860 = vmatpush2.msra.mxu0 0.0
        %1861 = vmatprep.subr.mxu0 0.0
        %1862 = vmatpush2.msra.mxu0 0.0
        %1863 = vmatprep.subr.mxu0 0.0
        %1864 = vmatpush2.msra.mxu0 0.0
        %1865 = vmatprep.subr.mxu0 0.0
        %1866 = vmatpush2.msra.mxu0 0.0
        %1867 = vmatprep.subr.mxu0 0.0
        %1868 = vmatpush2.msra.mxu0 0.0
        %1869 = vmatprep.subr.mxu0 0.0
        %1870 = vmatpush2.msra.mxu0 0.0
        %1871 = vmatprep.subr.mxu0 0.0
        %1872 = vmatpush2.msra.mxu0 0.0
        %1873 = vmatprep.subr.mxu0 0.0
        %1874 = vmatpush2.msra.mxu0 0.0
        %1875 = vmatprep.subr.mxu0 0.0
        %1876 = vmatpush2.msra.mxu0 0.0
        %1877 = vmatprep.mubr.f32.mxu0 0.0
        %1878 = vmatmul.mubr.f32.gmra.mxu0 %v1799
        %v1879 = vpop.f32.mrf.mxu0
        %v1880 = vadd.f32 0.0, %v1879
        %v1881 = vpop.f32.mrf.mxu0
        %v1882 = vadd.f32 0.0, %v1881
        %1883 = vmatprep.mubr.f32.mxu0 0.0
        %1884 = vmatmul.mubr.f32.gmra.mxu0 %v1802
        %v1885 = vpop.f32.mrf.mxu0
        %v1886 = vadd.f32 0.0, %v1885
        %v1887 = vpop.f32.mrf.mxu0
        %v1888 = vadd.f32 0.0, %v1887
        %1889 = vmatprep.mubr.f32.mxu0 0.0
        %1890 = vmatmul.mubr.f32.gmra.mxu0 %v1805
        %v1891 = vpop.f32.mrf.mxu0
        %v1892 = vadd.f32 0.0, %v1891
        %v1893 = vpop.f32.mrf.mxu0
        %v1894 = vadd.f32 0.0, %v1893
        %1895 = vdwg.mxu0
        %v1896 = vadd.f32 %v1757, %v1880
        %v1897 = vadd.f32 %v1759, %v1882
        %v1898 = vadd.f32 %v1763, %v1886
        %v1899 = vadd.f32 %v1765, %v1888
        %v1900 = vadd.f32 %v1769, %v1892
        %v1901 = vadd.f32 %v1771, %v1894
        %v1902 = vld [vmem:[%s302 + $0x17] sm:$0xff]
        %v1903 = vld [vmem:[%s302 + $0x1f] sm:$0xff]
        %v1904 = vld [vmem:[%s302 + $0x27] sm:$0x1f]
        %v1905 = vld [vmem:[%s789] sm:$0xff]
        %v1906 = vld [vmem:[%s789 + $0x8] sm:$0xff]
        %v1907 = vld [vmem:[%s789 + $0x10] sm:$0xff]
        %v1908 = vld [vmem:[%s789 + $0x18] sm:$0xff]
        %v1909 = vld [vmem:[%s789 + $0x20] sm:$0xff]
        %v1910 = vld [vmem:[%s789 + $0x28] sm:$0xff]
        %v1911 = vld [vmem:[%s789 + $0x30] sm:$0xff]
        %v1912 = vld [vmem:[%s789 + $0x38] sm:$0xff]
        %v1913 = vld [vmem:[%s789 + $0x40] sm:$0xff]
        %v1914 = vld [vmem:[%s789 + $0x48] sm:$0xff]
        %v1915 = vld [vmem:[%s789 + $0x50] sm:$0xff]
        %v1916 = vld [vmem:[%s789 + $0x58] sm:$0xff]
        %v1917 = vld [vmem:[%s789 + $0x60] sm:$0xff]
        %v1918 = vld [vmem:[%s789 + $0x68] sm:$0xff]
        %v1919 = vld [vmem:[%s789 + $0x70] sm:$0xff]
        %v1920 = vld [vmem:[%s789 + $0x78] sm:$0xff]
        %v1921 = vld [vmem:[%s789 + $0x80] sm:$0xff]
        %v1922 = vld [vmem:[%s789 + $0x88] sm:$0xff]
        %v1923 = vld [vmem:[%s789 + $0x90] sm:$0xff]
        %v1924 = vld [vmem:[%s789 + $0x98] sm:$0xff]
        %v1925 = vld [vmem:[%s789 + $0xa0] sm:$0xf]
        %v1926 = vld [vmem:[%s789 + $0xa8] sm:$0xf]
        %v1928 = vsel %vm458, %v1902, 0
        %v1931 = vsel %vm458, %v1903, 0
        %v1934 = vsel %vm458, %v1904, 0
        %v1937 = vsel %vm468, %v1925, 0
        %v1940 = vsel %vm468, %v1926, 0
        %1942 = vmatprep.subr.mxu0 0.0
        %1943 = vmatpush1.msra.mxu0 0.0
        %1944 = vmatprep.subr.mxu0 0.0
        %1945 = vmatpush1.msra.mxu0 0.0
        %1946 = vmatprep.subr.mxu0 0.0
        %1947 = vmatpush1.msra.mxu0 0.0
        %1948 = vmatprep.subr.mxu0 0.0
        %1949 = vmatpush1.msra.mxu0 0.0
        %1950 = vmatprep.subr.mxu0 0.0
        %1951 = vmatpush1.msra.mxu0 0.0
        %1952 = vmatprep.subr.mxu0 %v1940
        %1953 = vmatpush1.msra.mxu0 %v1937
        %1954 = vmatprep.subr.mxu0 %v1924
        %1955 = vmatpush1.msra.mxu0 %v1923
        %1956 = vmatprep.subr.mxu0 %v1922
        %1957 = vmatpush1.msra.mxu0 %v1921
        %1958 = vmatprep.subr.mxu0 %v1920
        %1959 = vmatpush1.msra.mxu0 %v1919
        %1960 = vmatprep.subr.mxu0 %v1918
        %1961 = vmatpush1.msra.mxu0 %v1917
        %1962 = vmatprep.subr.mxu0 %v1916
        %1963 = vmatpush1.msra.mxu0 %v1915
        %1964 = vmatprep.subr.mxu0 %v1914
        %1965 = vmatpush1.msra.mxu0 %v1913
        %1966 = vmatprep.subr.mxu0 %v1912
        %1967 = vmatpush1.msra.mxu0 %v1911
        %1968 = vmatprep.subr.mxu0 %v1910
        %1969 = vmatpush1.msra.mxu0 %v1909
        %1970 = vmatprep.subr.mxu0 %v1908
        %1971 = vmatpush1.msra.mxu0 %v1907
        %1972 = vmatprep.subr.mxu0 %v1906
        %1973 = vmatpush1.msra.mxu0 %v1905
        %1974 = vmatprep.subr.mxu0 0.0
        %1975 = vmatpush2.msra.mxu0 0.0
        %1976 = vmatprep.subr.mxu0 0.0
        %1977 = vmatpush2.msra.mxu0 0.0
        %1978 = vmatprep.subr.mxu0 0.0
        %1979 = vmatpush2.msra.mxu0 0.0
        %1980 = vmatprep.subr.mxu0 0.0
        %1981 = vmatpush2.msra.mxu0 0.0
        %1982 = vmatprep.subr.mxu0 0.0
        %1983 = vmatpush2.msra.mxu0 0.0
        %1984 = vmatprep.subr.mxu0 0.0
        %1985 = vmatpush2.msra.mxu0 0.0
        %1986 = vmatprep.subr.mxu0 0.0
        %1987 = vmatpush2.msra.mxu0 0.0
        %1988 = vmatprep.subr.mxu0 0.0
        %1989 = vmatpush2.msra.mxu0 0.0
        %1990 = vmatprep.subr.mxu0 0.0
        %1991 = vmatpush2.msra.mxu0 0.0
        %1992 = vmatprep.subr.mxu0 0.0
        %1993 = vmatpush2.msra.mxu0 0.0
        %1994 = vmatprep.subr.mxu0 0.0
        %1995 = vmatpush2.msra.mxu0 0.0
        %1996 = vmatprep.subr.mxu0 0.0
        %1997 = vmatpush2.msra.mxu0 0.0
        %1998 = vmatprep.subr.mxu0 0.0
        %1999 = vmatpush2.msra.mxu0 0.0
        %2000 = vmatprep.subr.mxu0 0.0
        %2001 = vmatpush2.msra.mxu0 0.0
        %2002 = vmatprep.subr.mxu0 0.0
        %2003 = vmatpush2.msra.mxu0 0.0
        %2004 = vmatprep.subr.mxu0 0.0
        %2005 = vmatpush2.msra.mxu0 0.0
        %2006 = vmatprep.mubr.f32.mxu0 0.0
        %2007 = vmatmul.mubr.f32.gmra.mxu0 %v1928
        %v2008 = vpop.f32.mrf.mxu0
        %v2009 = vadd.f32 0.0, %v2008
        %v2010 = vpop.f32.mrf.mxu0
        %v2011 = vadd.f32 0.0, %v2010
        %2012 = vmatprep.mubr.f32.mxu0 0.0
        %2013 = vmatmul.mubr.f32.gmra.mxu0 %v1931
        %v2014 = vpop.f32.mrf.mxu0
        %v2015 = vadd.f32 0.0, %v2014
        %v2016 = vpop.f32.mrf.mxu0
        %v2017 = vadd.f32 0.0, %v2016
        %2018 = vmatprep.mubr.f32.mxu0 0.0
        %2019 = vmatmul.mubr.f32.gmra.mxu0 %v1934
        %v2020 = vpop.f32.mrf.mxu0
        %v2021 = vadd.f32 0.0, %v2020
        %v2022 = vpop.f32.mrf.mxu0
        %v2023 = vadd.f32 0.0, %v2022
        %2024 = vdwg.mxu0
        %v2025 = vadd.f32 %v1896, %v2009
        %v2026 = vadd.f32 %v1897, %v2011
        %v2027 = vadd.f32 %v1898, %v2015
        %v2028 = vadd.f32 %v1899, %v2017
        %v2029 = vadd.f32 %v1900, %v2021
        %v2030 = vadd.f32 %v1901, %v2023
        %v2031 = vld [vmem:[%s302 + $0x2d] sm:$0xff]
        %v2032 = vld [vmem:[%s302 + $0x35] sm:$0xff]
        %v2033 = vld [vmem:[%s302 + $0x3d] sm:$0x1f]
        %v2034 = vld [vmem:[%s919] sm:$0xff]
        %v2035 = vld [vmem:[%s919 + $0x8] sm:$0xff]
        %v2036 = vld [vmem:[%s919 + $0x10] sm:$0xff]
        %v2037 = vld [vmem:[%s919 + $0x18] sm:$0xff]
        %v2038 = vld [vmem:[%s919 + $0x20] sm:$0xff]
        %v2039 = vld [vmem:[%s919 + $0x28] sm:$0xff]
        %v2040 = vld [vmem:[%s919 + $0x30] sm:$0xff]
        %v2041 = vld [vmem:[%s919 + $0x38] sm:$0xff]
        %v2042 = vld [vmem:[%s919 + $0x40] sm:$0xff]
        %v2043 = vld [vmem:[%s919 + $0x48] sm:$0xff]
        %v2044 = vld [vmem:[%s919 + $0x50] sm:$0xff]
        %v2045 = vld [vmem:[%s919 + $0x58] sm:$0xff]
        %v2046 = vld [vmem:[%s919 + $0x60] sm:$0xff]
        %v2047 = vld [vmem:[%s919 + $0x68] sm:$0xff]
        %v2048 = vld [vmem:[%s919 + $0x70] sm:$0xff]
        %v2049 = vld [vmem:[%s919 + $0x78] sm:$0xff]
        %v2050 = vld [vmem:[%s919 + $0x80] sm:$0xff]
        %v2051 = vld [vmem:[%s919 + $0x88] sm:$0xff]
        %v2052 = vld [vmem:[%s919 + $0x90] sm:$0xff]
        %v2053 = vld [vmem:[%s919 + $0x98] sm:$0xff]
        %v2054 = vld [vmem:[%s919 + $0xa0] sm:$0xf]
        %v2055 = vld [vmem:[%s919 + $0xa8] sm:$0xf]
        %v2057 = vsel %vm458, %v2031, 0
        %v2060 = vsel %vm458, %v2032, 0
        %v2063 = vsel %vm458, %v2033, 0
        %v2066 = vsel %vm468, %v2054, 0
        %v2069 = vsel %vm468, %v2055, 0
        %2071 = vmatprep.subr.mxu0 0.0
        %2072 = vmatpush1.msra.mxu0 0.0
        %2073 = vmatprep.subr.mxu0 0.0
        %2074 = vmatpush1.msra.mxu0 0.0
        %2075 = vmatprep.subr.mxu0 0.0
        %2076 = vmatpush1.msra.mxu0 0.0
        %2077 = vmatprep.subr.mxu0 0.0
        %2078 = vmatpush1.msra.mxu0 0.0
        %2079 = vmatprep.subr.mxu0 0.0
        %2080 = vmatpush1.msra.mxu0 0.0
        %2081 = vmatprep.subr.mxu0 %v2069
        %2082 = vmatpush1.msra.mxu0 %v2066
        %2083 = vmatprep.subr.mxu0 %v2053
        %2084 = vmatpush1.msra.mxu0 %v2052
        %2085 = vmatprep.subr.mxu0 %v2051
        %2086 = vmatpush1.msra.mxu0 %v2050
        %2087 = vmatprep.subr.mxu0 %v2049
        %2088 = vmatpush1.msra.mxu0 %v2048
        %2089 = vmatprep.subr.mxu0 %v2047
        %2090 = vmatpush1.msra.mxu0 %v2046
        %2091 = vmatprep.subr.mxu0 %v2045
        %2092 = vmatpush1.msra.mxu0 %v2044
        %2093 = vmatprep.subr.mxu0 %v2043
        %2094 = vmatpush1.msra.mxu0 %v2042
        %2095 = vmatprep.subr.mxu0 %v2041
        %2096 = vmatpush1.msra.mxu0 %v2040
        %2097 = vmatprep.subr.mxu0 %v2039
        %2098 = vmatpush1.msra.mxu0 %v2038
        %2099 = vmatprep.subr.mxu0 %v2037
        %2100 = vmatpush1.msra.mxu0 %v2036
        %2101 = vmatprep.subr.mxu0 %v2035
        %2102 = vmatpush1.msra.mxu0 %v2034
        %2103 = vmatprep.subr.mxu0 0.0
        %2104 = vmatpush2.msra.mxu0 0.0
        %2105 = vmatprep.subr.mxu0 0.0
        %2106 = vmatpush2.msra.mxu0 0.0
        %2107 = vmatprep.subr.mxu0 0.0
        %2108 = vmatpush2.msra.mxu0 0.0
        %2109 = vmatprep.subr.mxu0 0.0
        %2110 = vmatpush2.msra.mxu0 0.0
        %2111 = vmatprep.subr.mxu0 0.0
        %2112 = vmatpush2.msra.mxu0 0.0
        %2113 = vmatprep.subr.mxu0 0.0
        %2114 = vmatpush2.msra.mxu0 0.0
        %2115 = vmatprep.subr.mxu0 0.0
        %2116 = vmatpush2.msra.mxu0 0.0
        %2117 = vmatprep.subr.mxu0 0.0
        %2118 = vmatpush2.msra.mxu0 0.0
        %2119 = vmatprep.subr.mxu0 0.0
        %2120 = vmatpush2.msra.mxu0 0.0
        %2121 = vmatprep.subr.mxu0 0.0
        %2122 = vmatpush2.msra.mxu0 0.0
        %2123 = vmatprep.subr.mxu0 0.0
        %2124 = vmatpush2.msra.mxu0 0.0
        %2125 = vmatprep.subr.mxu0 0.0
        %2126 = vmatpush2.msra.mxu0 0.0
        %2127 = vmatprep.subr.mxu0 0.0
        %2128 = vmatpush2.msra.mxu0 0.0
        %2129 = vmatprep.subr.mxu0 0.0
        %2130 = vmatpush2.msra.mxu0 0.0
        %2131 = vmatprep.subr.mxu0 0.0
        %2132 = vmatpush2.msra.mxu0 0.0
        %2133 = vmatprep.subr.mxu0 0.0
        %2134 = vmatpush2.msra.mxu0 0.0
        %2135 = vmatprep.mubr.f32.mxu0 0.0
        %2136 = vmatmul.mubr.f32.gmra.mxu0 %v2057
        %v2137 = vpop.f32.mrf.mxu0
        %v2138 = vadd.f32 0.0, %v2137
        %v2139 = vpop.f32.mrf.mxu0
        %v2140 = vadd.f32 0.0, %v2139
        %2141 = vmatprep.mubr.f32.mxu0 0.0
        %2142 = vmatmul.mubr.f32.gmra.mxu0 %v2060
        %v2143 = vpop.f32.mrf.mxu0
        %v2144 = vadd.f32 0.0, %v2143
        %v2145 = vpop.f32.mrf.mxu0
        %v2146 = vadd.f32 0.0, %v2145
        %2147 = vmatprep.mubr.f32.mxu0 0.0
        %2148 = vmatmul.mubr.f32.gmra.mxu0 %v2063
        %v2149 = vpop.f32.mrf.mxu0
        %v2150 = vadd.f32 0.0, %v2149
        %v2151 = vpop.f32.mrf.mxu0
        %v2152 = vadd.f32 0.0, %v2151
        %2153 = vdwg.mxu0
        %v2154 = vadd.f32 %v2025, %v2138
        %v2155 = vadd.f32 %v2026, %v2140
        %v2156 = vadd.f32 %v2027, %v2144
        %v2157 = vadd.f32 %v2028, %v2146
        %v2158 = vadd.f32 %v2029, %v2150
        %v2159 = vadd.f32 %v2030, %v2152
        %v2160 = vadd.f32 %v2154, %v308
        %v2161 = vadd.f32 %v2155, %v312
        %v2162 = vadd.f32 %v2156, %v308
        %v2163 = vadd.f32 %v2157, %v312
        %v2164 = vadd.f32 %v2158, %v308
        %v2165 = vadd.f32 %v2159, %v312
        %v2166 = vmax.f32 %v2160, 0.0
        %v2167 = vmax.f32 %v2161, 0.0
        %v2168 = vmax.f32 %v2162, 0.0
        %v2169 = vmax.f32 %v2163, 0.0
        %v2170 = vmax.f32 %v2164, 0.0
        %v2171 = vmax.f32 %v2165, 0.0
        %2172 = vmatprep.subr.mxu0 0.0
        %2173 = vmatpush1.msra.mxu0 0.0
        %2174 = vmatprep.subr.mxu0 0.0
        %2175 = vmatpush1.msra.mxu0 0.0
        %2176 = vmatprep.subr.mxu0 0.0
        %2177 = vmatpush1.msra.mxu0 0.0
        %2178 = vmatprep.subr.mxu0 0.0
        %2179 = vmatpush1.msra.mxu0 0.0
        %2180 = vmatprep.subr.mxu0 0.0
        %2181 = vmatpush1.msra.mxu0 0.0
        %2182 = vmatprep.subr.mxu0 %v1590
        %2183 = vmatpush1.msra.mxu0 %v1587
        %2184 = vmatprep.subr.mxu0 %v1574
        %2185 = vmatpush1.msra.mxu0 %v1573
        %2186 = vmatprep.subr.mxu0 %v1572
        %2187 = vmatpush1.msra.mxu0 %v1571
        %2188 = vmatprep.subr.mxu0 %v1570
        %2189 = vmatpush1.msra.mxu0 %v1569
        %2190 = vmatprep.subr.mxu0 %v1568
        %2191 = vmatpush1.msra.mxu0 %v1567
        %2192 = vmatprep.subr.mxu0 %v1566
        %2193 = vmatpush1.msra.mxu0 %v1565
        %2194 = vmatprep.subr.mxu0 %v1564
        %2195 = vmatpush1.msra.mxu0 %v1563
        %2196 = vmatprep.subr.mxu0 %v1562
        %2197 = vmatpush1.msra.mxu0 %v1561
        %2198 = vmatprep.subr.mxu0 %v1560
        %2199 = vmatpush1.msra.mxu0 %v1559
        %2200 = vmatprep.subr.mxu0 %v1558
        %2201 = vmatpush1.msra.mxu0 %v1557
        %2202 = vmatprep.subr.mxu0 %v1556
        %2203 = vmatpush1.msra.mxu0 %v1555
        %2204 = vmatprep.subr.mxu0 0.0
        %2205 = vmatpush2.msra.mxu0 0.0
        %2206 = vmatprep.subr.mxu0 0.0
        %2207 = vmatpush2.msra.mxu0 0.0
        %2208 = vmatprep.subr.mxu0 0.0
        %2209 = vmatpush2.msra.mxu0 0.0
        %2210 = vmatprep.subr.mxu0 0.0
        %2211 = vmatpush2.msra.mxu0 0.0
        %2212 = vmatprep.subr.mxu0 0.0
        %2213 = vmatpush2.msra.mxu0 0.0
        %2214 = vmatprep.subr.mxu0 0.0
        %2215 = vmatpush2.msra.mxu0 0.0
        %2216 = vmatprep.subr.mxu0 0.0
        %2217 = vmatpush2.msra.mxu0 0.0
        %2218 = vmatprep.subr.mxu0 0.0
        %2219 = vmatpush2.msra.mxu0 0.0
        %2220 = vmatprep.subr.mxu0 0.0
        %2221 = vmatpush2.msra.mxu0 0.0
        %2222 = vmatprep.subr.mxu0 0.0
        %2223 = vmatpush2.msra.mxu0 0.0
        %2224 = vmatprep.subr.mxu0 0.0
        %2225 = vmatpush2.msra.mxu0 0.0
        %2226 = vmatprep.subr.mxu0 0.0
        %2227 = vmatpush2.msra.mxu0 0.0
        %2228 = vmatprep.subr.mxu0 0.0
        %2229 = vmatpush2.msra.mxu0 0.0
        %2230 = vmatprep.subr.mxu0 0.0
        %2231 = vmatpush2.msra.mxu0 0.0
        %2232 = vmatprep.subr.mxu0 0.0
        %2233 = vmatpush2.msra.mxu0 0.0
        %2234 = vmatprep.subr.mxu0 0.0
        %2235 = vmatpush2.msra.mxu0 0.0
        %2236 = vmatprep.mubr.f32.mxu0 0.0
        %2237 = vmatmul.mubr.f32.gmra.mxu0 %v1799
        %v2238 = vpop.f32.mrf.mxu0
        %v2239 = vadd.f32 0.0, %v2238
        %v2240 = vpop.f32.mrf.mxu0
        %v2241 = vadd.f32 0.0, %v2240
        %2242 = vmatprep.mubr.f32.mxu0 0.0
        %2243 = vmatmul.mubr.f32.gmra.mxu0 %v1802
        %v2244 = vpop.f32.mrf.mxu0
        %v2245 = vadd.f32 0.0, %v2244
        %v2246 = vpop.f32.mrf.mxu0
        %v2247 = vadd.f32 0.0, %v2246
        %2248 = vmatprep.mubr.f32.mxu0 0.0
        %2249 = vmatmul.mubr.f32.gmra.mxu0 %v1805
        %v2250 = vpop.f32.mrf.mxu0
        %v2251 = vadd.f32 0.0, %v2250
        %v2252 = vpop.f32.mrf.mxu0
        %v2253 = vadd.f32 0.0, %v2252
        %2254 = vdwg.mxu0
        %2255 = vmatprep.subr.mxu0 0.0
        %2256 = vmatpush1.msra.mxu0 0.0
        %2257 = vmatprep.subr.mxu0 0.0
        %2258 = vmatpush1.msra.mxu0 0.0
        %2259 = vmatprep.subr.mxu0 0.0
        %2260 = vmatpush1.msra.mxu0 0.0
        %2261 = vmatprep.subr.mxu0 0.0
        %2262 = vmatpush1.msra.mxu0 0.0
        %2263 = vmatprep.subr.mxu0 0.0
        %2264 = vmatpush1.msra.mxu0 0.0
        %2265 = vmatprep.subr.mxu0 %v1688
        %2266 = vmatpush1.msra.mxu0 %v1685
        %2267 = vmatprep.subr.mxu0 %v1549
        %2268 = vmatpush1.msra.mxu0 %v1548
        %2269 = vmatprep.subr.mxu0 %v1547
        %2270 = vmatpush1.msra.mxu0 %v1546
        %2271 = vmatprep.subr.mxu0 %v1545
        %2272 = vmatpush1.msra.mxu0 %v1544
        %2273 = vmatprep.subr.mxu0 %v1543
        %2274 = vmatpush1.msra.mxu0 %v1542
        %2275 = vmatprep.subr.mxu0 %v1541
        %2276 = vmatpush1.msra.mxu0 %v1540
        %2277 = vmatprep.subr.mxu0 %v1539
        %2278 = vmatpush1.msra.mxu0 %v1538
        %2279 = vmatprep.subr.mxu0 %v1537
        %2280 = vmatpush1.msra.mxu0 %v1536
        %2281 = vmatprep.subr.mxu0 %v1535
        %2282 = vmatpush1.msra.mxu0 %v1534
        %2283 = vmatprep.subr.mxu0 %v1533
        %2284 = vmatpush1.msra.mxu0 %v1532
        %2285 = vmatprep.subr.mxu0 %v1531
        %2286 = vmatpush1.msra.mxu0 %v1530
        %2287 = vmatprep.subr.mxu0 0.0
        %2288 = vmatpush2.msra.mxu0 0.0
        %2289 = vmatprep.subr.mxu0 0.0
        %2290 = vmatpush2.msra.mxu0 0.0
        %2291 = vmatprep.subr.mxu0 0.0
        %2292 = vmatpush2.msra.mxu0 0.0
        %2293 = vmatprep.subr.mxu0 0.0
        %2294 = vmatpush2.msra.mxu0 0.0
        %2295 = vmatprep.subr.mxu0 0.0
        %2296 = vmatpush2.msra.mxu0 0.0
        %2297 = vmatprep.subr.mxu0 0.0
        %2298 = vmatpush2.msra.mxu0 0.0
        %2299 = vmatprep.subr.mxu0 0.0
        %2300 = vmatpush2.msra.mxu0 0.0
        %2301 = vmatprep.subr.mxu0 0.0
        %2302 = vmatpush2.msra.mxu0 0.0
        %2303 = vmatprep.subr.mxu0 0.0
        %2304 = vmatpush2.msra.mxu0 0.0
        %2305 = vmatprep.subr.mxu0 0.0
        %2306 = vmatpush2.msra.mxu0 0.0
        %2307 = vmatprep.subr.mxu0 0.0
        %2308 = vmatpush2.msra.mxu0 0.0
        %2309 = vmatprep.subr.mxu0 0.0
        %2310 = vmatpush2.msra.mxu0 0.0
        %2311 = vmatprep.subr.mxu0 0.0
        %2312 = vmatpush2.msra.mxu0 0.0
        %2313 = vmatprep.subr.mxu0 0.0
        %2314 = vmatpush2.msra.mxu0 0.0
        %2315 = vmatprep.subr.mxu0 0.0
        %2316 = vmatpush2.msra.mxu0 0.0
        %2317 = vmatprep.subr.mxu0 0.0
        %2318 = vmatpush2.msra.mxu0 0.0
        %2319 = vmatprep.mubr.f32.mxu0 0.0
        %2320 = vmatmul.mubr.f32.gmra.mxu0 %v1578
        %v2321 = vpop.f32.mrf.mxu0
        %v2322 = vadd.f32 %v2239, %v2321
        %v2323 = vpop.f32.mrf.mxu0
        %v2324 = vadd.f32 %v2241, %v2323
        %2325 = vmatprep.mubr.f32.mxu0 0.0
        %2326 = vmatmul.mubr.f32.gmra.mxu0 %v1581
        %v2327 = vpop.f32.mrf.mxu0
        %v2328 = vadd.f32 %v2245, %v2327
        %v2329 = vpop.f32.mrf.mxu0
        %v2330 = vadd.f32 %v2247, %v2329
        %2331 = vmatprep.mubr.f32.mxu0 0.0
        %2332 = vmatmul.mubr.f32.gmra.mxu0 %v1584
        %v2333 = vpop.f32.mrf.mxu0
        %v2334 = vadd.f32 %v2251, %v2333
        %v2335 = vpop.f32.mrf.mxu0
        %v2336 = vadd.f32 %v2253, %v2335
        %2337 = vdwg.mxu0
        %2338 = vmatprep.subr.mxu0 0.0
        %2339 = vmatpush1.msra.mxu0 0.0
        %2340 = vmatprep.subr.mxu0 0.0
        %2341 = vmatpush1.msra.mxu0 0.0
        %2342 = vmatprep.subr.mxu0 0.0
        %2343 = vmatpush1.msra.mxu0 0.0
        %2344 = vmatprep.subr.mxu0 0.0
        %2345 = vmatpush1.msra.mxu0 0.0
        %2346 = vmatprep.subr.mxu0 0.0
        %2347 = vmatpush1.msra.mxu0 0.0
        %2348 = vmatprep.subr.mxu0 %v1811
        %2349 = vmatpush1.msra.mxu0 %v1808
        %2350 = vmatprep.subr.mxu0 %v1795
        %2351 = vmatpush1.msra.mxu0 %v1794
        %2352 = vmatprep.subr.mxu0 %v1793
        %2353 = vmatpush1.msra.mxu0 %v1792
        %2354 = vmatprep.subr.mxu0 %v1791
        %2355 = vmatpush1.msra.mxu0 %v1790
        %2356 = vmatprep.subr.mxu0 %v1789
        %2357 = vmatpush1.msra.mxu0 %v1788
        %2358 = vmatprep.subr.mxu0 %v1787
        %2359 = vmatpush1.msra.mxu0 %v1786
        %2360 = vmatprep.subr.mxu0 %v1785
        %2361 = vmatpush1.msra.mxu0 %v1784
        %2362 = vmatprep.subr.mxu0 %v1783
        %2363 = vmatpush1.msra.mxu0 %v1782
        %2364 = vmatprep.subr.mxu0 %v1781
        %2365 = vmatpush1.msra.mxu0 %v1780
        %2366 = vmatprep.subr.mxu0 %v1779
        %2367 = vmatpush1.msra.mxu0 %v1778
        %2368 = vmatprep.subr.mxu0 %v1777
        %2369 = vmatpush1.msra.mxu0 %v1776
        %2370 = vmatprep.subr.mxu0 0.0
        %2371 = vmatpush2.msra.mxu0 0.0
        %2372 = vmatprep.subr.mxu0 0.0
        %2373 = vmatpush2.msra.mxu0 0.0
        %2374 = vmatprep.subr.mxu0 0.0
        %2375 = vmatpush2.msra.mxu0 0.0
        %2376 = vmatprep.subr.mxu0 0.0
        %2377 = vmatpush2.msra.mxu0 0.0
        %2378 = vmatprep.subr.mxu0 0.0
        %2379 = vmatpush2.msra.mxu0 0.0
        %2380 = vmatprep.subr.mxu0 0.0
        %2381 = vmatpush2.msra.mxu0 0.0
        %2382 = vmatprep.subr.mxu0 0.0
        %2383 = vmatpush2.msra.mxu0 0.0
        %2384 = vmatprep.subr.mxu0 0.0
        %2385 = vmatpush2.msra.mxu0 0.0
        %2386 = vmatprep.subr.mxu0 0.0
        %2387 = vmatpush2.msra.mxu0 0.0
        %2388 = vmatprep.subr.mxu0 0.0
        %2389 = vmatpush2.msra.mxu0 0.0
        %2390 = vmatprep.subr.mxu0 0.0
        %2391 = vmatpush2.msra.mxu0 0.0
        %2392 = vmatprep.subr.mxu0 0.0
        %2393 = vmatpush2.msra.mxu0 0.0
        %2394 = vmatprep.subr.mxu0 0.0
        %2395 = vmatpush2.msra.mxu0 0.0
        %2396 = vmatprep.subr.mxu0 0.0
        %2397 = vmatpush2.msra.mxu0 0.0
        %2398 = vmatprep.subr.mxu0 0.0
        %2399 = vmatpush2.msra.mxu0 0.0
        %2400 = vmatprep.subr.mxu0 0.0
        %2401 = vmatpush2.msra.mxu0 0.0
        %2402 = vmatprep.mubr.f32.mxu0 0.0
        %2403 = vmatmul.mubr.f32.gmra.mxu0 %v1928
        %v2404 = vpop.f32.mrf.mxu0
        %v2405 = vadd.f32 0.0, %v2404
        %v2406 = vpop.f32.mrf.mxu0
        %v2407 = vadd.f32 0.0, %v2406
        %2408 = vmatprep.mubr.f32.mxu0 0.0
        %2409 = vmatmul.mubr.f32.gmra.mxu0 %v1931
        %v2410 = vpop.f32.mrf.mxu0
        %v2411 = vadd.f32 0.0, %v2410
        %v2412 = vpop.f32.mrf.mxu0
        %v2413 = vadd.f32 0.0, %v2412
        %2414 = vmatprep.mubr.f32.mxu0 0.0
        %2415 = vmatmul.mubr.f32.gmra.mxu0 %v1934
        %v2416 = vpop.f32.mrf.mxu0
        %v2417 = vadd.f32 0.0, %v2416
        %v2418 = vpop.f32.mrf.mxu0
        %v2419 = vadd.f32 0.0, %v2418
        %2420 = vdwg.mxu0
        %v2421 = vadd.f32 %v2322, %v2405
        %v2422 = vadd.f32 %v2324, %v2407
        %v2423 = vadd.f32 %v2328, %v2411
        %v2424 = vadd.f32 %v2330, %v2413
        %v2425 = vadd.f32 %v2334, %v2417
        %v2426 = vadd.f32 %v2336, %v2419
        %2427 = vmatprep.subr.mxu0 0.0
        %2428 = vmatpush1.msra.mxu0 0.0
        %2429 = vmatprep.subr.mxu0 0.0
        %2430 = vmatpush1.msra.mxu0 0.0
        %2431 = vmatprep.subr.mxu0 0.0
        %2432 = vmatpush1.msra.mxu0 0.0
        %2433 = vmatprep.subr.mxu0 0.0
        %2434 = vmatpush1.msra.mxu0 0.0
        %2435 = vmatprep.subr.mxu0 0.0
        %2436 = vmatpush1.msra.mxu0 0.0
        %2437 = vmatprep.subr.mxu0 %v1940
        %2438 = vmatpush1.msra.mxu0 %v1937
        %2439 = vmatprep.subr.mxu0 %v1924
        %2440 = vmatpush1.msra.mxu0 %v1923
        %2441 = vmatprep.subr.mxu0 %v1922
        %2442 = vmatpush1.msra.mxu0 %v1921
        %2443 = vmatprep.subr.mxu0 %v1920
        %2444 = vmatpush1.msra.mxu0 %v1919
        %2445 = vmatprep.subr.mxu0 %v1918
        %2446 = vmatpush1.msra.mxu0 %v1917
        %2447 = vmatprep.subr.mxu0 %v1916
        %2448 = vmatpush1.msra.mxu0 %v1915
        %2449 = vmatprep.subr.mxu0 %v1914
        %2450 = vmatpush1.msra.mxu0 %v1913
        %2451 = vmatprep.subr.mxu0 %v1912
        %2452 = vmatpush1.msra.mxu0 %v1911
        %2453 = vmatprep.subr.mxu0 %v1910
        %2454 = vmatpush1.msra.mxu0 %v1909
        %2455 = vmatprep.subr.mxu0 %v1908
        %2456 = vmatpush1.msra.mxu0 %v1907
        %2457 = vmatprep.subr.mxu0 %v1906
        %2458 = vmatpush1.msra.mxu0 %v1905
        %2459 = vmatprep.subr.mxu0 0.0
        %2460 = vmatpush2.msra.mxu0 0.0
        %2461 = vmatprep.subr.mxu0 0.0
        %2462 = vmatpush2.msra.mxu0 0.0
        %2463 = vmatprep.subr.mxu0 0.0
        %2464 = vmatpush2.msra.mxu0 0.0
        %2465 = vmatprep.subr.mxu0 0.0
        %2466 = vmatpush2.msra.mxu0 0.0
        %2467 = vmatprep.subr.mxu0 0.0
        %2468 = vmatpush2.msra.mxu0 0.0
        %2469 = vmatprep.subr.mxu0 0.0
        %2470 = vmatpush2.msra.mxu0 0.0
        %2471 = vmatprep.subr.mxu0 0.0
        %2472 = vmatpush2.msra.mxu0 0.0
        %2473 = vmatprep.subr.mxu0 0.0
        %2474 = vmatpush2.msra.mxu0 0.0
        %2475 = vmatprep.subr.mxu0 0.0
        %2476 = vmatpush2.msra.mxu0 0.0
        %2477 = vmatprep.subr.mxu0 0.0
        %2478 = vmatpush2.msra.mxu0 0.0
        %2479 = vmatprep.subr.mxu0 0.0
        %2480 = vmatpush2.msra.mxu0 0.0
        %2481 = vmatprep.subr.mxu0 0.0
        %2482 = vmatpush2.msra.mxu0 0.0
        %2483 = vmatprep.subr.mxu0 0.0
        %2484 = vmatpush2.msra.mxu0 0.0
        %2485 = vmatprep.subr.mxu0 0.0
        %2486 = vmatpush2.msra.mxu0 0.0
        %2487 = vmatprep.subr.mxu0 0.0
        %2488 = vmatpush2.msra.mxu0 0.0
        %2489 = vmatprep.subr.mxu0 0.0
        %2490 = vmatpush2.msra.mxu0 0.0
        %2491 = vmatprep.mubr.f32.mxu0 0.0
        %2492 = vmatmul.mubr.f32.gmra.mxu0 %v2057
        %v2493 = vpop.f32.mrf.mxu0
        %v2494 = vadd.f32 0.0, %v2493
        %v2495 = vpop.f32.mrf.mxu0
        %v2496 = vadd.f32 0.0, %v2495
        %2497 = vmatprep.mubr.f32.mxu0 0.0
        %2498 = vmatmul.mubr.f32.gmra.mxu0 %v2060
        %v2499 = vpop.f32.mrf.mxu0
        %v2500 = vadd.f32 0.0, %v2499
        %v2501 = vpop.f32.mrf.mxu0
        %v2502 = vadd.f32 0.0, %v2501
        %2503 = vmatprep.mubr.f32.mxu0 0.0
        %2504 = vmatmul.mubr.f32.gmra.mxu0 %v2063
        %v2505 = vpop.f32.mrf.mxu0
        %v2506 = vadd.f32 0.0, %v2505
        %v2507 = vpop.f32.mrf.mxu0
        %v2508 = vadd.f32 0.0, %v2507
        %2509 = vdwg.mxu0
        %v2510 = vadd.f32 %v2421, %v2494
        %v2511 = vadd.f32 %v2422, %v2496
        %v2512 = vadd.f32 %v2423, %v2500
        %v2513 = vadd.f32 %v2424, %v2502
        %v2514 = vadd.f32 %v2425, %v2506
        %v2515 = vadd.f32 %v2426, %v2508
        %v2516 = vld [vmem:[%s302 + $0x43] sm:$0xff]
        %v2517 = vld [vmem:[%s302 + $0x4b] sm:$0xff]
        %v2518 = vld [vmem:[%s302 + $0x53] sm:$0x1f]
        %v2520 = vsel %vm458, %v2516, 0
        %v2523 = vsel %vm458, %v2517, 0
        %v2526 = vsel %vm458, %v2518, 0
        %2528 = vmatprep.subr.mxu0 0.0
        %2529 = vmatpush1.msra.mxu0 0.0
        %2530 = vmatprep.subr.mxu0 0.0
        %2531 = vmatpush1.msra.mxu0 0.0
        %2532 = vmatprep.subr.mxu0 0.0
        %2533 = vmatpush1.msra.mxu0 0.0
        %2534 = vmatprep.subr.mxu0 0.0
        %2535 = vmatpush1.msra.mxu0 0.0
        %2536 = vmatprep.subr.mxu0 0.0
        %2537 = vmatpush1.msra.mxu0 0.0
        %2538 = vmatprep.subr.mxu0 %v2069
        %2539 = vmatpush1.msra.mxu0 %v2066
        %2540 = vmatprep.subr.mxu0 %v2053
        %2541 = vmatpush1.msra.mxu0 %v2052
        %2542 = vmatprep.subr.mxu0 %v2051
        %2543 = vmatpush1.msra.mxu0 %v2050
        %2544 = vmatprep.subr.mxu0 %v2049
        %2545 = vmatpush1.msra.mxu0 %v2048
        %2546 = vmatprep.subr.mxu0 %v2047
        %2547 = vmatpush1.msra.mxu0 %v2046
        %2548 = vmatprep.subr.mxu0 %v2045
        %2549 = vmatpush1.msra.mxu0 %v2044
        %2550 = vmatprep.subr.mxu0 %v2043
        %2551 = vmatpush1.msra.mxu0 %v2042
        %2552 = vmatprep.subr.mxu0 %v2041
        %2553 = vmatpush1.msra.mxu0 %v2040
        %2554 = vmatprep.subr.mxu0 %v2039
        %2555 = vmatpush1.msra.mxu0 %v2038
        %2556 = vmatprep.subr.mxu0 %v2037
        %2557 = vmatpush1.msra.mxu0 %v2036
        %2558 = vmatprep.subr.mxu0 %v2035
        %2559 = vmatpush1.msra.mxu0 %v2034
        %2560 = vmatprep.subr.mxu0 0.0
        %2561 = vmatpush2.msra.mxu0 0.0
        %2562 = vmatprep.subr.mxu0 0.0
        %2563 = vmatpush2.msra.mxu0 0.0
        %2564 = vmatprep.subr.mxu0 0.0
        %2565 = vmatpush2.msra.mxu0 0.0
        %2566 = vmatprep.subr.mxu0 0.0
        %2567 = vmatpush2.msra.mxu0 0.0
        %2568 = vmatprep.subr.mxu0 0.0
        %2569 = vmatpush2.msra.mxu0 0.0
        %2570 = vmatprep.subr.mxu0 0.0
        %2571 = vmatpush2.msra.mxu0 0.0
        %2572 = vmatprep.subr.mxu0 0.0
        %2573 = vmatpush2.msra.mxu0 0.0
        %2574 = vmatprep.subr.mxu0 0.0
        %2575 = vmatpush2.msra.mxu0 0.0
        %2576 = vmatprep.subr.mxu0 0.0
        %2577 = vmatpush2.msra.mxu0 0.0
        %2578 = vmatprep.subr.mxu0 0.0
        %2579 = vmatpush2.msra.mxu0 0.0
        %2580 = vmatprep.subr.mxu0 0.0
        %2581 = vmatpush2.msra.mxu0 0.0
        %2582 = vmatprep.subr.mxu0 0.0
        %2583 = vmatpush2.msra.mxu0 0.0
        %2584 = vmatprep.subr.mxu0 0.0
        %2585 = vmatpush2.msra.mxu0 0.0
        %2586 = vmatprep.subr.mxu0 0.0
        %2587 = vmatpush2.msra.mxu0 0.0
        %2588 = vmatprep.subr.mxu0 0.0
        %2589 = vmatpush2.msra.mxu0 0.0
        %2590 = vmatprep.subr.mxu0 0.0
        %2591 = vmatpush2.msra.mxu0 0.0
        %2592 = vmatprep.mubr.f32.mxu0 0.0
        %2593 = vmatmul.mubr.f32.gmra.mxu0 %v2520
        %v2594 = vpop.f32.mrf.mxu0
        %v2595 = vadd.f32 0.0, %v2594
        %v2596 = vpop.f32.mrf.mxu0
        %v2597 = vadd.f32 0.0, %v2596
        %2598 = vmatprep.mubr.f32.mxu0 0.0
        %2599 = vmatmul.mubr.f32.gmra.mxu0 %v2523
        %v2600 = vpop.f32.mrf.mxu0
        %v2601 = vadd.f32 0.0, %v2600
        %v2602 = vpop.f32.mrf.mxu0
        %v2603 = vadd.f32 0.0, %v2602
        %2604 = vmatprep.mubr.f32.mxu0 0.0
        %2605 = vmatmul.mubr.f32.gmra.mxu0 %v2526
        %v2606 = vpop.f32.mrf.mxu0
        %v2607 = vadd.f32 0.0, %v2606
        %v2608 = vpop.f32.mrf.mxu0
        %v2609 = vadd.f32 0.0, %v2608
        %2610 = vdwg.mxu0
        %v2611 = vadd.f32 %v2510, %v2595
        %v2612 = vadd.f32 %v2511, %v2597
        %v2613 = vadd.f32 %v2512, %v2601
        %v2614 = vadd.f32 %v2513, %v2603
        %v2615 = vadd.f32 %v2514, %v2607
        %v2616 = vadd.f32 %v2515, %v2609
        %v2617 = vadd.f32 %v2611, %v308
        %v2618 = vadd.f32 %v2612, %v312
        %v2619 = vadd.f32 %v2613, %v308
        %v2620 = vadd.f32 %v2614, %v312
        %v2621 = vadd.f32 %v2615, %v308
        %v2622 = vadd.f32 %v2616, %v312
        %v2623 = vmax.f32 %v2617, 0.0
        %v2624 = vmax.f32 %v2618, 0.0
        %v2625 = vmax.f32 %v2619, 0.0
        %v2626 = vmax.f32 %v2620, 0.0
        %v2627 = vmax.f32 %v2621, 0.0
        %v2628 = vmax.f32 %v2622, 0.0
        %v2629 = vmax.f32 %v2166, %v2623
        %v2630 = vmax.f32 %v2167, %v2624
        %v2631 = vmax.f32 %v2168, %v2625
        %v2632 = vmax.f32 %v2169, %v2626
        %v2633 = vmax.f32 %v2170, %v2627
        %v2634 = vmax.f32 %v2171, %v2628
        %v2635 = vmax.f32 %v2629, %v2630
        %v2636 = vmax.f32 %v2631, %v2632
        %v2637 = vmax.f32 %v2633, %v2634
        %2638 = vst [vmem:[%s405] sm:$0xff] %v2635
        %2639 = vst [vmem:[%s405 + $0x8] sm:$0xff] %v2636
        %2640 = vst [vmem:[%s405 + $0x10] sm:$0x1f] %v2637
        %v2641 = vld [vmem:[#allocation2] sm:$0xff]
        %v2642 = vld [vmem:[#allocation2 + $0x8] sm:$0xff]
        %v2643 = vld [vmem:[#allocation2 + $0x10] sm:$0x1f]
        %v2644 = vld [vmem:[%s3] sm:$0xff]
        %v2645 = vld [vmem:[%s3 + $0x8] sm:$0xff]
        %v2646 = vld [vmem:[%s3 + $0x10] sm:$0xff]
        %v2647 = vld [vmem:[%s3 + $0x18] sm:$0xff]
        %v2648 = vld [vmem:[%s3 + $0x20] sm:$0xff]
        %v2649 = vld [vmem:[%s3 + $0x28] sm:$0xff]
        %v2650 = vld [vmem:[%s3 + $0x30] sm:$0xff]
        %v2651 = vld [vmem:[%s3 + $0x38] sm:$0xff]
        %v2652 = vld [vmem:[%s3 + $0x40] sm:$0xff]
        %v2653 = vld [vmem:[%s3 + $0x48] sm:$0xff]
        %v2654 = vld [vmem:[%s3 + $0x50] sm:$0xff]
        %v2655 = vld [vmem:[%s3 + $0x58] sm:$0xff]
        %v2656 = vld [vmem:[%s3 + $0x60] sm:$0xff]
        %v2657 = vld [vmem:[%s3 + $0x68] sm:$0xff]
        %v2658 = vld [vmem:[%s3 + $0x70] sm:$0xff]
        %v2659 = vld [vmem:[%s3 + $0x78] sm:$0xff]
        %v2660 = vld [vmem:[%s3 + $0x80] sm:$0xff]
        %v2661 = vld [vmem:[%s3 + $0x88] sm:$0xff]
        %v2662 = vld [vmem:[%s3 + $0x90] sm:$0xff]
        %v2663 = vld [vmem:[%s3 + $0x98] sm:$0xff]
        %v2664 = vld [vmem:[%s3 + $0xa0] sm:$0xff]
        %v2665 = vld [vmem:[%s3 + $0xa8] sm:$0xff]
        %v2666 = vld [vmem:[%s3 + $0xb0] sm:$0xff]
        %v2667 = vld [vmem:[%s3 + $0xb8] sm:$0xff]
        %v2668 = vld [vmem:[%s3 + $0xc0] sm:$0xff]
        %v2669 = vld [vmem:[%s3 + $0xc8] sm:$0xff]
        %v2670 = vld [vmem:[%s3 + $0xd0] sm:$0xff]
        %v2671 = vld [vmem:[%s3 + $0xd8] sm:$0xff]
        %v2672 = vld [vmem:[%s3 + $0xe0] sm:$0xff]
        %v2673 = vld [vmem:[%s3 + $0xe8] sm:$0xff]
        %v2674 = vld [vmem:[%s3 + $0xf0] sm:$0xff]
        %v2675 = vld [vmem:[%s3 + $0xf8] sm:$0xff]
        %v2676 = vld [vmem:[%s405] sm:$0xff]
        %v2677 = vld [vmem:[%s405 + $0x8] sm:$0xff]
        %v2678 = vld [vmem:[%s405 + $0x10] sm:$0x1f]
        %s2679 = scalar_lea.vmem %s3, 256
        %v2680 = vld [vmem:[%s2679] sm:$0xff]
        %v2681 = vld [vmem:[%s2679 + $0x8] sm:$0xff]
        %v2682 = vld [vmem:[%s2679 + $0x10] sm:$0xff]
        %v2683 = vld [vmem:[%s2679 + $0x18] sm:$0xff]
        %v2684 = vld [vmem:[%s2679 + $0x20] sm:$0xff]
        %v2685 = vld [vmem:[%s2679 + $0x28] sm:$0xff]
        %v2686 = vld [vmem:[%s2679 + $0x30] sm:$0xff]
        %v2687 = vld [vmem:[%s2679 + $0x38] sm:$0xff]
        %v2688 = vld [vmem:[%s2679 + $0x40] sm:$0xff]
        %v2689 = vld [vmem:[%s2679 + $0x48] sm:$0xff]
        %v2690 = vld [vmem:[%s2679 + $0x50] sm:$0xff]
        %v2691 = vld [vmem:[%s2679 + $0x58] sm:$0xff]
        %v2692 = vld [vmem:[%s2679 + $0x60] sm:$0xff]
        %v2693 = vld [vmem:[%s2679 + $0x68] sm:$0xff]
        %v2694 = vld [vmem:[%s2679 + $0x70] sm:$0xff]
        %v2695 = vld [vmem:[%s2679 + $0x78] sm:$0xff]
        %v2696 = vld [vmem:[%s2679 + $0x80] sm:$0xff]
        %v2697 = vld [vmem:[%s2679 + $0x88] sm:$0xff]
        %v2698 = vld [vmem:[%s2679 + $0x90] sm:$0xff]
        %v2699 = vld [vmem:[%s2679 + $0x98] sm:$0xff]
        %v2700 = vld [vmem:[%s2679 + $0xa0] sm:$0xff]
        %v2701 = vld [vmem:[%s2679 + $0xa8] sm:$0xff]
        %v2702 = vld [vmem:[%s2679 + $0xb0] sm:$0xff]
        %v2703 = vld [vmem:[%s2679 + $0xb8] sm:$0xff]
        %v2704 = vld [vmem:[%s2679 + $0xc0] sm:$0xff]
        %v2705 = vld [vmem:[%s2679 + $0xc8] sm:$0xff]
        %v2706 = vld [vmem:[%s2679 + $0xd0] sm:$0xff]
        %v2707 = vld [vmem:[%s2679 + $0xd8] sm:$0xff]
        %v2708 = vld [vmem:[%s2679 + $0xe0] sm:$0xff]
        %v2709 = vld [vmem:[%s2679 + $0xe8] sm:$0xff]
        %v2710 = vld [vmem:[%s2679 + $0xf0] sm:$0xff]
        %v2711 = vld [vmem:[%s2679 + $0xf8] sm:$0xff]
        %2712 = vmatprep.subr.mxu0 %v2711
        %2713 = vmatpush1.msra.mxu0 %v2710
        %2714 = vmatprep.subr.mxu0 %v2709
        %2715 = vmatpush1.msra.mxu0 %v2708
        %2716 = vmatprep.subr.mxu0 %v2707
        %2717 = vmatpush1.msra.mxu0 %v2706
        %2718 = vmatprep.subr.mxu0 %v2705
        %2719 = vmatpush1.msra.mxu0 %v2704
        %2720 = vmatprep.subr.mxu0 %v2703
        %2721 = vmatpush1.msra.mxu0 %v2702
        %2722 = vmatprep.subr.mxu0 %v2701
        %2723 = vmatpush1.msra.mxu0 %v2700
        %2724 = vmatprep.subr.mxu0 %v2699
        %2725 = vmatpush1.msra.mxu0 %v2698
        %2726 = vmatprep.subr.mxu0 %v2697
        %2727 = vmatpush1.msra.mxu0 %v2696
        %2728 = vmatprep.subr.mxu0 %v2695
        %2729 = vmatpush1.msra.mxu0 %v2694
        %2730 = vmatprep.subr.mxu0 %v2693
        %2731 = vmatpush1.msra.mxu0 %v2692
        %2732 = vmatprep.subr.mxu0 %v2691
        %2733 = vmatpush1.msra.mxu0 %v2690
        %2734 = vmatprep.subr.mxu0 %v2689
        %2735 = vmatpush1.msra.mxu0 %v2688
        %2736 = vmatprep.subr.mxu0 %v2687
        %2737 = vmatpush1.msra.mxu0 %v2686
        %2738 = vmatprep.subr.mxu0 %v2685
        %2739 = vmatpush1.msra.mxu0 %v2684
        %2740 = vmatprep.subr.mxu0 %v2683
        %2741 = vmatpush1.msra.mxu0 %v2682
        %2742 = vmatprep.subr.mxu0 %v2681
        %2743 = vmatpush1.msra.mxu0 %v2680
        %2744 = vmatprep.subr.mxu0 0.0
        %2745 = vmatpush2.msra.mxu0 0.0
        %2746 = vmatprep.subr.mxu0 0.0
        %2747 = vmatpush2.msra.mxu0 0.0
        %2748 = vmatprep.subr.mxu0 0.0
        %2749 = vmatpush2.msra.mxu0 0.0
        %2750 = vmatprep.subr.mxu0 0.0
        %2751 = vmatpush2.msra.mxu0 0.0
        %2752 = vmatprep.subr.mxu0 0.0
        %2753 = vmatpush2.msra.mxu0 0.0
        %2754 = vmatprep.subr.mxu0 0.0
        %2755 = vmatpush2.msra.mxu0 0.0
        %2756 = vmatprep.subr.mxu0 0.0
        %2757 = vmatpush2.msra.mxu0 0.0
        %2758 = vmatprep.subr.mxu0 0.0
        %2759 = vmatpush2.msra.mxu0 0.0
        %2760 = vmatprep.subr.mxu0 0.0
        %2761 = vmatpush2.msra.mxu0 0.0
        %2762 = vmatprep.subr.mxu0 0.0
        %2763 = vmatpush2.msra.mxu0 0.0
        %2764 = vmatprep.subr.mxu0 0.0
        %2765 = vmatpush2.msra.mxu0 0.0
        %2766 = vmatprep.subr.mxu0 0.0
        %2767 = vmatpush2.msra.mxu0 0.0
        %2768 = vmatprep.subr.mxu0 0.0
        %2769 = vmatpush2.msra.mxu0 0.0
        %2770 = vmatprep.subr.mxu0 0.0
        %2771 = vmatpush2.msra.mxu0 0.0
        %2772 = vmatprep.subr.mxu0 0.0
        %2773 = vmatpush2.msra.mxu0 0.0
        %2774 = vmatprep.subr.mxu0 0.0
        %2775 = vmatpush2.msra.mxu0 0.0
        %2776 = vmatprep.mubr.f32.mxu0 0.0
        %2777 = vmatmul.mubr.f32.gmra.mxu0 %v2676
        %v2778 = vpop.f32.mrf.mxu0
        %v2779 = vadd.f32 0.0, %v2778
        %v2780 = vpop.f32.mrf.mxu0
        %v2781 = vadd.f32 0.0, %v2780
        %2782 = vmatprep.mubr.f32.mxu0 0.0
        %2783 = vmatmul.mubr.f32.gmra.mxu0 %v2677
        %v2784 = vpop.f32.mrf.mxu0
        %v2785 = vadd.f32 0.0, %v2784
        %v2786 = vpop.f32.mrf.mxu0
        %v2787 = vadd.f32 0.0, %v2786
        %2788 = vmatprep.mubr.f32.mxu0 0.0
        %2789 = vmatmul.mubr.f32.gmra.mxu0 %v2678
        %v2790 = vpop.f32.mrf.mxu0
        %v2791 = vadd.f32 0.0, %v2790
        %v2792 = vpop.f32.mrf.mxu0
        %v2793 = vadd.f32 0.0, %v2792
        %2794 = vdwg.mxu0
        %2795 = vmatprep.subr.mxu0 %v2675
        %2796 = vmatpush1.msra.mxu0 %v2674
        %2797 = vmatprep.subr.mxu0 %v2673
        %2798 = vmatpush1.msra.mxu0 %v2672
        %2799 = vmatprep.subr.mxu0 %v2671
        %2800 = vmatpush1.msra.mxu0 %v2670
        %2801 = vmatprep.subr.mxu0 %v2669
        %2802 = vmatpush1.msra.mxu0 %v2668
        %2803 = vmatprep.subr.mxu0 %v2667
        %2804 = vmatpush1.msra.mxu0 %v2666
        %2805 = vmatprep.subr.mxu0 %v2665
        %2806 = vmatpush1.msra.mxu0 %v2664
        %2807 = vmatprep.subr.mxu0 %v2663
        %2808 = vmatpush1.msra.mxu0 %v2662
        %2809 = vmatprep.subr.mxu0 %v2661
        %2810 = vmatpush1.msra.mxu0 %v2660
        %2811 = vmatprep.subr.mxu0 %v2659
        %2812 = vmatpush1.msra.mxu0 %v2658
        %2813 = vmatprep.subr.mxu0 %v2657
        %2814 = vmatpush1.msra.mxu0 %v2656
        %2815 = vmatprep.subr.mxu0 %v2655
        %2816 = vmatpush1.msra.mxu0 %v2654
        %2817 = vmatprep.subr.mxu0 %v2653
        %2818 = vmatpush1.msra.mxu0 %v2652
        %2819 = vmatprep.subr.mxu0 %v2651
        %2820 = vmatpush1.msra.mxu0 %v2650
        %2821 = vmatprep.subr.mxu0 %v2649
        %2822 = vmatpush1.msra.mxu0 %v2648
        %2823 = vmatprep.subr.mxu0 %v2647
        %2824 = vmatpush1.msra.mxu0 %v2646
        %2825 = vmatprep.subr.mxu0 %v2645
        %2826 = vmatpush1.msra.mxu0 %v2644
        %2827 = vmatprep.subr.mxu0 0.0
        %2828 = vmatpush2.msra.mxu0 0.0
        %2829 = vmatprep.subr.mxu0 0.0
        %2830 = vmatpush2.msra.mxu0 0.0
        %2831 = vmatprep.subr.mxu0 0.0
        %2832 = vmatpush2.msra.mxu0 0.0
        %2833 = vmatprep.subr.mxu0 0.0
        %2834 = vmatpush2.msra.mxu0 0.0
        %2835 = vmatprep.subr.mxu0 0.0
        %2836 = vmatpush2.msra.mxu0 0.0
        %2837 = vmatprep.subr.mxu0 0.0
        %2838 = vmatpush2.msra.mxu0 0.0
        %2839 = vmatprep.subr.mxu0 0.0
        %2840 = vmatpush2.msra.mxu0 0.0
        %2841 = vmatprep.subr.mxu0 0.0
        %2842 = vmatpush2.msra.mxu0 0.0
        %2843 = vmatprep.subr.mxu0 0.0
        %2844 = vmatpush2.msra.mxu0 0.0
        %2845 = vmatprep.subr.mxu0 0.0
        %2846 = vmatpush2.msra.mxu0 0.0
        %2847 = vmatprep.subr.mxu0 0.0
        %2848 = vmatpush2.msra.mxu0 0.0
        %2849 = vmatprep.subr.mxu0 0.0
        %2850 = vmatpush2.msra.mxu0 0.0
        %2851 = vmatprep.subr.mxu0 0.0
        %2852 = vmatpush2.msra.mxu0 0.0
        %2853 = vmatprep.subr.mxu0 0.0
        %2854 = vmatpush2.msra.mxu0 0.0
        %2855 = vmatprep.subr.mxu0 0.0
        %2856 = vmatpush2.msra.mxu0 0.0
        %2857 = vmatprep.subr.mxu0 0.0
        %2858 = vmatpush2.msra.mxu0 0.0
        %2859 = vmatprep.mubr.f32.mxu0 0.0
        %2860 = vmatmul.mubr.f32.gmra.mxu0 %v2641
        %v2861 = vpop.f32.mrf.mxu0
        %v2862 = vadd.f32 %v2779, %v2861
        %v2863 = vpop.f32.mrf.mxu0
        %v2864 = vadd.f32 %v2781, %v2863
        %2865 = vmatprep.mubr.f32.mxu0 0.0
        %2866 = vmatmul.mubr.f32.gmra.mxu0 %v2642
        %v2867 = vpop.f32.mrf.mxu0
        %v2868 = vadd.f32 %v2785, %v2867
        %v2869 = vpop.f32.mrf.mxu0
        %v2870 = vadd.f32 %v2787, %v2869
        %2871 = vmatprep.mubr.f32.mxu0 0.0
        %2872 = vmatmul.mubr.f32.gmra.mxu0 %v2643
        %v2873 = vpop.f32.mrf.mxu0
        %v2874 = vadd.f32 %v2791, %v2873
        %v2875 = vpop.f32.mrf.mxu0
        %v2876 = vadd.f32 %v2793, %v2875
        %2877 = vdwg.mxu0
        %v2878 = vld [vmem:[#allocation2 + $0x1] sm:$0xff]
        %v2879 = vld [vmem:[#allocation2 + $0x9] sm:$0xff]
        %v2880 = vld [vmem:[#allocation2 + $0x11] sm:$0x1f]
        %s2881 = scalar_lea.vmem %s3, 512
        %v2882 = vld [vmem:[%s2881] sm:$0xff]
        %v2883 = vld [vmem:[%s2881 + $0x8] sm:$0xff]
        %v2884 = vld [vmem:[%s2881 + $0x10] sm:$0xff]
        %v2885 = vld [vmem:[%s2881 + $0x18] sm:$0xff]
        %v2886 = vld [vmem:[%s2881 + $0x20] sm:$0xff]
        %v2887 = vld [vmem:[%s2881 + $0x28] sm:$0xff]
        %v2888 = vld [vmem:[%s2881 + $0x30] sm:$0xff]
        %v2889 = vld [vmem:[%s2881 + $0x38] sm:$0xff]
        %v2890 = vld [vmem:[%s2881 + $0x40] sm:$0xff]
        %v2891 = vld [vmem:[%s2881 + $0x48] sm:$0xff]
        %v2892 = vld [vmem:[%s2881 + $0x50] sm:$0xff]
        %v2893 = vld [vmem:[%s2881 + $0x58] sm:$0xff]
        %v2894 = vld [vmem:[%s2881 + $0x60] sm:$0xff]
        %v2895 = vld [vmem:[%s2881 + $0x68] sm:$0xff]
        %v2896 = vld [vmem:[%s2881 + $0x70] sm:$0xff]
        %v2897 = vld [vmem:[%s2881 + $0x78] sm:$0xff]
        %v2898 = vld [vmem:[%s2881 + $0x80] sm:$0xff]
        %v2899 = vld [vmem:[%s2881 + $0x88] sm:$0xff]
        %v2900 = vld [vmem:[%s2881 + $0x90] sm:$0xff]
        %v2901 = vld [vmem:[%s2881 + $0x98] sm:$0xff]
        %v2902 = vld [vmem:[%s2881 + $0xa0] sm:$0xff]
        %v2903 = vld [vmem:[%s2881 + $0xa8] sm:$0xff]
        %v2904 = vld [vmem:[%s2881 + $0xb0] sm:$0xff]
        %v2905 = vld [vmem:[%s2881 + $0xb8] sm:$0xff]
        %v2906 = vld [vmem:[%s2881 + $0xc0] sm:$0xff]
        %v2907 = vld [vmem:[%s2881 + $0xc8] sm:$0xff]
        %v2908 = vld [vmem:[%s2881 + $0xd0] sm:$0xff]
        %v2909 = vld [vmem:[%s2881 + $0xd8] sm:$0xff]
        %v2910 = vld [vmem:[%s2881 + $0xe0] sm:$0xff]
        %v2911 = vld [vmem:[%s2881 + $0xe8] sm:$0xff]
        %v2912 = vld [vmem:[%s2881 + $0xf0] sm:$0xff]
        %v2913 = vld [vmem:[%s2881 + $0xf8] sm:$0xff]
        %2914 = vmatprep.subr.mxu0 %v2913
        %2915 = vmatpush1.msra.mxu0 %v2912
        %2916 = vmatprep.subr.mxu0 %v2911
        %2917 = vmatpush1.msra.mxu0 %v2910
        %2918 = vmatprep.subr.mxu0 %v2909
        %2919 = vmatpush1.msra.mxu0 %v2908
        %2920 = vmatprep.subr.mxu0 %v2907
        %2921 = vmatpush1.msra.mxu0 %v2906
        %2922 = vmatprep.subr.mxu0 %v2905
        %2923 = vmatpush1.msra.mxu0 %v2904
        %2924 = vmatprep.subr.mxu0 %v2903
        %2925 = vmatpush1.msra.mxu0 %v2902
        %2926 = vmatprep.subr.mxu0 %v2901
        %2927 = vmatpush1.msra.mxu0 %v2900
        %2928 = vmatprep.subr.mxu0 %v2899
        %2929 = vmatpush1.msra.mxu0 %v2898
        %2930 = vmatprep.subr.mxu0 %v2897
        %2931 = vmatpush1.msra.mxu0 %v2896
        %2932 = vmatprep.subr.mxu0 %v2895
        %2933 = vmatpush1.msra.mxu0 %v2894
        %2934 = vmatprep.subr.mxu0 %v2893
        %2935 = vmatpush1.msra.mxu0 %v2892
        %2936 = vmatprep.subr.mxu0 %v2891
        %2937 = vmatpush1.msra.mxu0 %v2890
        %2938 = vmatprep.subr.mxu0 %v2889
        %2939 = vmatpush1.msra.mxu0 %v2888
        %2940 = vmatprep.subr.mxu0 %v2887
        %2941 = vmatpush1.msra.mxu0 %v2886
        %2942 = vmatprep.subr.mxu0 %v2885
        %2943 = vmatpush1.msra.mxu0 %v2884
        %2944 = vmatprep.subr.mxu0 %v2883
        %2945 = vmatpush1.msra.mxu0 %v2882
        %2946 = vmatprep.subr.mxu0 0.0
        %2947 = vmatpush2.msra.mxu0 0.0
        %2948 = vmatprep.subr.mxu0 0.0
        %2949 = vmatpush2.msra.mxu0 0.0
        %2950 = vmatprep.subr.mxu0 0.0
        %2951 = vmatpush2.msra.mxu0 0.0
        %2952 = vmatprep.subr.mxu0 0.0
        %2953 = vmatpush2.msra.mxu0 0.0
        %2954 = vmatprep.subr.mxu0 0.0
        %2955 = vmatpush2.msra.mxu0 0.0
        %2956 = vmatprep.subr.mxu0 0.0
        %2957 = vmatpush2.msra.mxu0 0.0
        %2958 = vmatprep.subr.mxu0 0.0
        %2959 = vmatpush2.msra.mxu0 0.0
        %2960 = vmatprep.subr.mxu0 0.0
        %2961 = vmatpush2.msra.mxu0 0.0
        %2962 = vmatprep.subr.mxu0 0.0
        %2963 = vmatpush2.msra.mxu0 0.0
        %2964 = vmatprep.subr.mxu0 0.0
        %2965 = vmatpush2.msra.mxu0 0.0
        %2966 = vmatprep.subr.mxu0 0.0
        %2967 = vmatpush2.msra.mxu0 0.0
        %2968 = vmatprep.subr.mxu0 0.0
        %2969 = vmatpush2.msra.mxu0 0.0
        %2970 = vmatprep.subr.mxu0 0.0
        %2971 = vmatpush2.msra.mxu0 0.0
        %2972 = vmatprep.subr.mxu0 0.0
        %2973 = vmatpush2.msra.mxu0 0.0
        %2974 = vmatprep.subr.mxu0 0.0
        %2975 = vmatpush2.msra.mxu0 0.0
        %2976 = vmatprep.subr.mxu0 0.0
        %2977 = vmatpush2.msra.mxu0 0.0
        %2978 = vmatprep.mubr.f32.mxu0 0.0
        %2979 = vmatmul.mubr.f32.gmra.mxu0 %v2878
        %v2980 = vpop.f32.mrf.mxu0
        %v2981 = vadd.f32 0.0, %v2980
        %v2982 = vpop.f32.mrf.mxu0
        %v2983 = vadd.f32 0.0, %v2982
        %2984 = vmatprep.mubr.f32.mxu0 0.0
        %2985 = vmatmul.mubr.f32.gmra.mxu0 %v2879
        %v2986 = vpop.f32.mrf.mxu0
        %v2987 = vadd.f32 0.0, %v2986
        %v2988 = vpop.f32.mrf.mxu0
        %v2989 = vadd.f32 0.0, %v2988
        %2990 = vmatprep.mubr.f32.mxu0 0.0
        %2991 = vmatmul.mubr.f32.gmra.mxu0 %v2880
        %v2992 = vpop.f32.mrf.mxu0
        %v2993 = vadd.f32 0.0, %v2992
        %v2994 = vpop.f32.mrf.mxu0
        %v2995 = vadd.f32 0.0, %v2994
        %2996 = vdwg.mxu0
        %v2997 = vadd.f32 %v2862, %v2981
        %v2998 = vadd.f32 %v2864, %v2983
        %v2999 = vadd.f32 %v2868, %v2987
        %v3000 = vadd.f32 %v2870, %v2989
        %v3001 = vadd.f32 %v2874, %v2993
        %v3002 = vadd.f32 %v2876, %v2995
        %v3003 = vld [vmem:[%s405 + $0x1] sm:$0xff]
        %v3004 = vld [vmem:[%s405 + $0x9] sm:$0xff]
        %v3005 = vld [vmem:[%s405 + $0x11] sm:$0x1f]
        %s3006 = scalar_lea.vmem %s3, 768
        %v3007 = vld [vmem:[%s3006] sm:$0xff]
        %v3008 = vld [vmem:[%s3006 + $0x8] sm:$0xff]
        %v3009 = vld [vmem:[%s3006 + $0x10] sm:$0xff]
        %v3010 = vld [vmem:[%s3006 + $0x18] sm:$0xff]
        %v3011 = vld [vmem:[%s3006 + $0x20] sm:$0xff]
        %v3012 = vld [vmem:[%s3006 + $0x28] sm:$0xff]
        %v3013 = vld [vmem:[%s3006 + $0x30] sm:$0xff]
        %v3014 = vld [vmem:[%s3006 + $0x38] sm:$0xff]
        %v3015 = vld [vmem:[%s3006 + $0x40] sm:$0xff]
        %v3016 = vld [vmem:[%s3006 + $0x48] sm:$0xff]
        %v3017 = vld [vmem:[%s3006 + $0x50] sm:$0xff]
        %v3018 = vld [vmem:[%s3006 + $0x58] sm:$0xff]
        %v3019 = vld [vmem:[%s3006 + $0x60] sm:$0xff]
        %v3020 = vld [vmem:[%s3006 + $0x68] sm:$0xff]
        %v3021 = vld [vmem:[%s3006 + $0x70] sm:$0xff]
        %v3022 = vld [vmem:[%s3006 + $0x78] sm:$0xff]
        %v3023 = vld [vmem:[%s3006 + $0x80] sm:$0xff]
        %v3024 = vld [vmem:[%s3006 + $0x88] sm:$0xff]
        %v3025 = vld [vmem:[%s3006 + $0x90] sm:$0xff]
        %v3026 = vld [vmem:[%s3006 + $0x98] sm:$0xff]
        %v3027 = vld [vmem:[%s3006 + $0xa0] sm:$0xff]
        %v3028 = vld [vmem:[%s3006 + $0xa8] sm:$0xff]
        %v3029 = vld [vmem:[%s3006 + $0xb0] sm:$0xff]
        %v3030 = vld [vmem:[%s3006 + $0xb8] sm:$0xff]
        %v3031 = vld [vmem:[%s3006 + $0xc0] sm:$0xff]
        %v3032 = vld [vmem:[%s3006 + $0xc8] sm:$0xff]
        %v3033 = vld [vmem:[%s3006 + $0xd0] sm:$0xff]
        %v3034 = vld [vmem:[%s3006 + $0xd8] sm:$0xff]
        %v3035 = vld [vmem:[%s3006 + $0xe0] sm:$0xff]
        %v3036 = vld [vmem:[%s3006 + $0xe8] sm:$0xff]
        %v3037 = vld [vmem:[%s3006 + $0xf0] sm:$0xff]
        %v3038 = vld [vmem:[%s3006 + $0xf8] sm:$0xff]
        %3039 = vmatprep.subr.mxu0 %v3038
        %3040 = vmatpush1.msra.mxu0 %v3037
        %3041 = vmatprep.subr.mxu0 %v3036
        %3042 = vmatpush1.msra.mxu0 %v3035
        %3043 = vmatprep.subr.mxu0 %v3034
        %3044 = vmatpush1.msra.mxu0 %v3033
        %3045 = vmatprep.subr.mxu0 %v3032
        %3046 = vmatpush1.msra.mxu0 %v3031
        %3047 = vmatprep.subr.mxu0 %v3030
        %3048 = vmatpush1.msra.mxu0 %v3029
        %3049 = vmatprep.subr.mxu0 %v3028
        %3050 = vmatpush1.msra.mxu0 %v3027
        %3051 = vmatprep.subr.mxu0 %v3026
        %3052 = vmatpush1.msra.mxu0 %v3025
        %3053 = vmatprep.subr.mxu0 %v3024
        %3054 = vmatpush1.msra.mxu0 %v3023
        %3055 = vmatprep.subr.mxu0 %v3022
        %3056 = vmatpush1.msra.mxu0 %v3021
        %3057 = vmatprep.subr.mxu0 %v3020
        %3058 = vmatpush1.msra.mxu0 %v3019
        %3059 = vmatprep.subr.mxu0 %v3018
        %3060 = vmatpush1.msra.mxu0 %v3017
        %3061 = vmatprep.subr.mxu0 %v3016
        %3062 = vmatpush1.msra.mxu0 %v3015
        %3063 = vmatprep.subr.mxu0 %v3014
        %3064 = vmatpush1.msra.mxu0 %v3013
        %3065 = vmatprep.subr.mxu0 %v3012
        %3066 = vmatpush1.msra.mxu0 %v3011
        %3067 = vmatprep.subr.mxu0 %v3010
        %3068 = vmatpush1.msra.mxu0 %v3009
        %3069 = vmatprep.subr.mxu0 %v3008
        %3070 = vmatpush1.msra.mxu0 %v3007
        %3071 = vmatprep.subr.mxu0 0.0
        %3072 = vmatpush2.msra.mxu0 0.0
        %3073 = vmatprep.subr.mxu0 0.0
        %3074 = vmatpush2.msra.mxu0 0.0
        %3075 = vmatprep.subr.mxu0 0.0
        %3076 = vmatpush2.msra.mxu0 0.0
        %3077 = vmatprep.subr.mxu0 0.0
        %3078 = vmatpush2.msra.mxu0 0.0
        %3079 = vmatprep.subr.mxu0 0.0
        %3080 = vmatpush2.msra.mxu0 0.0
        %3081 = vmatprep.subr.mxu0 0.0
        %3082 = vmatpush2.msra.mxu0 0.0
        %3083 = vmatprep.subr.mxu0 0.0
        %3084 = vmatpush2.msra.mxu0 0.0
        %3085 = vmatprep.subr.mxu0 0.0
        %3086 = vmatpush2.msra.mxu0 0.0
        %3087 = vmatprep.subr.mxu0 0.0
        %3088 = vmatpush2.msra.mxu0 0.0
        %3089 = vmatprep.subr.mxu0 0.0
        %3090 = vmatpush2.msra.mxu0 0.0
        %3091 = vmatprep.subr.mxu0 0.0
        %3092 = vmatpush2.msra.mxu0 0.0
        %3093 = vmatprep.subr.mxu0 0.0
        %3094 = vmatpush2.msra.mxu0 0.0
        %3095 = vmatprep.subr.mxu0 0.0
        %3096 = vmatpush2.msra.mxu0 0.0
        %3097 = vmatprep.subr.mxu0 0.0
        %3098 = vmatpush2.msra.mxu0 0.0
        %3099 = vmatprep.subr.mxu0 0.0
        %3100 = vmatpush2.msra.mxu0 0.0
        %3101 = vmatprep.subr.mxu0 0.0
        %3102 = vmatpush2.msra.mxu0 0.0
        %3103 = vmatprep.mubr.f32.mxu0 0.0
        %3104 = vmatmul.mubr.f32.gmra.mxu0 %v3003
        %v3105 = vpop.f32.mrf.mxu0
        %v3106 = vadd.f32 0.0, %v3105
        %v3107 = vpop.f32.mrf.mxu0
        %v3108 = vadd.f32 0.0, %v3107
        %3109 = vmatprep.mubr.f32.mxu0 0.0
        %3110 = vmatmul.mubr.f32.gmra.mxu0 %v3004
        %v3111 = vpop.f32.mrf.mxu0
        %v3112 = vadd.f32 0.0, %v3111
        %v3113 = vpop.f32.mrf.mxu0
        %v3114 = vadd.f32 0.0, %v3113
        %3115 = vmatprep.mubr.f32.mxu0 0.0
        %3116 = vmatmul.mubr.f32.gmra.mxu0 %v3005
        %v3117 = vpop.f32.mrf.mxu0
        %v3118 = vadd.f32 0.0, %v3117
        %v3119 = vpop.f32.mrf.mxu0
        %v3120 = vadd.f32 0.0, %v3119
        %3121 = vdwg.mxu0
        %v3122 = vadd.f32 %v2997, %v3106
        %v3123 = vadd.f32 %v2998, %v3108
        %v3124 = vadd.f32 %v2999, %v3112
        %v3125 = vadd.f32 %v3000, %v3114
        %v3126 = vadd.f32 %v3001, %v3118
        %v3127 = vadd.f32 %v3002, %v3120
        %v3128 = vld [vmem:[#allocation2 + $0x2] sm:$0xff]
        %v3129 = vld [vmem:[#allocation2 + $0xa] sm:$0xff]
        %v3130 = vld [vmem:[#allocation2 + $0x12] sm:$0x1f]
        %s3131 = scalar_lea.vmem %s3, 1024
        %v3132 = vld [vmem:[%s3131] sm:$0xff]
        %v3133 = vld [vmem:[%s3131 + $0x8] sm:$0xff]
        %v3134 = vld [vmem:[%s3131 + $0x10] sm:$0xff]
        %v3135 = vld [vmem:[%s3131 + $0x18] sm:$0xff]
        %v3136 = vld [vmem:[%s3131 + $0x20] sm:$0xff]
        %v3137 = vld [vmem:[%s3131 + $0x28] sm:$0xff]
        %v3138 = vld [vmem:[%s3131 + $0x30] sm:$0xff]
        %v3139 = vld [vmem:[%s3131 + $0x38] sm:$0xff]
        %v3140 = vld [vmem:[%s3131 + $0x40] sm:$0xff]
        %v3141 = vld [vmem:[%s3131 + $0x48] sm:$0xff]
        %v3142 = vld [vmem:[%s3131 + $0x50] sm:$0xff]
        %v3143 = vld [vmem:[%s3131 + $0x58] sm:$0xff]
        %v3144 = vld [vmem:[%s3131 + $0x60] sm:$0xff]
        %v3145 = vld [vmem:[%s3131 + $0x68] sm:$0xff]
        %v3146 = vld [vmem:[%s3131 + $0x70] sm:$0xff]
        %v3147 = vld [vmem:[%s3131 + $0x78] sm:$0xff]
        %v3148 = vld [vmem:[%s3131 + $0x80] sm:$0xff]
        %v3149 = vld [vmem:[%s3131 + $0x88] sm:$0xff]
        %v3150 = vld [vmem:[%s3131 + $0x90] sm:$0xff]
        %v3151 = vld [vmem:[%s3131 + $0x98] sm:$0xff]
        %v3152 = vld [vmem:[%s3131 + $0xa0] sm:$0xff]
        %v3153 = vld [vmem:[%s3131 + $0xa8] sm:$0xff]
        %v3154 = vld [vmem:[%s3131 + $0xb0] sm:$0xff]
        %v3155 = vld [vmem:[%s3131 + $0xb8] sm:$0xff]
        %v3156 = vld [vmem:[%s3131 + $0xc0] sm:$0xff]
        %v3157 = vld [vmem:[%s3131 + $0xc8] sm:$0xff]
        %v3158 = vld [vmem:[%s3131 + $0xd0] sm:$0xff]
        %v3159 = vld [vmem:[%s3131 + $0xd8] sm:$0xff]
        %v3160 = vld [vmem:[%s3131 + $0xe0] sm:$0xff]
        %v3161 = vld [vmem:[%s3131 + $0xe8] sm:$0xff]
        %v3162 = vld [vmem:[%s3131 + $0xf0] sm:$0xff]
        %v3163 = vld [vmem:[%s3131 + $0xf8] sm:$0xff]
        %3164 = vmatprep.subr.mxu0 %v3163
        %3165 = vmatpush1.msra.mxu0 %v3162
        %3166 = vmatprep.subr.mxu0 %v3161
        %3167 = vmatpush1.msra.mxu0 %v3160
        %3168 = vmatprep.subr.mxu0 %v3159
        %3169 = vmatpush1.msra.mxu0 %v3158
        %3170 = vmatprep.subr.mxu0 %v3157
        %3171 = vmatpush1.msra.mxu0 %v3156
        %3172 = vmatprep.subr.mxu0 %v3155
        %3173 = vmatpush1.msra.mxu0 %v3154
        %3174 = vmatprep.subr.mxu0 %v3153
        %3175 = vmatpush1.msra.mxu0 %v3152
        %3176 = vmatprep.subr.mxu0 %v3151
        %3177 = vmatpush1.msra.mxu0 %v3150
        %3178 = vmatprep.subr.mxu0 %v3149
        %3179 = vmatpush1.msra.mxu0 %v3148
        %3180 = vmatprep.subr.mxu0 %v3147
        %3181 = vmatpush1.msra.mxu0 %v3146
        %3182 = vmatprep.subr.mxu0 %v3145
        %3183 = vmatpush1.msra.mxu0 %v3144
        %3184 = vmatprep.subr.mxu0 %v3143
        %3185 = vmatpush1.msra.mxu0 %v3142
        %3186 = vmatprep.subr.mxu0 %v3141
        %3187 = vmatpush1.msra.mxu0 %v3140
        %3188 = vmatprep.subr.mxu0 %v3139
        %3189 = vmatpush1.msra.mxu0 %v3138
        %3190 = vmatprep.subr.mxu0 %v3137
        %3191 = vmatpush1.msra.mxu0 %v3136
        %3192 = vmatprep.subr.mxu0 %v3135
        %3193 = vmatpush1.msra.mxu0 %v3134
        %3194 = vmatprep.subr.mxu0 %v3133
        %3195 = vmatpush1.msra.mxu0 %v3132
        %3196 = vmatprep.subr.mxu0 0.0
        %3197 = vmatpush2.msra.mxu0 0.0
        %3198 = vmatprep.subr.mxu0 0.0
        %3199 = vmatpush2.msra.mxu0 0.0
        %3200 = vmatprep.subr.mxu0 0.0
        %3201 = vmatpush2.msra.mxu0 0.0
        %3202 = vmatprep.subr.mxu0 0.0
        %3203 = vmatpush2.msra.mxu0 0.0
        %3204 = vmatprep.subr.mxu0 0.0
        %3205 = vmatpush2.msra.mxu0 0.0
        %3206 = vmatprep.subr.mxu0 0.0
        %3207 = vmatpush2.msra.mxu0 0.0
        %3208 = vmatprep.subr.mxu0 0.0
        %3209 = vmatpush2.msra.mxu0 0.0
        %3210 = vmatprep.subr.mxu0 0.0
        %3211 = vmatpush2.msra.mxu0 0.0
        %3212 = vmatprep.subr.mxu0 0.0
        %3213 = vmatpush2.msra.mxu0 0.0
        %3214 = vmatprep.subr.mxu0 0.0
        %3215 = vmatpush2.msra.mxu0 0.0
        %3216 = vmatprep.subr.mxu0 0.0
        %3217 = vmatpush2.msra.mxu0 0.0
        %3218 = vmatprep.subr.mxu0 0.0
        %3219 = vmatpush2.msra.mxu0 0.0
        %3220 = vmatprep.subr.mxu0 0.0
        %3221 = vmatpush2.msra.mxu0 0.0
        %3222 = vmatprep.subr.mxu0 0.0
        %3223 = vmatpush2.msra.mxu0 0.0
        %3224 = vmatprep.subr.mxu0 0.0
        %3225 = vmatpush2.msra.mxu0 0.0
        %3226 = vmatprep.subr.mxu0 0.0
        %3227 = vmatpush2.msra.mxu0 0.0
        %3228 = vmatprep.mubr.f32.mxu0 0.0
        %3229 = vmatmul.mubr.f32.gmra.mxu0 %v3128
        %v3230 = vpop.f32.mrf.mxu0
        %v3231 = vadd.f32 0.0, %v3230
        %v3232 = vpop.f32.mrf.mxu0
        %v3233 = vadd.f32 0.0, %v3232
        %3234 = vmatprep.mubr.f32.mxu0 0.0
        %3235 = vmatmul.mubr.f32.gmra.mxu0 %v3129
        %v3236 = vpop.f32.mrf.mxu0
        %v3237 = vadd.f32 0.0, %v3236
        %v3238 = vpop.f32.mrf.mxu0
        %v3239 = vadd.f32 0.0, %v3238
        %3240 = vmatprep.mubr.f32.mxu0 0.0
        %3241 = vmatmul.mubr.f32.gmra.mxu0 %v3130
        %v3242 = vpop.f32.mrf.mxu0
        %v3243 = vadd.f32 0.0, %v3242
        %v3244 = vpop.f32.mrf.mxu0
        %v3245 = vadd.f32 0.0, %v3244
        %3246 = vdwg.mxu0
        %v3247 = vadd.f32 %v3122, %v3231
        %v3248 = vadd.f32 %v3123, %v3233
        %v3249 = vadd.f32 %v3124, %v3237
        %v3250 = vadd.f32 %v3125, %v3239
        %v3251 = vadd.f32 %v3126, %v3243
        %v3252 = vadd.f32 %v3127, %v3245
        %v3253 = vadd.f32 %v3247, %v320
        %v3254 = vadd.f32 %v3248, %v324
        %v3255 = vadd.f32 %v3249, %v320
        %v3256 = vadd.f32 %v3250, %v324
        %v3257 = vadd.f32 %v3251, %v320
        %v3258 = vadd.f32 %v3252, %v324
        %v3259 = vmax.f32 %v3253, 0.0
        %v3260 = vmax.f32 %v3254, 0.0
        %v3261 = vmax.f32 %v3255, 0.0
        %v3262 = vmax.f32 %v3256, 0.0
        %v3263 = vmax.f32 %v3257, 0.0
        %v3264 = vmax.f32 %v3258, 0.0
        %3265 = vmatprep.subr.mxu0 %v2711
        %3266 = vmatpush1.msra.mxu0 %v2710
        %3267 = vmatprep.subr.mxu0 %v2709
        %3268 = vmatpush1.msra.mxu0 %v2708
        %3269 = vmatprep.subr.mxu0 %v2707
        %3270 = vmatpush1.msra.mxu0 %v2706
        %3271 = vmatprep.subr.mxu0 %v2705
        %3272 = vmatpush1.msra.mxu0 %v2704
        %3273 = vmatprep.subr.mxu0 %v2703
        %3274 = vmatpush1.msra.mxu0 %v2702
        %3275 = vmatprep.subr.mxu0 %v2701
        %3276 = vmatpush1.msra.mxu0 %v2700
        %3277 = vmatprep.subr.mxu0 %v2699
        %3278 = vmatpush1.msra.mxu0 %v2698
        %3279 = vmatprep.subr.mxu0 %v2697
        %3280 = vmatpush1.msra.mxu0 %v2696
        %3281 = vmatprep.subr.mxu0 %v2695
        %3282 = vmatpush1.msra.mxu0 %v2694
        %3283 = vmatprep.subr.mxu0 %v2693
        %3284 = vmatpush1.msra.mxu0 %v2692
        %3285 = vmatprep.subr.mxu0 %v2691
        %3286 = vmatpush1.msra.mxu0 %v2690
        %3287 = vmatprep.subr.mxu0 %v2689
        %3288 = vmatpush1.msra.mxu0 %v2688
        %3289 = vmatprep.subr.mxu0 %v2687
        %3290 = vmatpush1.msra.mxu0 %v2686
        %3291 = vmatprep.subr.mxu0 %v2685
        %3292 = vmatpush1.msra.mxu0 %v2684
        %3293 = vmatprep.subr.mxu0 %v2683
        %3294 = vmatpush1.msra.mxu0 %v2682
        %3295 = vmatprep.subr.mxu0 %v2681
        %3296 = vmatpush1.msra.mxu0 %v2680
        %3297 = vmatprep.subr.mxu0 0.0
        %3298 = vmatpush2.msra.mxu0 0.0
        %3299 = vmatprep.subr.mxu0 0.0
        %3300 = vmatpush2.msra.mxu0 0.0
        %3301 = vmatprep.subr.mxu0 0.0
        %3302 = vmatpush2.msra.mxu0 0.0
        %3303 = vmatprep.subr.mxu0 0.0
        %3304 = vmatpush2.msra.mxu0 0.0
        %3305 = vmatprep.subr.mxu0 0.0
        %3306 = vmatpush2.msra.mxu0 0.0
        %3307 = vmatprep.subr.mxu0 0.0
        %3308 = vmatpush2.msra.mxu0 0.0
        %3309 = vmatprep.subr.mxu0 0.0
        %3310 = vmatpush2.msra.mxu0 0.0
        %3311 = vmatprep.subr.mxu0 0.0
        %3312 = vmatpush2.msra.mxu0 0.0
        %3313 = vmatprep.subr.mxu0 0.0
        %3314 = vmatpush2.msra.mxu0 0.0
        %3315 = vmatprep.subr.mxu0 0.0
        %3316 = vmatpush2.msra.mxu0 0.0
        %3317 = vmatprep.subr.mxu0 0.0
        %3318 = vmatpush2.msra.mxu0 0.0
        %3319 = vmatprep.subr.mxu0 0.0
        %3320 = vmatpush2.msra.mxu0 0.0
        %3321 = vmatprep.subr.mxu0 0.0
        %3322 = vmatpush2.msra.mxu0 0.0
        %3323 = vmatprep.subr.mxu0 0.0
        %3324 = vmatpush2.msra.mxu0 0.0
        %3325 = vmatprep.subr.mxu0 0.0
        %3326 = vmatpush2.msra.mxu0 0.0
        %3327 = vmatprep.subr.mxu0 0.0
        %3328 = vmatpush2.msra.mxu0 0.0
        %3329 = vmatprep.mubr.f32.mxu0 0.0
        %3330 = vmatmul.mubr.f32.gmra.mxu0 %v2878
        %v3331 = vpop.f32.mrf.mxu0
        %v3332 = vadd.f32 0.0, %v3331
        %v3333 = vpop.f32.mrf.mxu0
        %v3334 = vadd.f32 0.0, %v3333
        %3335 = vmatprep.mubr.f32.mxu0 0.0
        %3336 = vmatmul.mubr.f32.gmra.mxu0 %v2879
        %v3337 = vpop.f32.mrf.mxu0
        %v3338 = vadd.f32 0.0, %v3337
        %v3339 = vpop.f32.mrf.mxu0
        %v3340 = vadd.f32 0.0, %v3339
        %3341 = vmatprep.mubr.f32.mxu0 0.0
        %3342 = vmatmul.mubr.f32.gmra.mxu0 %v2880
        %v3343 = vpop.f32.mrf.mxu0
        %v3344 = vadd.f32 0.0, %v3343
        %v3345 = vpop.f32.mrf.mxu0
        %v3346 = vadd.f32 0.0, %v3345
        %3347 = vdwg.mxu0
        %3348 = vmatprep.subr.mxu0 %v2675
        %3349 = vmatpush1.msra.mxu0 %v2674
        %3350 = vmatprep.subr.mxu0 %v2673
        %3351 = vmatpush1.msra.mxu0 %v2672
        %3352 = vmatprep.subr.mxu0 %v2671
        %3353 = vmatpush1.msra.mxu0 %v2670
        %3354 = vmatprep.subr.mxu0 %v2669
        %3355 = vmatpush1.msra.mxu0 %v2668
        %3356 = vmatprep.subr.mxu0 %v2667
        %3357 = vmatpush1.msra.mxu0 %v2666
        %3358 = vmatprep.subr.mxu0 %v2665
        %3359 = vmatpush1.msra.mxu0 %v2664
        %3360 = vmatprep.subr.mxu0 %v2663
        %3361 = vmatpush1.msra.mxu0 %v2662
        %3362 = vmatprep.subr.mxu0 %v2661
        %3363 = vmatpush1.msra.mxu0 %v2660
        %3364 = vmatprep.subr.mxu0 %v2659
        %3365 = vmatpush1.msra.mxu0 %v2658
        %3366 = vmatprep.subr.mxu0 %v2657
        %3367 = vmatpush1.msra.mxu0 %v2656
        %3368 = vmatprep.subr.mxu0 %v2655
        %3369 = vmatpush1.msra.mxu0 %v2654
        %3370 = vmatprep.subr.mxu0 %v2653
        %3371 = vmatpush1.msra.mxu0 %v2652
        %3372 = vmatprep.subr.mxu0 %v2651
        %3373 = vmatpush1.msra.mxu0 %v2650
        %3374 = vmatprep.subr.mxu0 %v2649
        %3375 = vmatpush1.msra.mxu0 %v2648
        %3376 = vmatprep.subr.mxu0 %v2647
        %3377 = vmatpush1.msra.mxu0 %v2646
        %3378 = vmatprep.subr.mxu0 %v2645
        %3379 = vmatpush1.msra.mxu0 %v2644
        %3380 = vmatprep.subr.mxu0 0.0
        %3381 = vmatpush2.msra.mxu0 0.0
        %3382 = vmatprep.subr.mxu0 0.0
        %3383 = vmatpush2.msra.mxu0 0.0
        %3384 = vmatprep.subr.mxu0 0.0
        %3385 = vmatpush2.msra.mxu0 0.0
        %3386 = vmatprep.subr.mxu0 0.0
        %3387 = vmatpush2.msra.mxu0 0.0
        %3388 = vmatprep.subr.mxu0 0.0
        %3389 = vmatpush2.msra.mxu0 0.0
        %3390 = vmatprep.subr.mxu0 0.0
        %3391 = vmatpush2.msra.mxu0 0.0
        %3392 = vmatprep.subr.mxu0 0.0
        %3393 = vmatpush2.msra.mxu0 0.0
        %3394 = vmatprep.subr.mxu0 0.0
        %3395 = vmatpush2.msra.mxu0 0.0
        %3396 = vmatprep.subr.mxu0 0.0
        %3397 = vmatpush2.msra.mxu0 0.0
        %3398 = vmatprep.subr.mxu0 0.0
        %3399 = vmatpush2.msra.mxu0 0.0
        %3400 = vmatprep.subr.mxu0 0.0
        %3401 = vmatpush2.msra.mxu0 0.0
        %3402 = vmatprep.subr.mxu0 0.0
        %3403 = vmatpush2.msra.mxu0 0.0
        %3404 = vmatprep.subr.mxu0 0.0
        %3405 = vmatpush2.msra.mxu0 0.0
        %3406 = vmatprep.subr.mxu0 0.0
        %3407 = vmatpush2.msra.mxu0 0.0
        %3408 = vmatprep.subr.mxu0 0.0
        %3409 = vmatpush2.msra.mxu0 0.0
        %3410 = vmatprep.subr.mxu0 0.0
        %3411 = vmatpush2.msra.mxu0 0.0
        %3412 = vmatprep.mubr.f32.mxu0 0.0
        %3413 = vmatmul.mubr.f32.gmra.mxu0 %v2676
        %v3414 = vpop.f32.mrf.mxu0
        %v3415 = vadd.f32 %v3332, %v3414
        %v3416 = vpop.f32.mrf.mxu0
        %v3417 = vadd.f32 %v3334, %v3416
        %3418 = vmatprep.mubr.f32.mxu0 0.0
        %3419 = vmatmul.mubr.f32.gmra.mxu0 %v2677
        %v3420 = vpop.f32.mrf.mxu0
        %v3421 = vadd.f32 %v3338, %v3420
        %v3422 = vpop.f32.mrf.mxu0
        %v3423 = vadd.f32 %v3340, %v3422
        %3424 = vmatprep.mubr.f32.mxu0 0.0
        %3425 = vmatmul.mubr.f32.gmra.mxu0 %v2678
        %v3426 = vpop.f32.mrf.mxu0
        %v3427 = vadd.f32 %v3344, %v3426
        %v3428 = vpop.f32.mrf.mxu0
        %v3429 = vadd.f32 %v3346, %v3428
        %3430 = vdwg.mxu0
        %3431 = vmatprep.subr.mxu0 %v2913
        %3432 = vmatpush1.msra.mxu0 %v2912
        %3433 = vmatprep.subr.mxu0 %v2911
        %3434 = vmatpush1.msra.mxu0 %v2910
        %3435 = vmatprep.subr.mxu0 %v2909
        %3436 = vmatpush1.msra.mxu0 %v2908
        %3437 = vmatprep.subr.mxu0 %v2907
        %3438 = vmatpush1.msra.mxu0 %v2906
        %3439 = vmatprep.subr.mxu0 %v2905
        %3440 = vmatpush1.msra.mxu0 %v2904
        %3441 = vmatprep.subr.mxu0 %v2903
        %3442 = vmatpush1.msra.mxu0 %v2902
        %3443 = vmatprep.subr.mxu0 %v2901
        %3444 = vmatpush1.msra.mxu0 %v2900
        %3445 = vmatprep.subr.mxu0 %v2899
        %3446 = vmatpush1.msra.mxu0 %v2898
        %3447 = vmatprep.subr.mxu0 %v2897
        %3448 = vmatpush1.msra.mxu0 %v2896
        %3449 = vmatprep.subr.mxu0 %v2895
        %3450 = vmatpush1.msra.mxu0 %v2894
        %3451 = vmatprep.subr.mxu0 %v2893
        %3452 = vmatpush1.msra.mxu0 %v2892
        %3453 = vmatprep.subr.mxu0 %v2891
        %3454 = vmatpush1.msra.mxu0 %v2890
        %3455 = vmatprep.subr.mxu0 %v2889
        %3456 = vmatpush1.msra.mxu0 %v2888
        %3457 = vmatprep.subr.mxu0 %v2887
        %3458 = vmatpush1.msra.mxu0 %v2886
        %3459 = vmatprep.subr.mxu0 %v2885
        %3460 = vmatpush1.msra.mxu0 %v2884
        %3461 = vmatprep.subr.mxu0 %v2883
        %3462 = vmatpush1.msra.mxu0 %v2882
        %3463 = vmatprep.subr.mxu0 0.0
        %3464 = vmatpush2.msra.mxu0 0.0
        %3465 = vmatprep.subr.mxu0 0.0
        %3466 = vmatpush2.msra.mxu0 0.0
        %3467 = vmatprep.subr.mxu0 0.0
        %3468 = vmatpush2.msra.mxu0 0.0
        %3469 = vmatprep.subr.mxu0 0.0
        %3470 = vmatpush2.msra.mxu0 0.0
        %3471 = vmatprep.subr.mxu0 0.0
        %3472 = vmatpush2.msra.mxu0 0.0
        %3473 = vmatprep.subr.mxu0 0.0
        %3474 = vmatpush2.msra.mxu0 0.0
        %3475 = vmatprep.subr.mxu0 0.0
        %3476 = vmatpush2.msra.mxu0 0.0
        %3477 = vmatprep.subr.mxu0 0.0
        %3478 = vmatpush2.msra.mxu0 0.0
        %3479 = vmatprep.subr.mxu0 0.0
        %3480 = vmatpush2.msra.mxu0 0.0
        %3481 = vmatprep.subr.mxu0 0.0
        %3482 = vmatpush2.msra.mxu0 0.0
        %3483 = vmatprep.subr.mxu0 0.0
        %3484 = vmatpush2.msra.mxu0 0.0
        %3485 = vmatprep.subr.mxu0 0.0
        %3486 = vmatpush2.msra.mxu0 0.0
        %3487 = vmatprep.subr.mxu0 0.0
        %3488 = vmatpush2.msra.mxu0 0.0
        %3489 = vmatprep.subr.mxu0 0.0
        %3490 = vmatpush2.msra.mxu0 0.0
        %3491 = vmatprep.subr.mxu0 0.0
        %3492 = vmatpush2.msra.mxu0 0.0
        %3493 = vmatprep.subr.mxu0 0.0
        %3494 = vmatpush2.msra.mxu0 0.0
        %3495 = vmatprep.mubr.f32.mxu0 0.0
        %3496 = vmatmul.mubr.f32.gmra.mxu0 %v3003
        %v3497 = vpop.f32.mrf.mxu0
        %v3498 = vadd.f32 0.0, %v3497
        %v3499 = vpop.f32.mrf.mxu0
        %v3500 = vadd.f32 0.0, %v3499
        %3501 = vmatprep.mubr.f32.mxu0 0.0
        %3502 = vmatmul.mubr.f32.gmra.mxu0 %v3004
        %v3503 = vpop.f32.mrf.mxu0
        %v3504 = vadd.f32 0.0, %v3503
        %v3505 = vpop.f32.mrf.mxu0
        %v3506 = vadd.f32 0.0, %v3505
        %3507 = vmatprep.mubr.f32.mxu0 0.0
        %3508 = vmatmul.mubr.f32.gmra.mxu0 %v3005
        %v3509 = vpop.f32.mrf.mxu0
        %v3510 = vadd.f32 0.0, %v3509
        %v3511 = vpop.f32.mrf.mxu0
        %v3512 = vadd.f32 0.0, %v3511
        %3513 = vdwg.mxu0
        %v3514 = vadd.f32 %v3415, %v3498
        %v3515 = vadd.f32 %v3417, %v3500
        %v3516 = vadd.f32 %v3421, %v3504
        %v3517 = vadd.f32 %v3423, %v3506
        %v3518 = vadd.f32 %v3427, %v3510
        %v3519 = vadd.f32 %v3429, %v3512
        %3520 = vmatprep.subr.mxu0 %v3038
        %3521 = vmatpush1.msra.mxu0 %v3037
        %3522 = vmatprep.subr.mxu0 %v3036
        %3523 = vmatpush1.msra.mxu0 %v3035
        %3524 = vmatprep.subr.mxu0 %v3034
        %3525 = vmatpush1.msra.mxu0 %v3033
        %3526 = vmatprep.subr.mxu0 %v3032
        %3527 = vmatpush1.msra.mxu0 %v3031
        %3528 = vmatprep.subr.mxu0 %v3030
        %3529 = vmatpush1.msra.mxu0 %v3029
        %3530 = vmatprep.subr.mxu0 %v3028
        %3531 = vmatpush1.msra.mxu0 %v3027
        %3532 = vmatprep.subr.mxu0 %v3026
        %3533 = vmatpush1.msra.mxu0 %v3025
        %3534 = vmatprep.subr.mxu0 %v3024
        %3535 = vmatpush1.msra.mxu0 %v3023
        %3536 = vmatprep.subr.mxu0 %v3022
        %3537 = vmatpush1.msra.mxu0 %v3021
        %3538 = vmatprep.subr.mxu0 %v3020
        %3539 = vmatpush1.msra.mxu0 %v3019
        %3540 = vmatprep.subr.mxu0 %v3018
        %3541 = vmatpush1.msra.mxu0 %v3017
        %3542 = vmatprep.subr.mxu0 %v3016
        %3543 = vmatpush1.msra.mxu0 %v3015
        %3544 = vmatprep.subr.mxu0 %v3014
        %3545 = vmatpush1.msra.mxu0 %v3013
        %3546 = vmatprep.subr.mxu0 %v3012
        %3547 = vmatpush1.msra.mxu0 %v3011
        %3548 = vmatprep.subr.mxu0 %v3010
        %3549 = vmatpush1.msra.mxu0 %v3009
        %3550 = vmatprep.subr.mxu0 %v3008
        %3551 = vmatpush1.msra.mxu0 %v3007
        %3552 = vmatprep.subr.mxu0 0.0
        %3553 = vmatpush2.msra.mxu0 0.0
        %3554 = vmatprep.subr.mxu0 0.0
        %3555 = vmatpush2.msra.mxu0 0.0
        %3556 = vmatprep.subr.mxu0 0.0
        %3557 = vmatpush2.msra.mxu0 0.0
        %3558 = vmatprep.subr.mxu0 0.0
        %3559 = vmatpush2.msra.mxu0 0.0
        %3560 = vmatprep.subr.mxu0 0.0
        %3561 = vmatpush2.msra.mxu0 0.0
        %3562 = vmatprep.subr.mxu0 0.0
        %3563 = vmatpush2.msra.mxu0 0.0
        %3564 = vmatprep.subr.mxu0 0.0
        %3565 = vmatpush2.msra.mxu0 0.0
        %3566 = vmatprep.subr.mxu0 0.0
        %3567 = vmatpush2.msra.mxu0 0.0
        %3568 = vmatprep.subr.mxu0 0.0
        %3569 = vmatpush2.msra.mxu0 0.0
        %3570 = vmatprep.subr.mxu0 0.0
        %3571 = vmatpush2.msra.mxu0 0.0
        %3572 = vmatprep.subr.mxu0 0.0
        %3573 = vmatpush2.msra.mxu0 0.0
        %3574 = vmatprep.subr.mxu0 0.0
        %3575 = vmatpush2.msra.mxu0 0.0
        %3576 = vmatprep.subr.mxu0 0.0
        %3577 = vmatpush2.msra.mxu0 0.0
        %3578 = vmatprep.subr.mxu0 0.0
        %3579 = vmatpush2.msra.mxu0 0.0
        %3580 = vmatprep.subr.mxu0 0.0
        %3581 = vmatpush2.msra.mxu0 0.0
        %3582 = vmatprep.subr.mxu0 0.0
        %3583 = vmatpush2.msra.mxu0 0.0
        %3584 = vmatprep.mubr.f32.mxu0 0.0
        %3585 = vmatmul.mubr.f32.gmra.mxu0 %v3128
        %v3586 = vpop.f32.mrf.mxu0
        %v3587 = vadd.f32 0.0, %v3586
        %v3588 = vpop.f32.mrf.mxu0
        %v3589 = vadd.f32 0.0, %v3588
        %3590 = vmatprep.mubr.f32.mxu0 0.0
        %3591 = vmatmul.mubr.f32.gmra.mxu0 %v3129
        %v3592 = vpop.f32.mrf.mxu0
        %v3593 = vadd.f32 0.0, %v3592
        %v3594 = vpop.f32.mrf.mxu0
        %v3595 = vadd.f32 0.0, %v3594
        %3596 = vmatprep.mubr.f32.mxu0 0.0
        %3597 = vmatmul.mubr.f32.gmra.mxu0 %v3130
        %v3598 = vpop.f32.mrf.mxu0
        %v3599 = vadd.f32 0.0, %v3598
        %v3600 = vpop.f32.mrf.mxu0
        %v3601 = vadd.f32 0.0, %v3600
        %3602 = vdwg.mxu0
        %v3603 = vadd.f32 %v3514, %v3587
        %v3604 = vadd.f32 %v3515, %v3589
        %v3605 = vadd.f32 %v3516, %v3593
        %v3606 = vadd.f32 %v3517, %v3595
        %v3607 = vadd.f32 %v3518, %v3599
        %v3608 = vadd.f32 %v3519, %v3601
        %v3609 = vld [vmem:[%s405 + $0x2] sm:$0xff]
        %v3610 = vld [vmem:[%s405 + $0xa] sm:$0xff]
        %v3611 = vld [vmem:[%s405 + $0x12] sm:$0x1f]
        %3612 = vmatprep.subr.mxu0 %v3163
        %3613 = vmatpush1.msra.mxu0 %v3162
        %3614 = vmatprep.subr.mxu0 %v3161
        %3615 = vmatpush1.msra.mxu0 %v3160
        %3616 = vmatprep.subr.mxu0 %v3159
        %3617 = vmatpush1.msra.mxu0 %v3158
        %3618 = vmatprep.subr.mxu0 %v3157
        %3619 = vmatpush1.msra.mxu0 %v3156
        %3620 = vmatprep.subr.mxu0 %v3155
        %3621 = vmatpush1.msra.mxu0 %v3154
        %3622 = vmatprep.subr.mxu0 %v3153
        %3623 = vmatpush1.msra.mxu0 %v3152
        %3624 = vmatprep.subr.mxu0 %v3151
        %3625 = vmatpush1.msra.mxu0 %v3150
        %3626 = vmatprep.subr.mxu0 %v3149
        %3627 = vmatpush1.msra.mxu0 %v3148
        %3628 = vmatprep.subr.mxu0 %v3147
        %3629 = vmatpush1.msra.mxu0 %v3146
        %3630 = vmatprep.subr.mxu0 %v3145
        %3631 = vmatpush1.msra.mxu0 %v3144
        %3632 = vmatprep.subr.mxu0 %v3143
        %3633 = vmatpush1.msra.mxu0 %v3142
        %3634 = vmatprep.subr.mxu0 %v3141
        %3635 = vmatpush1.msra.mxu0 %v3140
        %3636 = vmatprep.subr.mxu0 %v3139
        %3637 = vmatpush1.msra.mxu0 %v3138
        %3638 = vmatprep.subr.mxu0 %v3137
        %3639 = vmatpush1.msra.mxu0 %v3136
        %3640 = vmatprep.subr.mxu0 %v3135
        %3641 = vmatpush1.msra.mxu0 %v3134
        %3642 = vmatprep.subr.mxu0 %v3133
        %3643 = vmatpush1.msra.mxu0 %v3132
        %3644 = vmatprep.subr.mxu0 0.0
        %3645 = vmatpush2.msra.mxu0 0.0
        %3646 = vmatprep.subr.mxu0 0.0
        %3647 = vmatpush2.msra.mxu0 0.0
        %3648 = vmatprep.subr.mxu0 0.0
        %3649 = vmatpush2.msra.mxu0 0.0
        %3650 = vmatprep.subr.mxu0 0.0
        %3651 = vmatpush2.msra.mxu0 0.0
        %3652 = vmatprep.subr.mxu0 0.0
        %3653 = vmatpush2.msra.mxu0 0.0
        %3654 = vmatprep.subr.mxu0 0.0
        %3655 = vmatpush2.msra.mxu0 0.0
        %3656 = vmatprep.subr.mxu0 0.0
        %3657 = vmatpush2.msra.mxu0 0.0
        %3658 = vmatprep.subr.mxu0 0.0
        %3659 = vmatpush2.msra.mxu0 0.0
        %3660 = vmatprep.subr.mxu0 0.0
        %3661 = vmatpush2.msra.mxu0 0.0
        %3662 = vmatprep.subr.mxu0 0.0
        %3663 = vmatpush2.msra.mxu0 0.0
        %3664 = vmatprep.subr.mxu0 0.0
        %3665 = vmatpush2.msra.mxu0 0.0
        %3666 = vmatprep.subr.mxu0 0.0
        %3667 = vmatpush2.msra.mxu0 0.0
        %3668 = vmatprep.subr.mxu0 0.0
        %3669 = vmatpush2.msra.mxu0 0.0
        %3670 = vmatprep.subr.mxu0 0.0
        %3671 = vmatpush2.msra.mxu0 0.0
        %3672 = vmatprep.subr.mxu0 0.0
        %3673 = vmatpush2.msra.mxu0 0.0
        %3674 = vmatprep.subr.mxu0 0.0
        %3675 = vmatpush2.msra.mxu0 0.0
        %3676 = vmatprep.mubr.f32.mxu0 0.0
        %3677 = vmatmul.mubr.f32.gmra.mxu0 %v3609
        %v3678 = vpop.f32.mrf.mxu0
        %v3679 = vadd.f32 0.0, %v3678
        %v3680 = vpop.f32.mrf.mxu0
        %v3681 = vadd.f32 0.0, %v3680
        %3682 = vmatprep.mubr.f32.mxu0 0.0
        %3683 = vmatmul.mubr.f32.gmra.mxu0 %v3610
        %v3684 = vpop.f32.mrf.mxu0
        %v3685 = vadd.f32 0.0, %v3684
        %v3686 = vpop.f32.mrf.mxu0
        %v3687 = vadd.f32 0.0, %v3686
        %3688 = vmatprep.mubr.f32.mxu0 0.0
        %3689 = vmatmul.mubr.f32.gmra.mxu0 %v3611
        %v3690 = vpop.f32.mrf.mxu0
        %v3691 = vadd.f32 0.0, %v3690
        %v3692 = vpop.f32.mrf.mxu0
        %v3693 = vadd.f32 0.0, %v3692
        %3694 = vdwg.mxu0
        %v3695 = vadd.f32 %v3603, %v3679
        %v3696 = vadd.f32 %v3604, %v3681
        %v3697 = vadd.f32 %v3605, %v3685
        %v3698 = vadd.f32 %v3606, %v3687
        %v3699 = vadd.f32 %v3607, %v3691
        %v3700 = vadd.f32 %v3608, %v3693
        %v3701 = vadd.f32 %v3695, %v320
        %v3702 = vadd.f32 %v3696, %v324
        %v3703 = vadd.f32 %v3697, %v320
        %v3704 = vadd.f32 %v3698, %v324
        %v3705 = vadd.f32 %v3699, %v320
        %v3706 = vadd.f32 %v3700, %v324
        %v3707 = vmax.f32 %v3701, 0.0
        %v3708 = vmax.f32 %v3702, 0.0
        %v3709 = vmax.f32 %v3703, 0.0
        %v3710 = vmax.f32 %v3704, 0.0
        %v3711 = vmax.f32 %v3705, 0.0
        %v3712 = vmax.f32 %v3706, 0.0
        %v3713 = vmax.f32 %v3259, %v3707
        %v3714 = vmax.f32 %v3260, %v3708
        %v3715 = vmax.f32 %v3261, %v3709
        %v3716 = vmax.f32 %v3262, %v3710
        %v3717 = vmax.f32 %v3263, %v3711
        %v3718 = vmax.f32 %v3264, %v3712
        %v3719 = vmax.f32 %v3713, %v3714
        %v3720 = vmax.f32 %v3715, %v3716
        %v3721 = vmax.f32 %v3717, %v3718
        %v3722 = vmul.f32 %v3719, %v327
        %v3723 = vmul.f32 %v3719, %v328
        %v3724 = vmul.f32 %v3719, %v329
        %v3725 = vmul.f32 %v3719, %v330
        %v3726 = vmul.f32 %v3720, %v331
        %v3727 = vmul.f32 %v3720, %v332
        %v3728 = vmul.f32 %v3720, %v333
        %v3729 = vmul.f32 %v3720, %v334
        %v3730 = vmul.f32 %v3721, %v335
        %v3731 = vmul.f32 %v3721, %v336
        %v3732 = vmul.f32 %v3721, %v337
        %v3733 = vmul.f32 %v3721, %v338
        %v3734 = vadd.f32 %v3722, %v3726
        %vm3735 = vcmask 1044480
        %v3736 = vsel %vm3735, %v3730, 0.0
        %v3737 = vadd.f32 %v3734, %v3736
        %v3738 = vrot.slane %v3737, 4
        %v3739 = vadd.f32 %v3737, %v3738
        %v3740 = vrot.slane %v3739, 2
        %v3741 = vadd.f32 %v3739, %v3740
        %v3742 = vrot.slane %v3741, 1
        %v3743 = vadd.f32 %v3741, %v3742
        %v3744 = vadd.f32 %v3723, %v3727
        %v3745 = vsel %vm3735, %v3731, 0.0
        %v3746 = vadd.f32 %v3744, %v3745
        %v3747 = vrot.slane %v3746, 4
        %v3748 = vadd.f32 %v3746, %v3747
        %v3749 = vrot.slane %v3748, 2
        %v3750 = vadd.f32 %v3748, %v3749
        %v3751 = vrot.slane %v3750, 1
        %v3752 = vadd.f32 %v3750, %v3751
        %v3753 = vadd.f32 %v3724, %v3728
        %v3754 = vsel %vm3735, %v3732, 0.0
        %v3755 = vadd.f32 %v3753, %v3754
        %v3756 = vrot.slane %v3755, 4
        %v3757 = vadd.f32 %v3755, %v3756
        %v3758 = vrot.slane %v3757, 2
        %v3759 = vadd.f32 %v3757, %v3758
        %v3760 = vrot.slane %v3759, 1
        %v3761 = vadd.f32 %v3759, %v3760
        %v3762 = vadd.f32 %v3725, %v3729
        %v3763 = vsel %vm3735, %v3733, 0.0
        %v3764 = vadd.f32 %v3762, %v3763
        %v3765 = vrot.slane %v3764, 4
        %v3766 = vadd.f32 %v3764, %v3765
        %v3767 = vrot.slane %v3766, 2
        %v3768 = vadd.f32 %v3766, %v3767
        %v3769 = vrot.slane %v3768, 1
        %v3770 = vadd.f32 %v3768, %v3769
        %3771 = vmatprep.subr.mxu0 0.0
        %3772 = vmatpush1.msra.mxu0 %v354
        %3773 = vmatprep.subr.mxu0 0.0
        %3774 = vmatpush1.msra.mxu0 %v353
        %3775 = vmatprep.subr.mxu0 0.0
        %3776 = vmatpush1.msra.mxu0 %v352
        %3777 = vmatprep.subr.mxu0 0.0
        %3778 = vmatpush1.msra.mxu0 %v351
        %3779 = vmatprep.subr.mxu0 0.0
        %3780 = vmatpush1.msra.mxu0 %v350
        %3781 = vmatprep.subr.mxu0 0.0
        %3782 = vmatpush1.msra.mxu0 %v349
        %3783 = vmatprep.subr.mxu0 0.0
        %3784 = vmatpush1.msra.mxu0 %v348
        %3785 = vmatprep.subr.mxu0 0.0
        %3786 = vmatpush1.msra.mxu0 %v347
        %3787 = vmatprep.subr.mxu0 0.0
        %3788 = vmatpush1.msra.mxu0 %v346
        %3789 = vmatprep.subr.mxu0 0.0
        %3790 = vmatpush1.msra.mxu0 %v345
        %3791 = vmatprep.subr.mxu0 0.0
        %3792 = vmatpush1.msra.mxu0 %v344
        %3793 = vmatprep.subr.mxu0 0.0
        %3794 = vmatpush1.msra.mxu0 %v343
        %3795 = vmatprep.subr.mxu0 0.0
        %3796 = vmatpush1.msra.mxu0 %v342
        %3797 = vmatprep.subr.mxu0 0.0
        %3798 = vmatpush1.msra.mxu0 %v341
        %3799 = vmatprep.subr.mxu0 0.0
        %3800 = vmatpush1.msra.mxu0 %v340
        %3801 = vmatprep.subr.mxu0 0.0
        %3802 = vmatpush1.msra.mxu0 %v339
        %3803 = vmatprep.subr.mxu0 0.0
        %3804 = vmatpush2.msra.mxu0 %v370
        %3805 = vmatprep.subr.mxu0 0.0
        %3806 = vmatpush2.msra.mxu0 %v369
        %3807 = vmatprep.subr.mxu0 0.0
        %3808 = vmatpush2.msra.mxu0 %v368
        %3809 = vmatprep.subr.mxu0 0.0
        %3810 = vmatpush2.msra.mxu0 %v367
        %3811 = vmatprep.subr.mxu0 0.0
        %3812 = vmatpush2.msra.mxu0 %v366
        %3813 = vmatprep.subr.mxu0 0.0
        %3814 = vmatpush2.msra.mxu0 %v365
        %3815 = vmatprep.subr.mxu0 0.0
        %3816 = vmatpush2.msra.mxu0 %v364
        %3817 = vmatprep.subr.mxu0 0.0
        %3818 = vmatpush2.msra.mxu0 %v363
        %3819 = vmatprep.subr.mxu0 0.0
        %3820 = vmatpush2.msra.mxu0 %v362
        %3821 = vmatprep.subr.mxu0 0.0
        %3822 = vmatpush2.msra.mxu0 %v361
        %3823 = vmatprep.subr.mxu0 0.0
        %3824 = vmatpush2.msra.mxu0 %v360
        %3825 = vmatprep.subr.mxu0 0.0
        %3826 = vmatpush2.msra.mxu0 %v359
        %3827 = vmatprep.subr.mxu0 0.0
        %3828 = vmatpush2.msra.mxu0 %v358
        %3829 = vmatprep.subr.mxu0 0.0
        %3830 = vmatpush2.msra.mxu0 %v357
        %3831 = vmatprep.subr.mxu0 0.0
        %3832 = vmatpush2.msra.mxu0 %v356
        %3833 = vmatprep.subr.mxu0 0.0
        %3834 = vmatpush2.msra.mxu0 %v355
        %3835 = vmatprep.mubr.f32.mxu0 %v3752
        %3836 = vmatmul.mubr.f32.gmra.mxu0 %v3743
        %v3837 = vpop.f32.mrf.mxu0
        %v3838 = vadd.f32 %v403, %v3837
        %v3839 = vpop.f32.mrf.mxu0
        %3840 = vdwg.mxu0
        %3841 = vmatprep.subr.mxu0 0.0
        %3842 = vmatpush1.msra.mxu0 %v386
        %3843 = vmatprep.subr.mxu0 0.0
        %3844 = vmatpush1.msra.mxu0 %v385
        %3845 = vmatprep.subr.mxu0 0.0
        %3846 = vmatpush1.msra.mxu0 %v384
        %3847 = vmatprep.subr.mxu0 0.0
        %3848 = vmatpush1.msra.mxu0 %v383
        %3849 = vmatprep.subr.mxu0 0.0
        %3850 = vmatpush1.msra.mxu0 %v382
        %3851 = vmatprep.subr.mxu0 0.0
        %3852 = vmatpush1.msra.mxu0 %v381
        %3853 = vmatprep.subr.mxu0 0.0
        %3854 = vmatpush1.msra.mxu0 %v380
        %3855 = vmatprep.subr.mxu0 0.0
        %3856 = vmatpush1.msra.mxu0 %v379
        %3857 = vmatprep.subr.mxu0 0.0
        %3858 = vmatpush1.msra.mxu0 %v378
        %3859 = vmatprep.subr.mxu0 0.0
        %3860 = vmatpush1.msra.mxu0 %v377
        %3861 = vmatprep.subr.mxu0 0.0
        %3862 = vmatpush1.msra.mxu0 %v376
        %3863 = vmatprep.subr.mxu0 0.0
        %3864 = vmatpush1.msra.mxu0 %v375
        %3865 = vmatprep.subr.mxu0 0.0
        %3866 = vmatpush1.msra.mxu0 %v374
        %3867 = vmatprep.subr.mxu0 0.0
        %3868 = vmatpush1.msra.mxu0 %v373
        %3869 = vmatprep.subr.mxu0 0.0
        %3870 = vmatpush1.msra.mxu0 %v372
        %3871 = vmatprep.subr.mxu0 0.0
        %3872 = vmatpush1.msra.mxu0 %v371
        %3873 = vmatprep.subr.mxu0 0.0
        %3874 = vmatpush2.msra.mxu0 %v402
        %3875 = vmatprep.subr.mxu0 0.0
        %3876 = vmatpush2.msra.mxu0 %v401
        %3877 = vmatprep.subr.mxu0 0.0
        %3878 = vmatpush2.msra.mxu0 %v400
        %3879 = vmatprep.subr.mxu0 0.0
        %3880 = vmatpush2.msra.mxu0 %v399
        %3881 = vmatprep.subr.mxu0 0.0
        %3882 = vmatpush2.msra.mxu0 %v398
        %3883 = vmatprep.subr.mxu0 0.0
        %3884 = vmatpush2.msra.mxu0 %v397
        %3885 = vmatprep.subr.mxu0 0.0
        %3886 = vmatpush2.msra.mxu0 %v396
        %3887 = vmatprep.subr.mxu0 0.0
        %3888 = vmatpush2.msra.mxu0 %v395
        %3889 = vmatprep.subr.mxu0 0.0
        %3890 = vmatpush2.msra.mxu0 %v394
        %3891 = vmatprep.subr.mxu0 0.0
        %3892 = vmatpush2.msra.mxu0 %v393
        %3893 = vmatprep.subr.mxu0 0.0
        %3894 = vmatpush2.msra.mxu0 %v392
        %3895 = vmatprep.subr.mxu0 0.0
        %3896 = vmatpush2.msra.mxu0 %v391
        %3897 = vmatprep.subr.mxu0 0.0
        %3898 = vmatpush2.msra.mxu0 %v390
        %3899 = vmatprep.subr.mxu0 0.0
        %3900 = vmatpush2.msra.mxu0 %v389
        %3901 = vmatprep.subr.mxu0 0.0
        %3902 = vmatpush2.msra.mxu0 %v388
        %3903 = vmatprep.subr.mxu0 0.0
        %3904 = vmatpush2.msra.mxu0 %v387
        %3905 = vmatprep.mubr.f32.mxu0 %v3770
        %3906 = vmatmul.mubr.f32.gmra.mxu0 %v3761
        %v3907 = vpop.f32.mrf.mxu0
        %v3908 = vadd.f32 %v3838, %v3907
        %v3909 = vpop.f32.mrf.mxu0
        %3910 = vdwg.mxu0
        %vm3911 = vcmask 24576
        %3912 = vst.msk [vmem:[%s297] sm:$0x1] %vm3911, %v3908
        %s3913 = sand.u32 %s203, 1
        %s3914 = scalar_lea.sflag [#allocation4], %s3913
        %s3915 = sand.u32 %s203, 1
        %s3916 = scalar_lea.vmem [#allocation3], %s3915
        // Predicated region
        $region53: #{q_pixel_network_forward.1} parent=51 // pred_check
          %p3917 = pneg %p213
        $region54: #{q_pixel_network_forward.1} parent=51 // pred_check_branch
          %3919 = sbr.rel (%p3917) target = $region56
        $region55: #{q_pixel_network_forward.1} parent=51 // pred_region
          %s3921 = ssub.s32 16, 16
          %3922 = vsyncadd %s3914, %s3921
          %s3923 = smul.addr %s22, 16
          %s3924 = scalar_lea.hbm %s8, %s3923
          %s3926 = sshll.u32 %s3916, 4
          %s3927 = int_to_ptr.vmem [resolvable:$true] %s3926
          %3929 = dma.vmem_to_hbm [thread:$0]  %s3927, 16, %s3924, %s3914
        $region56: #{q_pixel_network_forward.1} parent=51 // pred_fallthru
          _
      $region52: #{q_pixel_network_forward.1} parent=5 // pred_fallthru
        _
      %p3930 = scmp.le.s32.totalorder 2, %s17
      // Predicated region
      $region57: #{q_pixel_network_forward.1} parent=5 // pred_check
        %p3931 = pneg %p3930
      $region58: #{q_pixel_network_forward.1} parent=5 // pred_check_branch
        %3933 = sbr.rel (%p3931) target = $region60
      $region59: #{q_pixel_network_forward.1} parent=5 // pred_region
        %s3934 = ssub.s32 %s17, 2
        // Predicated region
        $region61: #{q_pixel_network_forward.1} parent=59 // pred_check
          %p3935 = pneg %p219
        $region62: #{q_pixel_network_forward.1} parent=59 // pred_check_branch
          %3937 = sbr.rel (%p3935) target = $region64
        $region63: #{q_pixel_network_forward.1} parent=59 // pred_region
          %s3938 = sand.u32 %s204, 1
          %s3939 = scalar_lea.sflag [#allocation4], %s3938
          %s3940 = sand.u32 %s204, 1
          %s3941 = scalar_lea.vmem [#allocation3], %s3940
          %3942 = dma.done %s3939, 16
        $region64: #{q_pixel_network_forward.1} parent=59 // pred_fallthru
          _
      $region60: #{q_pixel_network_forward.1} parent=5 // pred_fallthru
        _
    $region6: #{q_pixel_network_forward.1} parent=1 // loop_footer
      %s21 = sadd.s32 1, %s17
    $region7: #{q_pixel_network_forward.1} parent=1 // loop_footer_branch
      %16 = sbr.rel target = $region3
    $region8: #{q_pixel_network_forward.1} parent=1 // loop_exit
      _
    %3943 = vsyncpa [#allocation4], 1
    %s3944 = scalar_lea.sflag [#allocation4], 1
    %3945 = vsyncpa %s3944, 1

</llo_original>
